<compile_context>
chip_gen: v7x
topology: tpu7x:2x2x1
jax: 0.10.0
libtpu: 0.0.40
codegen_flags: <defaults>
</compile_context>

<pallas_src>
import functools
import math

import jax
import jax.numpy as jnp
import numpy as np
from jax.experimental import pallas as pl
from jax.experimental.pallas import tpu as pltpu


# ----------------------------------------------------------------------------
# Per-pass compute: one full EncodingBlock forward for the whole batch.
# ----------------------------------------------------------------------------
def _block_compute(x, y, cm,
                   wq_ref, wk_ref, wv_ref, wc_ref, bc_ref,
                   e0_ref, eexp_ref, w1e_ref, b1e_ref, w2blk_ref, m2b_ref,
                   g1_ref, be1_ref, w1_ref, b1_ref, w2_ref, b2_ref,
                   g2_ref, be2_ref,
                   *, head_num, qkv_dim, ms_hidden, inv_sqrt_qkv,
                   mm_dtype, approx_recip):
    B, N, E = x.shape
    M = y.shape[1]
    H, Dk, Hm = head_num, qkv_dim, ms_hidden
    f32 = jnp.float32

    x2 = x.reshape(B * N, E)                    # f32, kept for residual / norm
    y2 = y.reshape(B * M, E)
    cm2 = cm.reshape(B * N, M)

    def mm_t(a, b):                             # a:(m,k) @ b:(n,k).T, f32 acc
        return jax.lax.dot_general(
            a.astype(mm_dtype), b, (((1,), (1,)), ((), ())),
            preferred_element_type=f32)

    # ---- fused Q/K/V projections: one matmul each, all heads at once --------
    q_all = mm_t(x2, wq_ref[...])               # (B*N, H*Dk)
    k_all = mm_t(y2, wk_ref[...])               # (B*M, H*Dk)
    v_all = mm_t(y2, wv_ref[...])               # (B*M, H*Dk)
    q_allm = q_all.astype(mm_dtype)             # casts hoisted out of head loop
    k_allm = k_all.astype(mm_dtype)
    v_allm = v_all.astype(mm_dtype)

    # Head-invariant: cost expanded once to the lane-dense (B*N, Hm*M) layout
    # (MXU expansion matrix instead of an XLU tile/relayout).
    cexp = jnp.dot(cm2, eexp_ref[...], preferred_element_type=f32)  # (B*N, Hm*M)

    head_outs = []
    for h in range(H):                          # unrolled; only per-head work
        sl = slice(h * Dk, (h + 1) * Dk)        # static lane slice
        qh = q_allm[:, sl].reshape(B, N, Dk)
        kh = k_allm[:, sl].reshape(B, M, Dk)
        vh = v_allm[:, sl].reshape(B, M, Dk)

        dot = jnp.einsum('bnd,bmd->bnm', qh, kh,
                         preferred_element_type=f32) * inv_sqrt_qkv   # (B,N,M)
        dotf = dot.reshape(B * N, M)

        # mixed-score MLP in the lane-dense (B*N, Hm*M) layout:
        #   dot expansion (w0 folded into e0) and the Hm-reduction both on MXU.
        dexp_s = jnp.dot(dotf, e0_ref[h], preferred_element_type=f32)  # (B*N, Hm*M)
        ms1 = jnp.maximum(dexp_s + cexp * w1e_ref[h] + b1e_ref[h], 0.0)
        ms2 = jnp.dot(ms1, w2blk_ref[h],
                      preferred_element_type=f32) + m2b_ref[h]         # (B*N, M)

        # softmax over columns (lane axis), f32
        mx = jnp.max(ms2, axis=-1, keepdims=True)
        e = jnp.exp(ms2 - mx)
        den = jnp.sum(e, axis=-1, keepdims=True)
        if approx_recip:
            att = e * pl.reciprocal(den, approx=True)
        else:
            att = e / den

        oh = jnp.einsum('bnm,bmd->bnd',
                        att.reshape(B, N, M).astype(mm_dtype), vh,
                        preferred_element_type=f32)                    # (B,N,Dk)
        head_outs.append(oh)

    # Concatenate heads on lanes, then ONE deep-K combine matmul.
    out_concat = jnp.concatenate(head_outs, axis=-1).reshape(B * N, H * Dk)
    mho = mm_t(out_concat, wc_ref[...]) + bc_ref[...]                  # (B*N, E)

    # ---- Add & InstanceNorm1d (stats over problem dim, biased var, eps=1e-5) -
    def add_and_instance_norm(a, b, g, be):
        added = (a + b).reshape(B, N, E)
        mean = jnp.mean(added, axis=1, keepdims=True)
        cent = added - mean
        var = jnp.mean(cent * cent, axis=1, keepdims=True)
        normed = cent * jax.lax.rsqrt(var + 1e-5)
        return normed.reshape(B * N, E) * g + be

    out1 = add_and_instance_norm(x2, mho, g1_ref[...], be1_ref[...])

    # ---- FeedForward ----
    h1 = jnp.maximum(mm_t(out1, w1_ref[...]) + b1_ref[...], 0.0)       # (B*N, FF)
    out2 = mm_t(h1, w2_ref[...]) + b2_ref[...]                         # (B*N, E)

    out3 = add_and_instance_norm(out1, out2, g2_ref[...], be2_ref[...])
    return out3.reshape(B, N, E)


# ----------------------------------------------------------------------------
# Kernel: each grid step processes `passes_per_step` pre-stacked passes.
# ----------------------------------------------------------------------------
def _encoder_kernel(x_ref, y_ref, cm_ref, *rest, passes_per_step, **static):
    *w_refs, o_ref = rest
    for p in range(passes_per_step):       # 1 on multi-TC split, 2 when fused
        o_ref[p] = _block_compute(x_ref[p], y_ref[p], cm_ref[p],
                                  *w_refs, **static)


# ----------------------------------------------------------------------------
# Wrapper
# ----------------------------------------------------------------------------
def _default_split_passes():
    # Split the two passes across grid steps only on multi-TC chips (v7x, v4
    # megacore).  Single-TC v5e/v6e fuse both passes into one grid step.
    try:
        kind = jax.devices()[0].device_kind.lower()
    except Exception:
        return True
    return not (("v5" in kind) or ("v6" in kind))


def _prep_weights(params, M, head_num, qkv_dim, ms_hidden, mm_dtype):
    H, Dk, Hm = head_num, qkv_dim, ms_hidden
    f32 = jnp.float32
    eye = jnp.eye(M, dtype=f32)
    mix1_w = params['mix1_w'].astype(f32)                  # (H, 2, Hm)
    mix1_b = params['mix1_b'].astype(f32)                  # (H, Hm)
    mix2_w = params['mix2_w'].astype(f32)                  # (H, Hm, 1)

    # e0[h, m, j*M+m'] = mix1_w[h,0,j] * (m==m')   : dot-score expansion (+w0)
    e0 = jnp.einsum('hj,mp->hmjp', mix1_w[:, 0, :], eye).reshape(H, M, Hm * M)
    # eexp[m, j*M+m'] = (m==m')                    : cost expansion
    eexp = jnp.einsum('j,mp->mjp', jnp.ones((Hm,), f32), eye).reshape(M, Hm * M)
    # w1e/b1e[h, 0, j*M+m] = mix1_w[h,1,j] / mix1_b[h,j]
    w1e = jnp.repeat(mix1_w[:, 1, :], M, axis=-1).reshape(H, 1, Hm * M)
    b1e = jnp.repeat(mix1_b, M, axis=-1).reshape(H, 1, Hm * M)
    # w2blk[h, j*M+m, m'] = mix2_w[h,j,0] * (m==m') : Hm reduction as a matmul
    w2blk = jnp.einsum('hj,mp->hjmp', mix2_w[:, :, 0], eye).reshape(H, Hm * M, M)

    return (
        params['wq'].astype(mm_dtype),                     # (H*Dk, E)
        params['wk'].astype(mm_dtype),
        params['wv'].astype(mm_dtype),
        params['w_comb'].astype(mm_dtype),                 # (E, H*Dk)
        params['b_comb'].astype(f32),                      # (1, E)
        e0, eexp, w1e, b1e, w2blk,
        params['mix2_b'].reshape(H).astype(f32),           # (H,)  -> SMEM
        params['norm1_g'].astype(f32), params['norm1_b'].astype(f32),
        params['w1'].astype(mm_dtype), params['b1'].astype(f32),
        params['w2'].astype(mm_dtype), params['b2'].astype(f32),
        params['norm2_g'].astype(f32), params['norm2_b'].astype(f32),
    )


def _weight_specs(weights):
    specs = []
    for w in weights:
        if w.ndim == 1:   # tiny per-head scalars live in SMEM
            specs.append(pl.BlockSpec(memory_space=pltpu.MemorySpace.SMEM))
        else:
            specs.append(pl.BlockSpec(w.shape, lambda *_, n=w.ndim: (0,) * n))
    return specs


def encoder_layer_one(row_emb, col_emb, cost_mat, params, *, head_num, qkv_dim,
                      ms_hidden_dim, mm_dtype=jnp.float32, approx_recip=False,
                      split_passes=None):
    """EncoderLayer_one.forward: the same (shared) encoding block applied twice."""
    B, R, E = row_emb.shape
    C = col_emb.shape[1]
    assert params['mix1_w'].shape == (head_num, 2, ms_hidden_dim)
    if split_passes is None:
        split_passes = _default_split_passes()

    static = dict(head_num=head_num, qkv_dim=qkv_dim, ms_hidden=ms_hidden_dim,
                  inv_sqrt_qkv=1.0 / math.sqrt(qkv_dim),
                  mm_dtype=mm_dtype, approx_recip=approx_recip)

    def launch(x_stack, y_stack, cm_stack, weights, passes_per_step, grid_steps,
               parallel):
        P, Bx, N, _ = x_stack.shape
        M = y_stack.shape[2]
        w_specs = _weight_specs(weights)
        kernel = functools.partial(_encoder_kernel,
                                   passes_per_step=passes_per_step, **static)
        return pl.pallas_call(
            kernel,
            out_shape=jax.ShapeDtypeStruct((P, Bx, N, E), jnp.float32),
            grid=(grid_steps,),
            in_specs=[
                pl.BlockSpec((passes_per_step, Bx, N, E), lambda p: (p, 0, 0, 0)),
                pl.BlockSpec((passes_per_step, Bx, M, E), lambda p: (p, 0, 0, 0)),
                pl.BlockSpec((passes_per_step, Bx, N, M), lambda p: (p, 0, 0, 0)),
                *w_specs,
            ],
            out_specs=pl.BlockSpec((passes_per_step, Bx, N, E),
                                   lambda p: (p, 0, 0, 0)),
            compiler_params=pltpu.CompilerParams(
                dimension_semantics=("parallel",) if parallel else ("arbitrary",)),
        )(x_stack, y_stack, cm_stack, *weights)

    if R == C:
        # Stack both passes in the wrapper (cost transpose is a one-time XLA op);
        # each grid step fetches only its own operands.
        x_stack = jnp.stack([row_emb, col_emb])                    # (2, B, R, E)
        y_stack = jnp.stack([col_emb, row_emb])                    # (2, B, R, E)
        cm_stack = jnp.stack([cost_mat, jnp.swapaxes(cost_mat, 1, 2)])
        weights = _prep_weights(params, C, head_num, qkv_dim,
                                ms_hidden_dim, mm_dtype)
        if split_passes:
            out = launch(x_stack, y_stack, cm_stack, weights,
                         passes_per_step=1, grid_steps=2, parallel=True)
        else:
            out = launch(x_stack, y_stack, cm_stack, weights,
                         passes_per_step=2, grid_steps=1, parallel=False)
        return out[0], out[1]

    # Fallback (row_cnt != col_cnt): one launch per pass, whole batch each.
    def one_pass(x_emb, y_emb, cm):
        M = y_emb.shape[1]
        weights = _prep_weights(params, M, head_num, qkv_dim,
                                ms_hidden_dim, mm_dtype)
        out = launch(x_emb[None], y_emb[None], cm[None], weights,
                     passes_per_step=1, grid_steps=1, parallel=False)
        return out[0]

    row_out = one_pass(row_emb, col_emb, cost_mat)
    col_out = one_pass(col_emb, row_emb, jnp.swapaxes(cost_mat, 1, 2))
    return row_out, col_out


# ----------------------------------------------------------------------------
# Pure-JAX reference (mirrors the PyTorch semantics).  mm_dtype lets the same
# reference mirror the bf16-input / f32-accumulate fast path of the kernel.
# ----------------------------------------------------------------------------
def _ref_block(row, col, cm, p, head_num, qkv_dim, mm_dtype=jnp.float32):
    B, R, E = row.shape
    C = col.shape[1]
    f32 = jnp.float32
    c = lambda a: a.astype(mm_dtype)

    def mm(a, b):                            # a @ b.T with f32 accumulation
        return jnp.einsum('...ik,jk->...ij', c(a), c(b), preferred_element_type=f32)

    q = mm(row, p['wq']).reshape(B, R, head_num, qkv_dim).transpose(0, 2, 1, 3)
    k = mm(col, p['wk']).reshape(B, C, head_num, qkv_dim).transpose(0, 2, 1, 3)
    v = mm(col, p['wv']).reshape(B, C, head_num, qkv_dim).transpose(0, 2, 1, 3)
    dot = jnp.einsum('bhrd,bhcd->bhrc', c(q), c(k),
                     preferred_element_type=f32) / math.sqrt(qkv_dim)
    cms = jnp.broadcast_to(cm[:, None], dot.shape)
    two = jnp.stack([dot, cms], axis=-1)                                   # (B,H,R,C,2)
    ms1 = jnp.einsum('bhrcs,hsm->bhrcm', two, p['mix1_w']) + p['mix1_b'][None, :, None, None, :]
    ms1 = jnp.maximum(ms1, 0.0)
    ms2 = jnp.einsum('bhrcm,hmo->bhrco', ms1, p['mix2_w']) + p['mix2_b'][None, :, None, None, :]
    w = jax.nn.softmax(ms2[..., 0], axis=-1)
    out = jnp.einsum('bhrc,bhcd->bhrd', c(w), c(v), preferred_element_type=f32)
    out = out.transpose(0, 2, 1, 3).reshape(B, R, head_num * qkv_dim)
    mho = mm(out, p['w_comb']) + p['b_comb']

    def norm(x, g, b):
        m = jnp.mean(x, axis=1, keepdims=True)
        va = jnp.mean((x - m) ** 2, axis=1, keepdims=True)
        return (x - m) * jax.lax.rsqrt(va + 1e-5) * g + b

    out1 = norm(row + mho, p['norm1_g'], p['norm1_b'])
    ff = mm(jnp.maximum(mm(out1, p['w1']) + p['b1'], 0.0), p['w2']) + p['b2']
    return norm(out1 + ff, p['norm2_g'], p['norm2_b'])


# ----------------------------------------------------------------------------
# Main
# ----------------------------------------------------------------------------
if __name__ == "__main__":
    B, R, C = 2, 8, 8
    E, H, DK, HM, FF = 32, 4, 8, 16, 64   # embedding, heads, qkv_dim, ms_hidden, ff_hidden

    key = jax.random.PRNGKey(0)
    ks = jax.random.split(key, 16)

    def uni(k, shape, bound):
        return jax.random.uniform(k, shape, jnp.float32, -bound, bound)

    params = {
        'wq': uni(ks[0], (H * DK, E), 1.0 / math.sqrt(E)),
        'wk': uni(ks[1], (H * DK, E), 1.0 / math.sqrt(E)),
        'wv': uni(ks[2], (H * DK, E), 1.0 / math.sqrt(E)),
        'mix1_w': uni(ks[3], (H, 2, HM), math.sqrt(0.5)),
        'mix1_b': uni(ks[4], (H, HM), math.sqrt(0.5)),
        'mix2_w': uni(ks[5], (H, HM, 1), math.sqrt(1.0 / 16.0)),
        'mix2_b': uni(ks[6], (H, 1), math.sqrt(1.0 / 16.0)),
        'w_comb': uni(ks[7], (E, H * DK), 1.0 / math.sqrt(H * DK)),
        'b_comb': uni(ks[8], (1, E), 1.0 / math.sqrt(H * DK)),
        'norm1_g': jnp.ones((1, E), jnp.float32),
        'norm1_b': jnp.zeros((1, E), jnp.float32),
        'w1': uni(ks[9], (FF, E), 1.0 / math.sqrt(E)),
        'b1': uni(ks[10], (1, FF), 1.0 / math.sqrt(E)),
        'w2': uni(ks[11], (E, FF), 1.0 / math.sqrt(FF)),
        'b2': uni(ks[12], (1, E), 1.0 / math.sqrt(FF)),
        'norm2_g': jnp.ones((1, E), jnp.float32),
        'norm2_b': jnp.zeros((1, E), jnp.float32),
    }

    row_emb = jax.random.normal(ks[13], (B, R, E), jnp.float32)
    col_emb = jax.random.normal(ks[14], (B, C, E), jnp.float32)
    cost_mat = jax.random.uniform(ks[15], (B, R, C), jnp.float32)

    kw = dict(head_num=H, qkv_dim=DK, ms_hidden_dim=HM)

    ref_row = _ref_block(row_emb, col_emb, cost_mat, params, H, DK)
    ref_col = _ref_block(col_emb, row_emb, jnp.swapaxes(cost_mat, 1, 2), params, H, DK)

    # --- strict f32 path, chip-auto pass scheduling ---
    auto_split = _default_split_passes()
    row32, col32 = encoder_layer_one(row_emb, col_emb, cost_mat, params,
                                     mm_dtype=jnp.float32, approx_recip=False, **kw)
    jax.block_until_ready((row32, col32))
    np.testing.assert_allclose(np.asarray(row32), np.asarray(ref_row), rtol=2e-3, atol=2e-3)
    np.testing.assert_allclose(np.asarray(col32), np.asarray(ref_col), rtol=2e-3, atol=2e-3)

    # --- other grid variant (split<->fused) for coverage on any chip ---
    row32b, col32b = encoder_layer_one(row_emb, col_emb, cost_mat, params,
                                       mm_dtype=jnp.float32, approx_recip=False,
                                       split_passes=not auto_split, **kw)
    jax.block_until_ready((row32b, col32b))
    np.testing.assert_allclose(np.asarray(row32b), np.asarray(ref_row), rtol=2e-3, atol=2e-3)
    np.testing.assert_allclose(np.asarray(col32b), np.asarray(ref_col), rtol=2e-3, atol=2e-3)

    # --- bf16 MXU-input fast path: f32 accumulation, f32 softmax & norm stats,
    #     approx-reciprocal softmax normalization (compared vs bf16-cast ref).
    row16, col16 = encoder_layer_one(row_emb, col_emb, cost_mat, params,
                                     mm_dtype=jnp.bfloat16, approx_recip=True, **kw)
    jax.block_until_ready((row16, col16))
    ref_row16 = _ref_block(row_emb, col_emb, cost_mat, params, H, DK, mm_dtype=jnp.bfloat16)
    ref_col16 = _ref_block(col_emb, row_emb, jnp.swapaxes(cost_mat, 1, 2), params, H, DK,
                           mm_dtype=jnp.bfloat16)
    np.testing.assert_allclose(np.asarray(row16), np.asarray(ref_row16), rtol=2e-2, atol=2e-2)
    np.testing.assert_allclose(np.asarray(col16), np.asarray(ref_col16), rtol=2e-2, atol=2e-2)

    # --- row_cnt != col_cnt fallback path (two single-pass launches) ---
    C2 = 4
    col_emb2 = col_emb[:, :C2]
    cost_mat2 = cost_mat[:, :, :C2]
    row_f, col_f = encoder_layer_one(row_emb, col_emb2, cost_mat2, params,
                                     mm_dtype=jnp.float32, approx_recip=False, **kw)
    jax.block_until_ready((row_f, col_f))
    ref_row_f = _ref_block(row_emb, col_emb2, cost_mat2, params, H, DK)
    ref_col_f = _ref_block(col_emb2, row_emb, jnp.swapaxes(cost_mat2, 1, 2), params, H, DK)
    np.testing.assert_allclose(np.asarray(row_f), np.asarray(ref_row_f), rtol=2e-3, atol=2e-3)
    np.testing.assert_allclose(np.asarray(col_f), np.asarray(ref_col_f), rtol=2e-3, atol=2e-3)

    print("KERNEL_OK")
</pallas_src>

<mosaic_0001>
module attributes {stable_mosaic.version = 11 : i64} {
  func.func @_encoder_kernel(%arg0: i32, %arg1: memref<1x2x8x32xf32, #tpu.memory_space<vmem>>, %arg2: memref<1x2x8x32xf32, #tpu.memory_space<vmem>>, %arg3: memref<1x2x8x8xf32, #tpu.memory_space<vmem>>, %arg4: memref<32x32xf32, #tpu.memory_space<vmem>>, %arg5: memref<32x32xf32, #tpu.memory_space<vmem>>, %arg6: memref<32x32xf32, #tpu.memory_space<vmem>>, %arg7: memref<32x32xf32, #tpu.memory_space<vmem>>, %arg8: memref<1x32xf32, #tpu.memory_space<vmem>>, %arg9: memref<4x8x128xf32, #tpu.memory_space<vmem>>, %arg10: memref<8x128xf32, #tpu.memory_space<vmem>>, %arg11: memref<4x1x128xf32, #tpu.memory_space<vmem>>, %arg12: memref<4x1x128xf32, #tpu.memory_space<vmem>>, %arg13: memref<4x128x8xf32, #tpu.memory_space<vmem>>, %arg14: memref<4xf32, #tpu.memory_space<smem>>, %arg15: memref<1x32xf32, #tpu.memory_space<vmem>>, %arg16: memref<1x32xf32, #tpu.memory_space<vmem>>, %arg17: memref<64x32xf32, #tpu.memory_space<vmem>>, %arg18: memref<1x64xf32, #tpu.memory_space<vmem>>, %arg19: memref<32x64xf32, #tpu.memory_space<vmem>>, %arg20: memref<1x32xf32, #tpu.memory_space<vmem>>, %arg21: memref<1x32xf32, #tpu.memory_space<vmem>>, %arg22: memref<1x32xf32, #tpu.memory_space<vmem>>, %arg23: memref<1x2x8x32xf32, #tpu.memory_space<vmem>>) attributes {dimension_semantics = [#tpu.dimension_semantics<parallel>], iteration_bounds = array<i64: 2>, scalar_prefetch = 0 : i64, scratch_operands = 0 : i64, tpu.core_type = #tpu.core_type<tc>, window_params = [{transform_indices = @transform_0, window_bounds = array<i64: 1, 2, 8, 32>}, {transform_indices = @transform_1, window_bounds = array<i64: 1, 2, 8, 32>}, {transform_indices = @transform_2, window_bounds = array<i64: 1, 2, 8, 8>}, {pipeline_mode = #tpu.pipeline_mode<synchronous>, transform_indices = @transform_3, window_bounds = array<i64: 32, 32>}, {pipeline_mode = #tpu.pipeline_mode<synchronous>, transform_indices = @transform_4, window_bounds = array<i64: 32, 32>}, {pipeline_mode = #tpu.pipeline_mode<synchronous>, transform_indices = @transform_5, window_bounds = array<i64: 32, 32>}, {pipeline_mode = #tpu.pipeline_mode<synchronous>, transform_indices = @transform_6, window_bounds = array<i64: 32, 32>}, {pipeline_mode = #tpu.pipeline_mode<synchronous>, transform_indices = @transform_7, window_bounds = array<i64: 1, 32>}, {pipeline_mode = #tpu.pipeline_mode<synchronous>, transform_indices = @transform_8, window_bounds = array<i64: 4, 8, 128>}, {pipeline_mode = #tpu.pipeline_mode<synchronous>, transform_indices = @transform_9, window_bounds = array<i64: 8, 128>}, {pipeline_mode = #tpu.pipeline_mode<synchronous>, transform_indices = @transform_10, window_bounds = array<i64: 4, 1, 128>}, {pipeline_mode = #tpu.pipeline_mode<synchronous>, transform_indices = @transform_11, window_bounds = array<i64: 4, 1, 128>}, {pipeline_mode = #tpu.pipeline_mode<synchronous>, transform_indices = @transform_12, window_bounds = array<i64: 4, 128, 8>}, {transform_indices = @transform_13, window_bounds = array<i64: 4>}, {pipeline_mode = #tpu.pipeline_mode<synchronous>, transform_indices = @transform_14, window_bounds = array<i64: 1, 32>}, {pipeline_mode = #tpu.pipeline_mode<synchronous>, transform_indices = @transform_15, window_bounds = array<i64: 1, 32>}, {pipeline_mode = #tpu.pipeline_mode<synchronous>, transform_indices = @transform_16, window_bounds = array<i64: 64, 32>}, {pipeline_mode = #tpu.pipeline_mode<synchronous>, transform_indices = @transform_17, window_bounds = array<i64: 1, 64>}, {pipeline_mode = #tpu.pipeline_mode<synchronous>, transform_indices = @transform_18, window_bounds = array<i64: 32, 64>}, {pipeline_mode = #tpu.pipeline_mode<synchronous>, transform_indices = @transform_19, window_bounds = array<i64: 1, 32>}, {pipeline_mode = #tpu.pipeline_mode<synchronous>, transform_indices = @transform_20, window_bounds = array<i64: 1, 32>}, {pipeline_mode = #tpu.pipeline_mode<synchronous>, transform_indices = @transform_21, window_bounds = array<i64: 1, 32>}, {transform_indices = @transform_22, window_bounds = array<i64: 1, 2, 8, 32>}]} {
    %c0 = arith.constant 0 : index
    %c0_0 = arith.constant 0 : index
    %c0_1 = arith.constant 0 : index
    %c0_2 = arith.constant 0 : index
    %0 = vector.load %arg1[%c0, %c0_0, %c0_1, %c0_2] : memref<1x2x8x32xf32, #tpu.memory_space<vmem>>, vector<1x2x8x32xf32>
    %1 = vector.shape_cast %0 : vector<1x2x8x32xf32> to vector<2x8x32xf32>
    %c0_3 = arith.constant 0 : index
    %c0_4 = arith.constant 0 : index
    %c0_5 = arith.constant 0 : index
    %c0_6 = arith.constant 0 : index
    %2 = vector.load %arg2[%c0_3, %c0_4, %c0_5, %c0_6] : memref<1x2x8x32xf32, #tpu.memory_space<vmem>>, vector<1x2x8x32xf32>
    %3 = vector.shape_cast %2 : vector<1x2x8x32xf32> to vector<2x8x32xf32>
    %c0_7 = arith.constant 0 : index
    %c0_8 = arith.constant 0 : index
    %c0_9 = arith.constant 0 : index
    %c0_10 = arith.constant 0 : index
    %4 = vector.load %arg3[%c0_7, %c0_8, %c0_9, %c0_10] : memref<1x2x8x8xf32, #tpu.memory_space<vmem>>, vector<1x2x8x8xf32>
    %5 = vector.shape_cast %4 : vector<1x2x8x8xf32> to vector<2x8x8xf32>
    %6 = vector.shape_cast %1 : vector<2x8x32xf32> to vector<16x32xf32>
    %7 = vector.shape_cast %3 : vector<2x8x32xf32> to vector<16x32xf32>
    %8 = vector.shape_cast %5 : vector<2x8x8xf32> to vector<16x8xf32>
    %c0_11 = arith.constant 0 : index
    %c0_12 = arith.constant 0 : index
    %9 = vector.load %arg4[%c0_11, %c0_12] : memref<32x32xf32, #tpu.memory_space<vmem>>, vector<32x32xf32>
    %cst = arith.constant dense<0.000000e+00> : vector<16x32xf32>
    %10 = tpu.matmul %6, %9, %cst {dimension_numbers = #tpu.dot_dimension_numbers<[1], [1], [0], [0], [0, 0, 1, 0], [], []>} : vector<16x32xf32>, vector<32x32xf32>, vector<16x32xf32> -> vector<16x32xf32>
    %c0_13 = arith.constant 0 : index
    %c0_14 = arith.constant 0 : index
    %11 = vector.load %arg5[%c0_13, %c0_14] : memref<32x32xf32, #tpu.memory_space<vmem>>, vector<32x32xf32>
    %cst_15 = arith.constant dense<0.000000e+00> : vector<16x32xf32>
    %12 = tpu.matmul %7, %11, %cst_15 {dimension_numbers = #tpu.dot_dimension_numbers<[1], [1], [0], [0], [0, 0, 1, 0], [], []>} : vector<16x32xf32>, vector<32x32xf32>, vector<16x32xf32> -> vector<16x32xf32>
    %c0_16 = arith.constant 0 : index
    %c0_17 = arith.constant 0 : index
    %13 = vector.load %arg6[%c0_16, %c0_17] : memref<32x32xf32, #tpu.memory_space<vmem>>, vector<32x32xf32>
    %cst_18 = arith.constant dense<0.000000e+00> : vector<16x32xf32>
    %14 = tpu.matmul %7, %13, %cst_18 {dimension_numbers = #tpu.dot_dimension_numbers<[1], [1], [0], [0], [0, 0, 1, 0], [], []>} : vector<16x32xf32>, vector<32x32xf32>, vector<16x32xf32> -> vector<16x32xf32>
    %c0_19 = arith.constant 0 : index
    %c0_20 = arith.constant 0 : index
    %15 = vector.load %arg10[%c0_19, %c0_20] : memref<8x128xf32, #tpu.memory_space<vmem>>, vector<8x128xf32>
    %cst_21 = arith.constant dense<0.000000e+00> : vector<16x128xf32>
    %16 = tpu.matmul %8, %15, %cst_21 {dimension_numbers = #tpu.dot_dimension_numbers<[1], [0], [0], [1], [0, 0, 1, 1], [], []>} : vector<16x8xf32>, vector<8x128xf32>, vector<16x128xf32> -> vector<16x128xf32>
    %17 = vector.extract_strided_slice %10 {offsets = [0, 0], sizes = [16, 8], strides = [1, 1]} : vector<16x32xf32> to vector<16x8xf32>
    %18 = vector.shape_cast %17 : vector<16x8xf32> to vector<2x8x8xf32>
    %19 = vector.extract_strided_slice %12 {offsets = [0, 0], sizes = [16, 8], strides = [1, 1]} : vector<16x32xf32> to vector<16x8xf32>
    %20 = vector.shape_cast %19 : vector<16x8xf32> to vector<2x8x8xf32>
    %21 = vector.extract_strided_slice %14 {offsets = [0, 0], sizes = [16, 8], strides = [1, 1]} : vector<16x32xf32> to vector<16x8xf32>
    %22 = vector.shape_cast %21 : vector<16x8xf32> to vector<2x8x8xf32>
    "tpu.trace_start"() <{level = 10 : i32, message = "bnd,bmd->bnm"}> : () -> ()
    %cst_22 = arith.constant dense<0.000000e+00> : vector<2x8x8xf32>
    %23 = tpu.matmul %18, %20, %cst_22 {dimension_numbers = #tpu.dot_dimension_numbers<[2], [2], [1], [1], [0, 0, 0, 1, 1, 1], [0], [0]>} : vector<2x8x8xf32>, vector<2x8x8xf32>, vector<2x8x8xf32> -> vector<2x8x8xf32>
    "tpu.trace_stop"() : () -> ()
    %cst_23 = arith.constant 0.353553385 : f32
    %24 = vector.broadcast %cst_23 : f32 to vector<2x8x8xf32>
    %25 = arith.mulf %23, %24 : vector<2x8x8xf32>
    %26 = vector.shape_cast %25 : vector<2x8x8xf32> to vector<16x8xf32>
    %c0_24 = arith.constant 0 : index
    %c0_25 = arith.constant 0 : index
    %c0_26 = arith.constant 0 : index
    %27 = vector.load %arg9[%c0_24, %c0_25, %c0_26] : memref<4x8x128xf32, #tpu.memory_space<vmem>>, vector<1x8x128xf32>
    %28 = vector.shape_cast %27 : vector<1x8x128xf32> to vector<8x128xf32>
    %cst_27 = arith.constant dense<0.000000e+00> : vector<16x128xf32>
    %29 = tpu.matmul %26, %28, %cst_27 {dimension_numbers = #tpu.dot_dimension_numbers<[1], [0], [0], [1], [0, 0, 1, 1], [], []>} : vector<16x8xf32>, vector<8x128xf32>, vector<16x128xf32> -> vector<16x128xf32>
    %c0_28 = arith.constant 0 : index
    %c0_29 = arith.constant 0 : index
    %c0_30 = arith.constant 0 : index
    %30 = vector.load %arg11[%c0_28, %c0_29, %c0_30] : memref<4x1x128xf32, #tpu.memory_space<vmem>>, vector<1x1x128xf32>
    %31 = vector.shape_cast %30 : vector<1x1x128xf32> to vector<1x128xf32>
    %32 = vector.broadcast %31 : vector<1x128xf32> to vector<16x128xf32>
    %33 = arith.mulf %16, %32 : vector<16x128xf32>
    %34 = arith.addf %29, %33 : vector<16x128xf32>
    %c0_31 = arith.constant 0 : index
    %c0_32 = arith.constant 0 : index
    %c0_33 = arith.constant 0 : index
    %35 = vector.load %arg12[%c0_31, %c0_32, %c0_33] : memref<4x1x128xf32, #tpu.memory_space<vmem>>, vector<1x1x128xf32>
    %36 = vector.shape_cast %35 : vector<1x1x128xf32> to vector<1x128xf32>
    %37 = vector.broadcast %36 : vector<1x128xf32> to vector<16x128xf32>
    %38 = arith.addf %34, %37 : vector<16x128xf32>
    %cst_34 = arith.constant 0.000000e+00 : f32
    %39 = vector.broadcast %cst_34 : f32 to vector<16x128xf32>
    %40 = arith.maximumf %38, %39 : vector<16x128xf32>
    %c0_35 = arith.constant 0 : index
    %c0_36 = arith.constant 0 : index
    %c0_37 = arith.constant 0 : index
    %41 = vector.load %arg13[%c0_35, %c0_36, %c0_37] : memref<4x128x8xf32, #tpu.memory_space<vmem>>, vector<1x128x8xf32>
    %42 = vector.shape_cast %41 : vector<1x128x8xf32> to vector<128x8xf32>
    %cst_38 = arith.constant dense<0.000000e+00> : vector<16x8xf32>
    %43 = tpu.matmul %40, %42, %cst_38 {dimension_numbers = #tpu.dot_dimension_numbers<[1], [0], [0], [1], [0, 0, 1, 1], [], []>} : vector<16x128xf32>, vector<128x8xf32>, vector<16x8xf32> -> vector<16x8xf32>
    %c0_39 = arith.constant 0 : index
    %44 = memref.load %arg14[%c0_39] : memref<4xf32, #tpu.memory_space<smem>>
    %45 = vector.broadcast %44 : f32 to vector<16x8xf32>
    %46 = arith.addf %43, %45 : vector<16x8xf32>
    %cst_40 = arith.constant dense<0xFF800000> : vector<16xf32>
    %47 = vector.multi_reduction <maximumf>, %46, %cst_40 [1] : vector<16x8xf32> to vector<16xf32>
    %48 = vector.shape_cast %47 : vector<16xf32> to vector<16x1xf32>
    %49 = vector.broadcast %48 : vector<16x1xf32> to vector<16x8xf32>
    %50 = arith.subf %46, %49 : vector<16x8xf32>
    %51 = math.exp %50 : vector<16x8xf32>
    %cst_41 = arith.constant dense<0.000000e+00> : vector<16xf32>
    %52 = vector.multi_reduction <add>, %51, %cst_41 [1] : vector<16x8xf32> to vector<16xf32>
    %53 = vector.shape_cast %52 : vector<16xf32> to vector<16x1xf32>
    %54 = vector.broadcast %53 : vector<16x1xf32> to vector<16x8xf32>
    %55 = arith.divf %51, %54 : vector<16x8xf32>
    %56 = vector.shape_cast %55 : vector<16x8xf32> to vector<2x8x8xf32>
    "tpu.trace_start"() <{level = 10 : i32, message = "bnm,bmd->bnd"}> : () -> ()
    %cst_42 = arith.constant dense<0.000000e+00> : vector<2x8x8xf32>
    %57 = tpu.matmul %56, %22, %cst_42 {dimension_numbers = #tpu.dot_dimension_numbers<[2], [1], [1], [2], [0, 0, 0, 1, 1, 2], [0], [0]>} : vector<2x8x8xf32>, vector<2x8x8xf32>, vector<2x8x8xf32> -> vector<2x8x8xf32>
    "tpu.trace_stop"() : () -> ()
    %58 = vector.extract_strided_slice %10 {offsets = [0, 8], sizes = [16, 8], strides = [1, 1]} : vector<16x32xf32> to vector<16x8xf32>
    %59 = vector.shape_cast %58 : vector<16x8xf32> to vector<2x8x8xf32>
    %60 = vector.extract_strided_slice %12 {offsets = [0, 8], sizes = [16, 8], strides = [1, 1]} : vector<16x32xf32> to vector<16x8xf32>
    %61 = vector.shape_cast %60 : vector<16x8xf32> to vector<2x8x8xf32>
    %62 = vector.extract_strided_slice %14 {offsets = [0, 8], sizes = [16, 8], strides = [1, 1]} : vector<16x32xf32> to vector<16x8xf32>
    %63 = vector.shape_cast %62 : vector<16x8xf32> to vector<2x8x8xf32>
    "tpu.trace_start"() <{level = 10 : i32, message = "bnd,bmd->bnm"}> : () -> ()
    %cst_43 = arith.constant dense<0.000000e+00> : vector<2x8x8xf32>
    %64 = tpu.matmul %59, %61, %cst_43 {dimension_numbers = #tpu.dot_dimension_numbers<[2], [2], [1], [1], [0, 0, 0, 1, 1, 1], [0], [0]>} : vector<2x8x8xf32>, vector<2x8x8xf32>, vector<2x8x8xf32> -> vector<2x8x8xf32>
    "tpu.trace_stop"() : () -> ()
    %cst_44 = arith.constant 0.353553385 : f32
    %65 = vector.broadcast %cst_44 : f32 to vector<2x8x8xf32>
    %66 = arith.mulf %64, %65 : vector<2x8x8xf32>
    %67 = vector.shape_cast %66 : vector<2x8x8xf32> to vector<16x8xf32>
    %c1 = arith.constant 1 : index
    %c0_45 = arith.constant 0 : index
    %c0_46 = arith.constant 0 : index
    %68 = vector.load %arg9[%c1, %c0_45, %c0_46] : memref<4x8x128xf32, #tpu.memory_space<vmem>>, vector<1x8x128xf32>
    %69 = vector.shape_cast %68 : vector<1x8x128xf32> to vector<8x128xf32>
    %cst_47 = arith.constant dense<0.000000e+00> : vector<16x128xf32>
    %70 = tpu.matmul %67, %69, %cst_47 {dimension_numbers = #tpu.dot_dimension_numbers<[1], [0], [0], [1], [0, 0, 1, 1], [], []>} : vector<16x8xf32>, vector<8x128xf32>, vector<16x128xf32> -> vector<16x128xf32>
    %c1_48 = arith.constant 1 : index
    %c0_49 = arith.constant 0 : index
    %c0_50 = arith.constant 0 : index
    %71 = vector.load %arg11[%c1_48, %c0_49, %c0_50] : memref<4x1x128xf32, #tpu.memory_space<vmem>>, vector<1x1x128xf32>
    %72 = vector.shape_cast %71 : vector<1x1x128xf32> to vector<1x128xf32>
    %73 = vector.broadcast %72 : vector<1x128xf32> to vector<16x128xf32>
    %74 = arith.mulf %16, %73 : vector<16x128xf32>
    %75 = arith.addf %70, %74 : vector<16x128xf32>
    %c1_51 = arith.constant 1 : index
    %c0_52 = arith.constant 0 : index
    %c0_53 = arith.constant 0 : index
    %76 = vector.load %arg12[%c1_51, %c0_52, %c0_53] : memref<4x1x128xf32, #tpu.memory_space<vmem>>, vector<1x1x128xf32>
    %77 = vector.shape_cast %76 : vector<1x1x128xf32> to vector<1x128xf32>
    %78 = vector.broadcast %77 : vector<1x128xf32> to vector<16x128xf32>
    %79 = arith.addf %75, %78 : vector<16x128xf32>
    %cst_54 = arith.constant 0.000000e+00 : f32
    %80 = vector.broadcast %cst_54 : f32 to vector<16x128xf32>
    %81 = arith.maximumf %79, %80 : vector<16x128xf32>
    %c1_55 = arith.constant 1 : index
    %c0_56 = arith.constant 0 : index
    %c0_57 = arith.constant 0 : index
    %82 = vector.load %arg13[%c1_55, %c0_56, %c0_57] : memref<4x128x8xf32, #tpu.memory_space<vmem>>, vector<1x128x8xf32>
    %83 = vector.shape_cast %82 : vector<1x128x8xf32> to vector<128x8xf32>
    %cst_58 = arith.constant dense<0.000000e+00> : vector<16x8xf32>
    %84 = tpu.matmul %81, %83, %cst_58 {dimension_numbers = #tpu.dot_dimension_numbers<[1], [0], [0], [1], [0, 0, 1, 1], [], []>} : vector<16x128xf32>, vector<128x8xf32>, vector<16x8xf32> -> vector<16x8xf32>
    %c1_59 = arith.constant 1 : index
    %85 = memref.load %arg14[%c1_59] : memref<4xf32, #tpu.memory_space<smem>>
    %86 = vector.broadcast %85 : f32 to vector<16x8xf32>
    %87 = arith.addf %84, %86 : vector<16x8xf32>
    %cst_60 = arith.constant dense<0xFF800000> : vector<16xf32>
    %88 = vector.multi_reduction <maximumf>, %87, %cst_60 [1] : vector<16x8xf32> to vector<16xf32>
    %89 = vector.shape_cast %88 : vector<16xf32> to vector<16x1xf32>
    %90 = vector.broadcast %89 : vector<16x1xf32> to vector<16x8xf32>
    %91 = arith.subf %87, %90 : vector<16x8xf32>
    %92 = math.exp %91 : vector<16x8xf32>
    %cst_61 = arith.constant dense<0.000000e+00> : vector<16xf32>
    %93 = vector.multi_reduction <add>, %92, %cst_61 [1] : vector<16x8xf32> to vector<16xf32>
    %94 = vector.shape_cast %93 : vector<16xf32> to vector<16x1xf32>
    %95 = vector.broadcast %94 : vector<16x1xf32> to vector<16x8xf32>
    %96 = arith.divf %92, %95 : vector<16x8xf32>
    %97 = vector.shape_cast %96 : vector<16x8xf32> to vector<2x8x8xf32>
    "tpu.trace_start"() <{level = 10 : i32, message = "bnm,bmd->bnd"}> : () -> ()
    %cst_62 = arith.constant dense<0.000000e+00> : vector<2x8x8xf32>
    %98 = tpu.matmul %97, %63, %cst_62 {dimension_numbers = #tpu.dot_dimension_numbers<[2], [1], [1], [2], [0, 0, 0, 1, 1, 2], [0], [0]>} : vector<2x8x8xf32>, vector<2x8x8xf32>, vector<2x8x8xf32> -> vector<2x8x8xf32>
    "tpu.trace_stop"() : () -> ()
    %99 = vector.extract_strided_slice %10 {offsets = [0, 16], sizes = [16, 8], strides = [1, 1]} : vector<16x32xf32> to vector<16x8xf32>
    %100 = vector.shape_cast %99 : vector<16x8xf32> to vector<2x8x8xf32>
    %101 = vector.extract_strided_slice %12 {offsets = [0, 16], sizes = [16, 8], strides = [1, 1]} : vector<16x32xf32> to vector<16x8xf32>
    %102 = vector.shape_cast %101 : vector<16x8xf32> to vector<2x8x8xf32>
    %103 = vector.extract_strided_slice %14 {offsets = [0, 16], sizes = [16, 8], strides = [1, 1]} : vector<16x32xf32> to vector<16x8xf32>
    %104 = vector.shape_cast %103 : vector<16x8xf32> to vector<2x8x8xf32>
    "tpu.trace_start"() <{level = 10 : i32, message = "bnd,bmd->bnm"}> : () -> ()
    %cst_63 = arith.constant dense<0.000000e+00> : vector<2x8x8xf32>
    %105 = tpu.matmul %100, %102, %cst_63 {dimension_numbers = #tpu.dot_dimension_numbers<[2], [2], [1], [1], [0, 0, 0, 1, 1, 1], [0], [0]>} : vector<2x8x8xf32>, vector<2x8x8xf32>, vector<2x8x8xf32> -> vector<2x8x8xf32>
    "tpu.trace_stop"() : () -> ()
    %cst_64 = arith.constant 0.353553385 : f32
    %106 = vector.broadcast %cst_64 : f32 to vector<2x8x8xf32>
    %107 = arith.mulf %105, %106 : vector<2x8x8xf32>
    %108 = vector.shape_cast %107 : vector<2x8x8xf32> to vector<16x8xf32>
    %c2 = arith.constant 2 : index
    %c0_65 = arith.constant 0 : index
    %c0_66 = arith.constant 0 : index
    %109 = vector.load %arg9[%c2, %c0_65, %c0_66] : memref<4x8x128xf32, #tpu.memory_space<vmem>>, vector<1x8x128xf32>
    %110 = vector.shape_cast %109 : vector<1x8x128xf32> to vector<8x128xf32>
    %cst_67 = arith.constant dense<0.000000e+00> : vector<16x128xf32>
    %111 = tpu.matmul %108, %110, %cst_67 {dimension_numbers = #tpu.dot_dimension_numbers<[1], [0], [0], [1], [0, 0, 1, 1], [], []>} : vector<16x8xf32>, vector<8x128xf32>, vector<16x128xf32> -> vector<16x128xf32>
    %c2_68 = arith.constant 2 : index
    %c0_69 = arith.constant 0 : index
    %c0_70 = arith.constant 0 : index
    %112 = vector.load %arg11[%c2_68, %c0_69, %c0_70] : memref<4x1x128xf32, #tpu.memory_space<vmem>>, vector<1x1x128xf32>
    %113 = vector.shape_cast %112 : vector<1x1x128xf32> to vector<1x128xf32>
    %114 = vector.broadcast %113 : vector<1x128xf32> to vector<16x128xf32>
    %115 = arith.mulf %16, %114 : vector<16x128xf32>
    %116 = arith.addf %111, %115 : vector<16x128xf32>
    %c2_71 = arith.constant 2 : index
    %c0_72 = arith.constant 0 : index
    %c0_73 = arith.constant 0 : index
    %117 = vector.load %arg12[%c2_71, %c0_72, %c0_73] : memref<4x1x128xf32, #tpu.memory_space<vmem>>, vector<1x1x128xf32>
    %118 = vector.shape_cast %117 : vector<1x1x128xf32> to vector<1x128xf32>
    %119 = vector.broadcast %118 : vector<1x128xf32> to vector<16x128xf32>
    %120 = arith.addf %116, %119 : vector<16x128xf32>
    %cst_74 = arith.constant 0.000000e+00 : f32
    %121 = vector.broadcast %cst_74 : f32 to vector<16x128xf32>
    %122 = arith.maximumf %120, %121 : vector<16x128xf32>
    %c2_75 = arith.constant 2 : index
    %c0_76 = arith.constant 0 : index
    %c0_77 = arith.constant 0 : index
    %123 = vector.load %arg13[%c2_75, %c0_76, %c0_77] : memref<4x128x8xf32, #tpu.memory_space<vmem>>, vector<1x128x8xf32>
    %124 = vector.shape_cast %123 : vector<1x128x8xf32> to vector<128x8xf32>
    %cst_78 = arith.constant dense<0.000000e+00> : vector<16x8xf32>
    %125 = tpu.matmul %122, %124, %cst_78 {dimension_numbers = #tpu.dot_dimension_numbers<[1], [0], [0], [1], [0, 0, 1, 1], [], []>} : vector<16x128xf32>, vector<128x8xf32>, vector<16x8xf32> -> vector<16x8xf32>
    %c2_79 = arith.constant 2 : index
    %126 = memref.load %arg14[%c2_79] : memref<4xf32, #tpu.memory_space<smem>>
    %127 = vector.broadcast %126 : f32 to vector<16x8xf32>
    %128 = arith.addf %125, %127 : vector<16x8xf32>
    %cst_80 = arith.constant dense<0xFF800000> : vector<16xf32>
    %129 = vector.multi_reduction <maximumf>, %128, %cst_80 [1] : vector<16x8xf32> to vector<16xf32>
    %130 = vector.shape_cast %129 : vector<16xf32> to vector<16x1xf32>
    %131 = vector.broadcast %130 : vector<16x1xf32> to vector<16x8xf32>
    %132 = arith.subf %128, %131 : vector<16x8xf32>
    %133 = math.exp %132 : vector<16x8xf32>
    %cst_81 = arith.constant dense<0.000000e+00> : vector<16xf32>
    %134 = vector.multi_reduction <add>, %133, %cst_81 [1] : vector<16x8xf32> to vector<16xf32>
    %135 = vector.shape_cast %134 : vector<16xf32> to vector<16x1xf32>
    %136 = vector.broadcast %135 : vector<16x1xf32> to vector<16x8xf32>
    %137 = arith.divf %133, %136 : vector<16x8xf32>
    %138 = vector.shape_cast %137 : vector<16x8xf32> to vector<2x8x8xf32>
    "tpu.trace_start"() <{level = 10 : i32, message = "bnm,bmd->bnd"}> : () -> ()
    %cst_82 = arith.constant dense<0.000000e+00> : vector<2x8x8xf32>
    %139 = tpu.matmul %138, %104, %cst_82 {dimension_numbers = #tpu.dot_dimension_numbers<[2], [1], [1], [2], [0, 0, 0, 1, 1, 2], [0], [0]>} : vector<2x8x8xf32>, vector<2x8x8xf32>, vector<2x8x8xf32> -> vector<2x8x8xf32>
    "tpu.trace_stop"() : () -> ()
    %140 = vector.extract_strided_slice %10 {offsets = [0, 24], sizes = [16, 8], strides = [1, 1]} : vector<16x32xf32> to vector<16x8xf32>
    %141 = vector.shape_cast %140 : vector<16x8xf32> to vector<2x8x8xf32>
    %142 = vector.extract_strided_slice %12 {offsets = [0, 24], sizes = [16, 8], strides = [1, 1]} : vector<16x32xf32> to vector<16x8xf32>
    %143 = vector.shape_cast %142 : vector<16x8xf32> to vector<2x8x8xf32>
    %144 = vector.extract_strided_slice %14 {offsets = [0, 24], sizes = [16, 8], strides = [1, 1]} : vector<16x32xf32> to vector<16x8xf32>
    %145 = vector.shape_cast %144 : vector<16x8xf32> to vector<2x8x8xf32>
    "tpu.trace_start"() <{level = 10 : i32, message = "bnd,bmd->bnm"}> : () -> ()
    %cst_83 = arith.constant dense<0.000000e+00> : vector<2x8x8xf32>
    %146 = tpu.matmul %141, %143, %cst_83 {dimension_numbers = #tpu.dot_dimension_numbers<[2], [2], [1], [1], [0, 0, 0, 1, 1, 1], [0], [0]>} : vector<2x8x8xf32>, vector<2x8x8xf32>, vector<2x8x8xf32> -> vector<2x8x8xf32>
    "tpu.trace_stop"() : () -> ()
    %cst_84 = arith.constant 0.353553385 : f32
    %147 = vector.broadcast %cst_84 : f32 to vector<2x8x8xf32>
    %148 = arith.mulf %146, %147 : vector<2x8x8xf32>
    %149 = vector.shape_cast %148 : vector<2x8x8xf32> to vector<16x8xf32>
    %c3 = arith.constant 3 : index
    %c0_85 = arith.constant 0 : index
    %c0_86 = arith.constant 0 : index
    %150 = vector.load %arg9[%c3, %c0_85, %c0_86] : memref<4x8x128xf32, #tpu.memory_space<vmem>>, vector<1x8x128xf32>
    %151 = vector.shape_cast %150 : vector<1x8x128xf32> to vector<8x128xf32>
    %cst_87 = arith.constant dense<0.000000e+00> : vector<16x128xf32>
    %152 = tpu.matmul %149, %151, %cst_87 {dimension_numbers = #tpu.dot_dimension_numbers<[1], [0], [0], [1], [0, 0, 1, 1], [], []>} : vector<16x8xf32>, vector<8x128xf32>, vector<16x128xf32> -> vector<16x128xf32>
    %c3_88 = arith.constant 3 : index
    %c0_89 = arith.constant 0 : index
    %c0_90 = arith.constant 0 : index
    %153 = vector.load %arg11[%c3_88, %c0_89, %c0_90] : memref<4x1x128xf32, #tpu.memory_space<vmem>>, vector<1x1x128xf32>
    %154 = vector.shape_cast %153 : vector<1x1x128xf32> to vector<1x128xf32>
    %155 = vector.broadcast %154 : vector<1x128xf32> to vector<16x128xf32>
    %156 = arith.mulf %16, %155 : vector<16x128xf32>
    %157 = arith.addf %152, %156 : vector<16x128xf32>
    %c3_91 = arith.constant 3 : index
    %c0_92 = arith.constant 0 : index
    %c0_93 = arith.constant 0 : index
    %158 = vector.load %arg12[%c3_91, %c0_92, %c0_93] : memref<4x1x128xf32, #tpu.memory_space<vmem>>, vector<1x1x128xf32>
    %159 = vector.shape_cast %158 : vector<1x1x128xf32> to vector<1x128xf32>
    %160 = vector.broadcast %159 : vector<1x128xf32> to vector<16x128xf32>
    %161 = arith.addf %157, %160 : vector<16x128xf32>
    %cst_94 = arith.constant 0.000000e+00 : f32
    %162 = vector.broadcast %cst_94 : f32 to vector<16x128xf32>
    %163 = arith.maximumf %161, %162 : vector<16x128xf32>
    %c3_95 = arith.constant 3 : index
    %c0_96 = arith.constant 0 : index
    %c0_97 = arith.constant 0 : index
    %164 = vector.load %arg13[%c3_95, %c0_96, %c0_97] : memref<4x128x8xf32, #tpu.memory_space<vmem>>, vector<1x128x8xf32>
    %165 = vector.shape_cast %164 : vector<1x128x8xf32> to vector<128x8xf32>
    %cst_98 = arith.constant dense<0.000000e+00> : vector<16x8xf32>
    %166 = tpu.matmul %163, %165, %cst_98 {dimension_numbers = #tpu.dot_dimension_numbers<[1], [0], [0], [1], [0, 0, 1, 1], [], []>} : vector<16x128xf32>, vector<128x8xf32>, vector<16x8xf32> -> vector<16x8xf32>
    %c3_99 = arith.constant 3 : index
    %167 = memref.load %arg14[%c3_99] : memref<4xf32, #tpu.memory_space<smem>>
    %168 = vector.broadcast %167 : f32 to vector<16x8xf32>
    %169 = arith.addf %166, %168 : vector<16x8xf32>
    %cst_100 = arith.constant dense<0xFF800000> : vector<16xf32>
    %170 = vector.multi_reduction <maximumf>, %169, %cst_100 [1] : vector<16x8xf32> to vector<16xf32>
    %171 = vector.shape_cast %170 : vector<16xf32> to vector<16x1xf32>
    %172 = vector.broadcast %171 : vector<16x1xf32> to vector<16x8xf32>
    %173 = arith.subf %169, %172 : vector<16x8xf32>
    %174 = math.exp %173 : vector<16x8xf32>
    %cst_101 = arith.constant dense<0.000000e+00> : vector<16xf32>
    %175 = vector.multi_reduction <add>, %174, %cst_101 [1] : vector<16x8xf32> to vector<16xf32>
    %176 = vector.shape_cast %175 : vector<16xf32> to vector<16x1xf32>
    %177 = vector.broadcast %176 : vector<16x1xf32> to vector<16x8xf32>
    %178 = arith.divf %174, %177 : vector<16x8xf32>
    %179 = vector.shape_cast %178 : vector<16x8xf32> to vector<2x8x8xf32>
    "tpu.trace_start"() <{level = 10 : i32, message = "bnm,bmd->bnd"}> : () -> ()
    %cst_102 = arith.constant dense<0.000000e+00> : vector<2x8x8xf32>
    %180 = tpu.matmul %179, %145, %cst_102 {dimension_numbers = #tpu.dot_dimension_numbers<[2], [1], [1], [2], [0, 0, 0, 1, 1, 2], [0], [0]>} : vector<2x8x8xf32>, vector<2x8x8xf32>, vector<2x8x8xf32> -> vector<2x8x8xf32>
    "tpu.trace_stop"() : () -> ()
    %181 = tpu.concatenate %57, %98, %139, %180 in 2 : vector<2x8x8xf32>, vector<2x8x8xf32>, vector<2x8x8xf32>, vector<2x8x8xf32> -> vector<2x8x32xf32>
    %182 = vector.shape_cast %181 : vector<2x8x32xf32> to vector<16x32xf32>
    %c0_103 = arith.constant 0 : index
    %c0_104 = arith.constant 0 : index
    %183 = vector.load %arg7[%c0_103, %c0_104] : memref<32x32xf32, #tpu.memory_space<vmem>>, vector<32x32xf32>
    %cst_105 = arith.constant dense<0.000000e+00> : vector<16x32xf32>
    %184 = tpu.matmul %182, %183, %cst_105 {dimension_numbers = #tpu.dot_dimension_numbers<[1], [1], [0], [0], [0, 0, 1, 0], [], []>} : vector<16x32xf32>, vector<32x32xf32>, vector<16x32xf32> -> vector<16x32xf32>
    %c0_106 = arith.constant 0 : index
    %c0_107 = arith.constant 0 : index
    %185 = vector.load %arg8[%c0_106, %c0_107] : memref<1x32xf32, #tpu.memory_space<vmem>>, vector<1x32xf32>
    %186 = vector.broadcast %185 : vector<1x32xf32> to vector<16x32xf32>
    %187 = arith.addf %184, %186 : vector<16x32xf32>
    %c0_108 = arith.constant 0 : index
    %c0_109 = arith.constant 0 : index
    %188 = vector.load %arg15[%c0_108, %c0_109] : memref<1x32xf32, #tpu.memory_space<vmem>>, vector<1x32xf32>
    %c0_110 = arith.constant 0 : index
    %c0_111 = arith.constant 0 : index
    %189 = vector.load %arg16[%c0_110, %c0_111] : memref<1x32xf32, #tpu.memory_space<vmem>>, vector<1x32xf32>
    %190 = arith.addf %6, %187 : vector<16x32xf32>
    %191 = vector.shape_cast %190 : vector<16x32xf32> to vector<2x8x32xf32>
    %cst_112 = arith.constant dense<0.000000e+00> : vector<2x32xf32>
    %192 = vector.multi_reduction <add>, %191, %cst_112 [1] : vector<2x8x32xf32> to vector<2x32xf32>
    %193 = vector.shape_cast %192 : vector<2x32xf32> to vector<2x1x32xf32>
    %cst_113 = arith.constant 8.000000e+00 : f32
    %194 = vector.broadcast %cst_113 : f32 to vector<2x1x32xf32>
    %195 = arith.divf %193, %194 : vector<2x1x32xf32>
    %196 = vector.broadcast %195 : vector<2x1x32xf32> to vector<2x8x32xf32>
    %197 = arith.subf %191, %196 : vector<2x8x32xf32>
    %198 = arith.mulf %197, %197 : vector<2x8x32xf32>
    %cst_114 = arith.constant dense<0.000000e+00> : vector<2x32xf32>
    %199 = vector.multi_reduction <add>, %198, %cst_114 [1] : vector<2x8x32xf32> to vector<2x32xf32>
    %200 = vector.shape_cast %199 : vector<2x32xf32> to vector<2x1x32xf32>
    %cst_115 = arith.constant 8.000000e+00 : f32
    %201 = vector.broadcast %cst_115 : f32 to vector<2x1x32xf32>
    %202 = arith.divf %200, %201 : vector<2x1x32xf32>
    %cst_116 = arith.constant 9.99999974E-6 : f32
    %203 = vector.broadcast %cst_116 : f32 to vector<2x1x32xf32>
    %204 = arith.addf %202, %203 : vector<2x1x32xf32>
    %205 = math.rsqrt %204 : vector<2x1x32xf32>
    %206 = vector.broadcast %205 : vector<2x1x32xf32> to vector<2x8x32xf32>
    %207 = arith.mulf %197, %206 : vector<2x8x32xf32>
    %208 = vector.shape_cast %207 : vector<2x8x32xf32> to vector<16x32xf32>
    %209 = vector.broadcast %188 : vector<1x32xf32> to vector<16x32xf32>
    %210 = arith.mulf %208, %209 : vector<16x32xf32>
    %211 = vector.broadcast %189 : vector<1x32xf32> to vector<16x32xf32>
    %212 = arith.addf %210, %211 : vector<16x32xf32>
    %c0_117 = arith.constant 0 : index
    %c0_118 = arith.constant 0 : index
    %213 = vector.load %arg17[%c0_117, %c0_118] : memref<64x32xf32, #tpu.memory_space<vmem>>, vector<64x32xf32>
    %cst_119 = arith.constant dense<0.000000e+00> : vector<16x64xf32>
    %214 = tpu.matmul %212, %213, %cst_119 {dimension_numbers = #tpu.dot_dimension_numbers<[1], [1], [0], [0], [0, 0, 1, 0], [], []>} : vector<16x32xf32>, vector<64x32xf32>, vector<16x64xf32> -> vector<16x64xf32>
    %c0_120 = arith.constant 0 : index
    %c0_121 = arith.constant 0 : index
    %215 = vector.load %arg18[%c0_120, %c0_121] : memref<1x64xf32, #tpu.memory_space<vmem>>, vector<1x64xf32>
    %216 = vector.broadcast %215 : vector<1x64xf32> to vector<16x64xf32>
    %217 = arith.addf %214, %216 : vector<16x64xf32>
    %cst_122 = arith.constant 0.000000e+00 : f32
    %218 = vector.broadcast %cst_122 : f32 to vector<16x64xf32>
    %219 = arith.maximumf %217, %218 : vector<16x64xf32>
    %c0_123 = arith.constant 0 : index
    %c0_124 = arith.constant 0 : index
    %220 = vector.load %arg19[%c0_123, %c0_124] : memref<32x64xf32, #tpu.memory_space<vmem>>, vector<32x64xf32>
    %cst_125 = arith.constant dense<0.000000e+00> : vector<16x32xf32>
    %221 = tpu.matmul %219, %220, %cst_125 {dimension_numbers = #tpu.dot_dimension_numbers<[1], [1], [0], [0], [0, 0, 1, 0], [], []>} : vector<16x64xf32>, vector<32x64xf32>, vector<16x32xf32> -> vector<16x32xf32>
    %c0_126 = arith.constant 0 : index
    %c0_127 = arith.constant 0 : index
    %222 = vector.load %arg20[%c0_126, %c0_127] : memref<1x32xf32, #tpu.memory_space<vmem>>, vector<1x32xf32>
    %223 = vector.broadcast %222 : vector<1x32xf32> to vector<16x32xf32>
    %224 = arith.addf %221, %223 : vector<16x32xf32>
    %c0_128 = arith.constant 0 : index
    %c0_129 = arith.constant 0 : index
    %225 = vector.load %arg21[%c0_128, %c0_129] : memref<1x32xf32, #tpu.memory_space<vmem>>, vector<1x32xf32>
    %c0_130 = arith.constant 0 : index
    %c0_131 = arith.constant 0 : index
    %226 = vector.load %arg22[%c0_130, %c0_131] : memref<1x32xf32, #tpu.memory_space<vmem>>, vector<1x32xf32>
    %227 = arith.addf %212, %224 : vector<16x32xf32>
    %228 = vector.shape_cast %227 : vector<16x32xf32> to vector<2x8x32xf32>
    %cst_132 = arith.constant dense<0.000000e+00> : vector<2x32xf32>
    %229 = vector.multi_reduction <add>, %228, %cst_132 [1] : vector<2x8x32xf32> to vector<2x32xf32>
    %230 = vector.shape_cast %229 : vector<2x32xf32> to vector<2x1x32xf32>
    %cst_133 = arith.constant 8.000000e+00 : f32
    %231 = vector.broadcast %cst_133 : f32 to vector<2x1x32xf32>
    %232 = arith.divf %230, %231 : vector<2x1x32xf32>
    %233 = vector.broadcast %232 : vector<2x1x32xf32> to vector<2x8x32xf32>
    %234 = arith.subf %228, %233 : vector<2x8x32xf32>
    %235 = arith.mulf %234, %234 : vector<2x8x32xf32>
    %cst_134 = arith.constant dense<0.000000e+00> : vector<2x32xf32>
    %236 = vector.multi_reduction <add>, %235, %cst_134 [1] : vector<2x8x32xf32> to vector<2x32xf32>
    %237 = vector.shape_cast %236 : vector<2x32xf32> to vector<2x1x32xf32>
    %cst_135 = arith.constant 8.000000e+00 : f32
    %238 = vector.broadcast %cst_135 : f32 to vector<2x1x32xf32>
    %239 = arith.divf %237, %238 : vector<2x1x32xf32>
    %cst_136 = arith.constant 9.99999974E-6 : f32
    %240 = vector.broadcast %cst_136 : f32 to vector<2x1x32xf32>
    %241 = arith.addf %239, %240 : vector<2x1x32xf32>
    %242 = math.rsqrt %241 : vector<2x1x32xf32>
    %243 = vector.broadcast %242 : vector<2x1x32xf32> to vector<2x8x32xf32>
    %244 = arith.mulf %234, %243 : vector<2x8x32xf32>
    %245 = vector.shape_cast %244 : vector<2x8x32xf32> to vector<16x32xf32>
    %246 = vector.broadcast %225 : vector<1x32xf32> to vector<16x32xf32>
    %247 = arith.mulf %245, %246 : vector<16x32xf32>
    %248 = vector.broadcast %226 : vector<1x32xf32> to vector<16x32xf32>
    %249 = arith.addf %247, %248 : vector<16x32xf32>
    %250 = vector.shape_cast %249 : vector<16x32xf32> to vector<2x8x32xf32>
    %c0_137 = arith.constant 0 : index
    %c0_138 = arith.constant 0 : index
    %c0_139 = arith.constant 0 : index
    %c0_140 = arith.constant 0 : index
    %251 = vector.load %arg23[%c0_137, %c0_138, %c0_139, %c0_140] : memref<1x2x8x32xf32, #tpu.memory_space<vmem>>, vector<1x2x8x32xf32>
    %252 = vector.shape_cast %251 : vector<1x2x8x32xf32> to vector<2x8x32xf32>
    %253 = vector.shape_cast %250 : vector<2x8x32xf32> to vector<1x2x8x32xf32>
    tpu.vector_store %arg23[%c0_137, %c0_138, %c0_139, %c0_140], %253 {strides = array<i32>} : memref<1x2x8x32xf32, #tpu.memory_space<vmem>>, vector<1x2x8x32xf32>,
    return
  }
  func.func @transform_0(%arg0: i32) -> (i32, i32, i32, i32) {
    %c0_i32 = arith.constant 0 : i32
    %c0_i32_0 = arith.constant 0 : i32
    %c0_i32_1 = arith.constant 0 : i32
    %c0_i32_2 = arith.constant 0 : i32
    return %arg0, %c0_i32, %c0_i32_0, %c0_i32_1 : i32, i32, i32, i32
  }
  func.func @transform_1(%arg0: i32) -> (i32, i32, i32, i32) {
    %c0_i32 = arith.constant 0 : i32
    %c0_i32_0 = arith.constant 0 : i32
    %c0_i32_1 = arith.constant 0 : i32
    %c0_i32_2 = arith.constant 0 : i32
    return %arg0, %c0_i32, %c0_i32_0, %c0_i32_1 : i32, i32, i32, i32
  }
  func.func @transform_2(%arg0: i32) -> (i32, i32, i32, i32) {
    %c0_i32 = arith.constant 0 : i32
    %c0_i32_0 = arith.constant 0 : i32
    %c0_i32_1 = arith.constant 0 : i32
    %c0_i32_2 = arith.constant 0 : i32
    return %arg0, %c0_i32, %c0_i32_0, %c0_i32_1 : i32, i32, i32, i32
  }
  func.func @transform_3(%arg0: i32) -> (i32, i32) {
    %c0_i32 = arith.constant 0 : i32
    %c0_i32_0 = arith.constant 0 : i32
    %c0_i32_1 = arith.constant 0 : i32
    return %c0_i32, %c0_i32_0 : i32, i32
  }
  func.func @transform_4(%arg0: i32) -> (i32, i32) {
    %c0_i32 = arith.constant 0 : i32
    %c0_i32_0 = arith.constant 0 : i32
    %c0_i32_1 = arith.constant 0 : i32
    return %c0_i32, %c0_i32_0 : i32, i32
  }
  func.func @transform_5(%arg0: i32) -> (i32, i32) {
    %c0_i32 = arith.constant 0 : i32
    %c0_i32_0 = arith.constant 0 : i32
    %c0_i32_1 = arith.constant 0 : i32
    return %c0_i32, %c0_i32_0 : i32, i32
  }
  func.func @transform_6(%arg0: i32) -> (i32, i32) {
    %c0_i32 = arith.constant 0 : i32
    %c0_i32_0 = arith.constant 0 : i32
    %c0_i32_1 = arith.constant 0 : i32
    return %c0_i32, %c0_i32_0 : i32, i32
  }
  func.func @transform_7(%arg0: i32) -> (i32, i32) {
    %c0_i32 = arith.constant 0 : i32
    %c0_i32_0 = arith.constant 0 : i32
    %c0_i32_1 = arith.constant 0 : i32
    return %c0_i32, %c0_i32_0 : i32, i32
  }
  func.func @transform_8(%arg0: i32) -> (i32, i32, i32) {
    %c0_i32 = arith.constant 0 : i32
    %c0_i32_0 = arith.constant 0 : i32
    %c0_i32_1 = arith.constant 0 : i32
    %c0_i32_2 = arith.constant 0 : i32
    return %c0_i32, %c0_i32_0, %c0_i32_1 : i32, i32, i32
  }
  func.func @transform_9(%arg0: i32) -> (i32, i32) {
    %c0_i32 = arith.constant 0 : i32
    %c0_i32_0 = arith.constant 0 : i32
    %c0_i32_1 = arith.constant 0 : i32
    return %c0_i32, %c0_i32_0 : i32, i32
  }
  func.func @transform_10(%arg0: i32) -> (i32, i32, i32) {
    %c0_i32 = arith.constant 0 : i32
    %c0_i32_0 = arith.constant 0 : i32
    %c0_i32_1 = arith.constant 0 : i32
    %c0_i32_2 = arith.constant 0 : i32
    return %c0_i32, %c0_i32_0, %c0_i32_1 : i32, i32, i32
  }
  func.func @transform_11(%arg0: i32) -> (i32, i32, i32) {
    %c0_i32 = arith.constant 0 : i32
    %c0_i32_0 = arith.constant 0 : i32
    %c0_i32_1 = arith.constant 0 : i32
    %c0_i32_2 = arith.constant 0 : i32
    return %c0_i32, %c0_i32_0, %c0_i32_1 : i32, i32, i32
  }
  func.func @transform_12(%arg0: i32) -> (i32, i32, i32) {
    %c0_i32 = arith.constant 0 : i32
    %c0_i32_0 = arith.constant 0 : i32
    %c0_i32_1 = arith.constant 0 : i32
    %c0_i32_2 = arith.constant 0 : i32
    return %c0_i32, %c0_i32_0, %c0_i32_1 : i32, i32, i32
  }
  func.func @transform_13(%arg0: i32) -> i32 {
    %c0_i32 = arith.constant 0 : i32
    %c0_i32_0 = arith.constant 0 : i32
    return %c0_i32 : i32
  }
  func.func @transform_14(%arg0: i32) -> (i32, i32) {
    %c0_i32 = arith.constant 0 : i32
    %c0_i32_0 = arith.constant 0 : i32
    %c0_i32_1 = arith.constant 0 : i32
    return %c0_i32, %c0_i32_0 : i32, i32
  }
  func.func @transform_15(%arg0: i32) -> (i32, i32) {
    %c0_i32 = arith.constant 0 : i32
    %c0_i32_0 = arith.constant 0 : i32
    %c0_i32_1 = arith.constant 0 : i32
    return %c0_i32, %c0_i32_0 : i32, i32
  }
  func.func @transform_16(%arg0: i32) -> (i32, i32) {
    %c0_i32 = arith.constant 0 : i32
    %c0_i32_0 = arith.constant 0 : i32
    %c0_i32_1 = arith.constant 0 : i32
    return %c0_i32, %c0_i32_0 : i32, i32
  }
  func.func @transform_17(%arg0: i32) -> (i32, i32) {
    %c0_i32 = arith.constant 0 : i32
    %c0_i32_0 = arith.constant 0 : i32
    %c0_i32_1 = arith.constant 0 : i32
    return %c0_i32, %c0_i32_0 : i32, i32
  }
  func.func @transform_18(%arg0: i32) -> (i32, i32) {
    %c0_i32 = arith.constant 0 : i32
    %c0_i32_0 = arith.constant 0 : i32
    %c0_i32_1 = arith.constant 0 : i32
    return %c0_i32, %c0_i32_0 : i32, i32
  }
  func.func @transform_19(%arg0: i32) -> (i32, i32) {
    %c0_i32 = arith.constant 0 : i32
    %c0_i32_0 = arith.constant 0 : i32
    %c0_i32_1 = arith.constant 0 : i32
    return %c0_i32, %c0_i32_0 : i32, i32
  }
  func.func @transform_20(%arg0: i32) -> (i32, i32) {
    %c0_i32 = arith.constant 0 : i32
    %c0_i32_0 = arith.constant 0 : i32
    %c0_i32_1 = arith.constant 0 : i32
    return %c0_i32, %c0_i32_0 : i32, i32
  }
  func.func @transform_21(%arg0: i32) -> (i32, i32) {
    %c0_i32 = arith.constant 0 : i32
    %c0_i32_0 = arith.constant 0 : i32
    %c0_i32_1 = arith.constant 0 : i32
    return %c0_i32, %c0_i32_0 : i32, i32
  }
  func.func @transform_22(%arg0: i32) -> (i32, i32, i32, i32) {
    %c0_i32 = arith.constant 0 : i32
    %c0_i32_0 = arith.constant 0 : i32
    %c0_i32_1 = arith.constant 0 : i32
    %c0_i32_2 = arith.constant 0 : i32
    return %arg0, %c0_i32, %c0_i32_0, %c0_i32_1 : i32, i32, i32, i32
  }
}

</mosaic_0001>

<llo_original>
// kernel: tpu_custom_call.1
$region0: #{tpu_custom_call.1}
  #allocation0 [shape = 'u32[]', space=smem, size = 0x4, offset = 0x4, fixed_abs, tag = 'smem constant byte address 0x4 - core index']
  #allocation1 [shape = 'u32[144,128]{1,0:T(1,128)}', space=vmem, size = 0x12000, scoped, tag = 'internal scratch']
  %s0 = inlined_call_operand.vmem [shape: f32[2,2,8,32], index: 0, kind: input, shape index: {}]
  %s1 = inlined_call_operand.vmem [shape: f32[2,2,8,32], index: 1, kind: input, shape index: {}]
  %s2 = inlined_call_operand.vmem [shape: f32[2,2,8,8], index: 2, kind: input, shape index: {}]
  %s3 = inlined_call_operand.vmem [shape: f32[32,32], index: 3, kind: input, shape index: {}]
  %s4 = inlined_call_operand.vmem [shape: f32[32,32], index: 4, kind: input, shape index: {}]
  %s5 = inlined_call_operand.vmem [shape: f32[32,32], index: 5, kind: input, shape index: {}]
  %s6 = inlined_call_operand.vmem [shape: f32[32,32], index: 6, kind: input, shape index: {}]
  %s7 = inlined_call_operand.vmem [shape: f32[1,32], index: 7, kind: input, shape index: {}]
  %s8 = inlined_call_operand.vmem [shape: f32[4,8,128], index: 8, kind: input, shape index: {}]
  %s9 = inlined_call_operand.vmem [shape: f32[8,128], index: 9, kind: input, shape index: {}]
  %s10 = inlined_call_operand.vmem [shape: f32[4,1,128], index: 10, kind: input, shape index: {}]
  %s11 = inlined_call_operand.vmem [shape: f32[4,1,128], index: 11, kind: input, shape index: {}]
  %s12 = inlined_call_operand.vmem [shape: f32[4,128,8], index: 12, kind: input, shape index: {}]
  %s13 = inlined_call_operand.vmem [shape: f32[4], index: 13, kind: input, shape index: {}]
  %s14 = inlined_call_operand.vmem [shape: f32[1,32], index: 14, kind: input, shape index: {}]
  %s15 = inlined_call_operand.vmem [shape: f32[1,32], index: 15, kind: input, shape index: {}]
  %s16 = inlined_call_operand.vmem [shape: f32[64,32], index: 16, kind: input, shape index: {}]
  %s17 = inlined_call_operand.vmem [shape: f32[1,64], index: 17, kind: input, shape index: {}]
  %s18 = inlined_call_operand.vmem [shape: f32[32,64], index: 18, kind: input, shape index: {}]
  %s19 = inlined_call_operand.vmem [shape: f32[1,32], index: 19, kind: input, shape index: {}]
  %s20 = inlined_call_operand.vmem [shape: f32[1,32], index: 20, kind: input, shape index: {}]
  %s21 = inlined_call_operand.vmem [shape: f32[1,32], index: 21, kind: input, shape index: {}]
  %s22 = inlined_call_operand.hbm [shape: f32[2,2,8,32], index: 22, kind: output, shape index: {}]
  %s23 = sld [smem:[#allocation0]]
  $region125: #{tpu_custom_call.1} parent=0
    _
  %s25 = ssub.s32 1, %s23
  %s26 = scalar_select 0, %s25, %s23
  $region1: #{tpu_custom_call.1} parent=0
    #allocation2 [shape = 'u8[512]{0}', space=smem, size = 0x200, scoped, tag = 'input window, operand 13, single buffered']
    #allocation3 [shape = 's32[2]{0}', space=sflag, size = 0x8, scoped, tag = 'scoped memory for tpu_custom_call.1']
    #allocation4 [shape = 's32[2]{0}', space=sflag, size = 0x8, scoped, tag = 'scoped memory for tpu_custom_call.1']
    #allocation5 [shape = 'u8[16384]{0}', space=vmem, size = 0x4000, scoped, tag = 'output window, operand 0']
    %27 = vsyncpa [#allocation4], 0
    %28 = vsyncpa [#allocation3], 0
    %s29 = scalar_lea.sflag [#allocation3], 1
    %30 = vsyncpa %s29, 0
    loop: start=0, step=1, limit=4
    $region2: #{tpu_custom_call.1} parent=1 // loop_pre_header
      _
    $region3: #{tpu_custom_call.1} parent=1 // loop_header
      %s32 = sphi 0, %s36
      %p33 = scmp.ge.s32.totalorder %s32, 4
      %s42 = sphi 0, %s44
      %s45 = sphi 0, %s42
      %s46 = sphi 0, %s45
      %s62 = sphi 0, %s46
      %s68 = sphi 0, %s70
      %s71 = sphi 0, %s68
      %s72 = sphi 0, %s71
      %s88 = sphi 0, %s72
      %s94 = sphi 0, %s96
      %s97 = sphi 0, %s94
      %s98 = sphi 0, %s97
      %s114 = sphi 0, %s98
      %s118 = sphi 0, %s118
      %s120 = sphi 0, %s118
      %s121 = sphi 0, %s120
      %s135 = sphi 0, %s121
      %s139 = sphi 0, %s139
      %s141 = sphi 0, %s139
      %s142 = sphi 0, %s141
      %s156 = sphi 0, %s142
      %s160 = sphi 0, %s160
      %s162 = sphi 0, %s160
      %s163 = sphi 0, %s162
      %s177 = sphi 0, %s163
      %s181 = sphi 0, %s181
      %s183 = sphi 0, %s181
      %s184 = sphi 0, %s183
      %s198 = sphi 0, %s184
      %s202 = sphi 0, %s202
      %s204 = sphi 0, %s202
      %s205 = sphi 0, %s204
      %s219 = sphi 0, %s205
      %s223 = sphi 0, %s223
      %s225 = sphi 0, %s223
      %s226 = sphi 0, %s225
      %s240 = sphi 0, %s226
      %s244 = sphi 0, %s244
      %s246 = sphi 0, %s244
      %s247 = sphi 0, %s246
      %s261 = sphi 0, %s247
      %s265 = sphi 0, %s265
      %s267 = sphi 0, %s265
      %s268 = sphi 0, %s267
      %s282 = sphi 0, %s268
      %s286 = sphi 0, %s286
      %s288 = sphi 0, %s286
      %s289 = sphi 0, %s288
      %s303 = sphi 0, %s289
      %s307 = sphi 0, %s307
      %s309 = sphi 0, %s307
      %s310 = sphi 0, %s309
      %s324 = sphi 0, %s310
      %s328 = sphi 0, %s328
      %s330 = sphi 0, %s328
      %s331 = sphi 0, %s330
      %s345 = sphi 0, %s331
      %s349 = sphi 0, %s349
      %s351 = sphi 0, %s349
      %s352 = sphi 0, %s351
      %s366 = sphi 0, %s352
      %s370 = sphi 0, %s370
      %s372 = sphi 0, %s370
      %s373 = sphi 0, %s372
      %s387 = sphi 0, %s373
      %s391 = sphi 0, %s391
      %s393 = sphi 0, %s391
      %s394 = sphi 0, %s393
      %s408 = sphi 0, %s394
      %s412 = sphi 0, %s412
      %s414 = sphi 0, %s412
      %s415 = sphi 0, %s414
      %s429 = sphi 0, %s415
      %s433 = sphi 0, %s433
      %s435 = sphi 0, %s433
      %s436 = sphi 0, %s435
      %s450 = sphi 0, %s436
      %s454 = sphi 0, %s454
      %s456 = sphi 0, %s454
      %s457 = sphi 0, %s456
      %s471 = sphi 0, %s457
      %s475 = sphi 0, %s475
      %s477 = sphi 0, %s475
      %s478 = sphi 0, %s477
      %s492 = sphi 0, %s478
      %s496 = sphi 0, %s496
      %s498 = sphi 0, %s496
      %s499 = sphi 0, %s498
      %s513 = sphi 0, %s499
      %s519 = sphi 0, %s521
      %s522 = sphi 0, %s519
      %s523 = sphi 0, %s522
      %s539 = sphi 0, %s523
    $region4: #{tpu_custom_call.1} parent=1 // loop_header_branch
      %35 = sbr.rel (%p33) target = $region8
    $region5: #{tpu_custom_call.1} parent=1 // loop_body
      %s37 = ssub.s32 %s32, 1
      %s38 = ssub.s32 %s32, 2
      %s39 = sadd.s32 %s32, 1
      %s40 = ssub.s32 %s32, %s39
      %p41 = scmp.eq.s32.totalorder %s40, 0
      %s43 = sadd.s32 %s42, 1
      %s44 = scalar_select %p41, %s42, %s43
      %p47 = pneg %p41
      %p48 = scmp.eq.s32.totalorder %s32, 1
      %p49 = por %p47, %p48
      %p50 = scmp.ne.s32.totalorder %s42, %s45
      %p51 = scmp.eq.s32.totalorder %s32, 0
      %p52 = por %p50, %p51
      %p53 = scmp.ne.s32.totalorder %s42, %s45
      %p54 = scmp.eq.s32.totalorder %s37, 1
      %p55 = por %p53, %p54
      %p56 = scmp.ne.s32.totalorder %s45, %s46
      %p57 = scmp.eq.s32.totalorder %s37, 0
      %p58 = por %p56, %p57
      %p59 = scmp.ne.s32.totalorder %s45, %s46
      %p60 = scmp.eq.s32.totalorder %s38, 1
      %p61 = por %p59, %p60
      %p63 = scmp.ne.s32.totalorder %s46, %s62
      %p64 = scmp.eq.s32.totalorder %s38, 0
      %p65 = por %p63, %p64
      %s66 = ssub.s32 %s32, %s39
      %p67 = scmp.eq.s32.totalorder %s66, 0
      %s69 = sadd.s32 %s68, 1
      %s70 = scalar_select %p67, %s68, %s69
      %p73 = pneg %p67
      %p74 = scmp.eq.s32.totalorder %s32, 1
      %p75 = por %p73, %p74
      %p76 = scmp.ne.s32.totalorder %s68, %s71
      %p77 = scmp.eq.s32.totalorder %s32, 0
      %p78 = por %p76, %p77
      %p79 = scmp.ne.s32.totalorder %s68, %s71
      %p80 = scmp.eq.s32.totalorder %s37, 1
      %p81 = por %p79, %p80
      %p82 = scmp.ne.s32.totalorder %s71, %s72
      %p83 = scmp.eq.s32.totalorder %s37, 0
      %p84 = por %p82, %p83
      %p85 = scmp.ne.s32.totalorder %s71, %s72
      %p86 = scmp.eq.s32.totalorder %s38, 1
      %p87 = por %p85, %p86
      %p89 = scmp.ne.s32.totalorder %s72, %s88
      %p90 = scmp.eq.s32.totalorder %s38, 0
      %p91 = por %p89, %p90
      %s92 = ssub.s32 %s32, %s39
      %p93 = scmp.eq.s32.totalorder %s92, 0
      %s95 = sadd.s32 %s94, 1
      %s96 = scalar_select %p93, %s94, %s95
      %p99 = pneg %p93
      %p100 = scmp.eq.s32.totalorder %s32, 1
      %p101 = por %p99, %p100
      %p102 = scmp.ne.s32.totalorder %s94, %s97
      %p103 = scmp.eq.s32.totalorder %s32, 0
      %p104 = por %p102, %p103
      %p105 = scmp.ne.s32.totalorder %s94, %s97
      %p106 = scmp.eq.s32.totalorder %s37, 1
      %p107 = por %p105, %p106
      %p108 = scmp.ne.s32.totalorder %s97, %s98
      %p109 = scmp.eq.s32.totalorder %s37, 0
      %p110 = por %p108, %p109
      %p111 = scmp.ne.s32.totalorder %s97, %s98
      %p112 = scmp.eq.s32.totalorder %s38, 1
      %p113 = por %p111, %p112
      %p115 = scmp.ne.s32.totalorder %s98, %s114
      %p116 = scmp.eq.s32.totalorder %s38, 0
      %p117 = por %p115, %p116
      %s119 = sadd.s32 %s118, 1
      %p122 = scmp.eq.s32.totalorder %s32, 1
      %p123 = scmp.ne.s32.totalorder %s118, %s120
      %p124 = scmp.eq.s32.totalorder %s32, 0
      %p125 = por %p123, %p124
      %p126 = scmp.ne.s32.totalorder %s118, %s120
      %p127 = scmp.eq.s32.totalorder %s37, 1
      %p128 = por %p126, %p127
      %p129 = scmp.ne.s32.totalorder %s120, %s121
      %p130 = scmp.eq.s32.totalorder %s37, 0
      %p131 = por %p129, %p130
      %p132 = scmp.ne.s32.totalorder %s120, %s121
      %p133 = scmp.eq.s32.totalorder %s38, 1
      %p134 = por %p132, %p133
      %p136 = scmp.ne.s32.totalorder %s121, %s135
      %p137 = scmp.eq.s32.totalorder %s38, 0
      %p138 = por %p136, %p137
      %s140 = sadd.s32 %s139, 1
      %p143 = scmp.eq.s32.totalorder %s32, 1
      %p144 = scmp.ne.s32.totalorder %s139, %s141
      %p145 = scmp.eq.s32.totalorder %s32, 0
      %p146 = por %p144, %p145
      %p147 = scmp.ne.s32.totalorder %s139, %s141
      %p148 = scmp.eq.s32.totalorder %s37, 1
      %p149 = por %p147, %p148
      %p150 = scmp.ne.s32.totalorder %s141, %s142
      %p151 = scmp.eq.s32.totalorder %s37, 0
      %p152 = por %p150, %p151
      %p153 = scmp.ne.s32.totalorder %s141, %s142
      %p154 = scmp.eq.s32.totalorder %s38, 1
      %p155 = por %p153, %p154
      %p157 = scmp.ne.s32.totalorder %s142, %s156
      %p158 = scmp.eq.s32.totalorder %s38, 0
      %p159 = por %p157, %p158
      %s161 = sadd.s32 %s160, 1
      %p164 = scmp.eq.s32.totalorder %s32, 1
      %p165 = scmp.ne.s32.totalorder %s160, %s162
      %p166 = scmp.eq.s32.totalorder %s32, 0
      %p167 = por %p165, %p166
      %p168 = scmp.ne.s32.totalorder %s160, %s162
      %p169 = scmp.eq.s32.totalorder %s37, 1
      %p170 = por %p168, %p169
      %p171 = scmp.ne.s32.totalorder %s162, %s163
      %p172 = scmp.eq.s32.totalorder %s37, 0
      %p173 = por %p171, %p172
      %p174 = scmp.ne.s32.totalorder %s162, %s163
      %p175 = scmp.eq.s32.totalorder %s38, 1
      %p176 = por %p174, %p175
      %p178 = scmp.ne.s32.totalorder %s163, %s177
      %p179 = scmp.eq.s32.totalorder %s38, 0
      %p180 = por %p178, %p179
      %s182 = sadd.s32 %s181, 1
      %p185 = scmp.eq.s32.totalorder %s32, 1
      %p186 = scmp.ne.s32.totalorder %s181, %s183
      %p187 = scmp.eq.s32.totalorder %s32, 0
      %p188 = por %p186, %p187
      %p189 = scmp.ne.s32.totalorder %s181, %s183
      %p190 = scmp.eq.s32.totalorder %s37, 1
      %p191 = por %p189, %p190
      %p192 = scmp.ne.s32.totalorder %s183, %s184
      %p193 = scmp.eq.s32.totalorder %s37, 0
      %p194 = por %p192, %p193
      %p195 = scmp.ne.s32.totalorder %s183, %s184
      %p196 = scmp.eq.s32.totalorder %s38, 1
      %p197 = por %p195, %p196
      %p199 = scmp.ne.s32.totalorder %s184, %s198
      %p200 = scmp.eq.s32.totalorder %s38, 0
      %p201 = por %p199, %p200
      %s203 = sadd.s32 %s202, 1
      %p206 = scmp.eq.s32.totalorder %s32, 1
      %p207 = scmp.ne.s32.totalorder %s202, %s204
      %p208 = scmp.eq.s32.totalorder %s32, 0
      %p209 = por %p207, %p208
      %p210 = scmp.ne.s32.totalorder %s202, %s204
      %p211 = scmp.eq.s32.totalorder %s37, 1
      %p212 = por %p210, %p211
      %p213 = scmp.ne.s32.totalorder %s204, %s205
      %p214 = scmp.eq.s32.totalorder %s37, 0
      %p215 = por %p213, %p214
      %p216 = scmp.ne.s32.totalorder %s204, %s205
      %p217 = scmp.eq.s32.totalorder %s38, 1
      %p218 = por %p216, %p217
      %p220 = scmp.ne.s32.totalorder %s205, %s219
      %p221 = scmp.eq.s32.totalorder %s38, 0
      %p222 = por %p220, %p221
      %s224 = sadd.s32 %s223, 1
      %p227 = scmp.eq.s32.totalorder %s32, 1
      %p228 = scmp.ne.s32.totalorder %s223, %s225
      %p229 = scmp.eq.s32.totalorder %s32, 0
      %p230 = por %p228, %p229
      %p231 = scmp.ne.s32.totalorder %s223, %s225
      %p232 = scmp.eq.s32.totalorder %s37, 1
      %p233 = por %p231, %p232
      %p234 = scmp.ne.s32.totalorder %s225, %s226
      %p235 = scmp.eq.s32.totalorder %s37, 0
      %p236 = por %p234, %p235
      %p237 = scmp.ne.s32.totalorder %s225, %s226
      %p238 = scmp.eq.s32.totalorder %s38, 1
      %p239 = por %p237, %p238
      %p241 = scmp.ne.s32.totalorder %s226, %s240
      %p242 = scmp.eq.s32.totalorder %s38, 0
      %p243 = por %p241, %p242
      %s245 = sadd.s32 %s244, 1
      %p248 = scmp.eq.s32.totalorder %s32, 1
      %p249 = scmp.ne.s32.totalorder %s244, %s246
      %p250 = scmp.eq.s32.totalorder %s32, 0
      %p251 = por %p249, %p250
      %p252 = scmp.ne.s32.totalorder %s244, %s246
      %p253 = scmp.eq.s32.totalorder %s37, 1
      %p254 = por %p252, %p253
      %p255 = scmp.ne.s32.totalorder %s246, %s247
      %p256 = scmp.eq.s32.totalorder %s37, 0
      %p257 = por %p255, %p256
      %p258 = scmp.ne.s32.totalorder %s246, %s247
      %p259 = scmp.eq.s32.totalorder %s38, 1
      %p260 = por %p258, %p259
      %p262 = scmp.ne.s32.totalorder %s247, %s261
      %p263 = scmp.eq.s32.totalorder %s38, 0
      %p264 = por %p262, %p263
      %s266 = sadd.s32 %s265, 1
      %p269 = scmp.eq.s32.totalorder %s32, 1
      %p270 = scmp.ne.s32.totalorder %s265, %s267
      %p271 = scmp.eq.s32.totalorder %s32, 0
      %p272 = por %p270, %p271
      %p273 = scmp.ne.s32.totalorder %s265, %s267
      %p274 = scmp.eq.s32.totalorder %s37, 1
      %p275 = por %p273, %p274
      %p276 = scmp.ne.s32.totalorder %s267, %s268
      %p277 = scmp.eq.s32.totalorder %s37, 0
      %p278 = por %p276, %p277
      %p279 = scmp.ne.s32.totalorder %s267, %s268
      %p280 = scmp.eq.s32.totalorder %s38, 1
      %p281 = por %p279, %p280
      %p283 = scmp.ne.s32.totalorder %s268, %s282
      %p284 = scmp.eq.s32.totalorder %s38, 0
      %p285 = por %p283, %p284
      %s287 = sadd.s32 %s286, 1
      %p290 = scmp.eq.s32.totalorder %s32, 1
      %p291 = scmp.ne.s32.totalorder %s286, %s288
      %p292 = scmp.eq.s32.totalorder %s32, 0
      %p293 = por %p291, %p292
      %p294 = scmp.ne.s32.totalorder %s286, %s288
      %p295 = scmp.eq.s32.totalorder %s37, 1
      %p296 = por %p294, %p295
      %p297 = scmp.ne.s32.totalorder %s288, %s289
      %p298 = scmp.eq.s32.totalorder %s37, 0
      %p299 = por %p297, %p298
      %p300 = scmp.ne.s32.totalorder %s288, %s289
      %p301 = scmp.eq.s32.totalorder %s38, 1
      %p302 = por %p300, %p301
      %p304 = scmp.ne.s32.totalorder %s289, %s303
      %p305 = scmp.eq.s32.totalorder %s38, 0
      %p306 = por %p304, %p305
      %s308 = sadd.s32 %s307, 1
      %p311 = scmp.eq.s32.totalorder %s32, 1
      %p312 = scmp.ne.s32.totalorder %s307, %s309
      %p313 = scmp.eq.s32.totalorder %s32, 0
      %p314 = por %p312, %p313
      %p315 = scmp.ne.s32.totalorder %s307, %s309
      %p316 = scmp.eq.s32.totalorder %s37, 1
      %p317 = por %p315, %p316
      %p318 = scmp.ne.s32.totalorder %s309, %s310
      %p319 = scmp.eq.s32.totalorder %s37, 0
      %p320 = por %p318, %p319
      %p321 = scmp.ne.s32.totalorder %s309, %s310
      %p322 = scmp.eq.s32.totalorder %s38, 1
      %p323 = por %p321, %p322
      %p325 = scmp.ne.s32.totalorder %s310, %s324
      %p326 = scmp.eq.s32.totalorder %s38, 0
      %p327 = por %p325, %p326
      %s329 = sadd.s32 %s328, 1
      %p332 = scmp.eq.s32.totalorder %s32, 1
      %p333 = scmp.ne.s32.totalorder %s328, %s330
      %p334 = scmp.eq.s32.totalorder %s32, 0
      %p335 = por %p333, %p334
      %p336 = scmp.ne.s32.totalorder %s328, %s330
      %p337 = scmp.eq.s32.totalorder %s37, 1
      %p338 = por %p336, %p337
      %p339 = scmp.ne.s32.totalorder %s330, %s331
      %p340 = scmp.eq.s32.totalorder %s37, 0
      %p341 = por %p339, %p340
      %p342 = scmp.ne.s32.totalorder %s330, %s331
      %p343 = scmp.eq.s32.totalorder %s38, 1
      %p344 = por %p342, %p343
      %p346 = scmp.ne.s32.totalorder %s331, %s345
      %p347 = scmp.eq.s32.totalorder %s38, 0
      %p348 = por %p346, %p347
      %s350 = sadd.s32 %s349, 1
      %p353 = scmp.eq.s32.totalorder %s32, 1
      %p354 = scmp.ne.s32.totalorder %s349, %s351
      %p355 = scmp.eq.s32.totalorder %s32, 0
      %p356 = por %p354, %p355
      %p357 = scmp.ne.s32.totalorder %s349, %s351
      %p358 = scmp.eq.s32.totalorder %s37, 1
      %p359 = por %p357, %p358
      %p360 = scmp.ne.s32.totalorder %s351, %s352
      %p361 = scmp.eq.s32.totalorder %s37, 0
      %p362 = por %p360, %p361
      %p363 = scmp.ne.s32.totalorder %s351, %s352
      %p364 = scmp.eq.s32.totalorder %s38, 1
      %p365 = por %p363, %p364
      %p367 = scmp.ne.s32.totalorder %s352, %s366
      %p368 = scmp.eq.s32.totalorder %s38, 0
      %p369 = por %p367, %p368
      %s371 = sadd.s32 %s370, 1
      %p374 = scmp.eq.s32.totalorder %s32, 1
      %p375 = scmp.ne.s32.totalorder %s370, %s372
      %p376 = scmp.eq.s32.totalorder %s32, 0
      %p377 = por %p375, %p376
      %p378 = scmp.ne.s32.totalorder %s370, %s372
      %p379 = scmp.eq.s32.totalorder %s37, 1
      %p380 = por %p378, %p379
      %p381 = scmp.ne.s32.totalorder %s372, %s373
      %p382 = scmp.eq.s32.totalorder %s37, 0
      %p383 = por %p381, %p382
      %p384 = scmp.ne.s32.totalorder %s372, %s373
      %p385 = scmp.eq.s32.totalorder %s38, 1
      %p386 = por %p384, %p385
      %p388 = scmp.ne.s32.totalorder %s373, %s387
      %p389 = scmp.eq.s32.totalorder %s38, 0
      %p390 = por %p388, %p389
      %s392 = sadd.s32 %s391, 1
      %p395 = scmp.eq.s32.totalorder %s32, 1
      %p396 = scmp.ne.s32.totalorder %s391, %s393
      %p397 = scmp.eq.s32.totalorder %s32, 0
      %p398 = por %p396, %p397
      %p399 = scmp.ne.s32.totalorder %s391, %s393
      %p400 = scmp.eq.s32.totalorder %s37, 1
      %p401 = por %p399, %p400
      %p402 = scmp.ne.s32.totalorder %s393, %s394
      %p403 = scmp.eq.s32.totalorder %s37, 0
      %p404 = por %p402, %p403
      %p405 = scmp.ne.s32.totalorder %s393, %s394
      %p406 = scmp.eq.s32.totalorder %s38, 1
      %p407 = por %p405, %p406
      %p409 = scmp.ne.s32.totalorder %s394, %s408
      %p410 = scmp.eq.s32.totalorder %s38, 0
      %p411 = por %p409, %p410
      %s413 = sadd.s32 %s412, 1
      %p416 = scmp.eq.s32.totalorder %s32, 1
      %p417 = scmp.ne.s32.totalorder %s412, %s414
      %p418 = scmp.eq.s32.totalorder %s32, 0
      %p419 = por %p417, %p418
      %p420 = scmp.ne.s32.totalorder %s412, %s414
      %p421 = scmp.eq.s32.totalorder %s37, 1
      %p422 = por %p420, %p421
      %p423 = scmp.ne.s32.totalorder %s414, %s415
      %p424 = scmp.eq.s32.totalorder %s37, 0
      %p425 = por %p423, %p424
      %p426 = scmp.ne.s32.totalorder %s414, %s415
      %p427 = scmp.eq.s32.totalorder %s38, 1
      %p428 = por %p426, %p427
      %p430 = scmp.ne.s32.totalorder %s415, %s429
      %p431 = scmp.eq.s32.totalorder %s38, 0
      %p432 = por %p430, %p431
      %s434 = sadd.s32 %s433, 1
      %p437 = scmp.eq.s32.totalorder %s32, 1
      %p438 = scmp.ne.s32.totalorder %s433, %s435
      %p439 = scmp.eq.s32.totalorder %s32, 0
      %p440 = por %p438, %p439
      %p441 = scmp.ne.s32.totalorder %s433, %s435
      %p442 = scmp.eq.s32.totalorder %s37, 1
      %p443 = por %p441, %p442
      %p444 = scmp.ne.s32.totalorder %s435, %s436
      %p445 = scmp.eq.s32.totalorder %s37, 0
      %p446 = por %p444, %p445
      %p447 = scmp.ne.s32.totalorder %s435, %s436
      %p448 = scmp.eq.s32.totalorder %s38, 1
      %p449 = por %p447, %p448
      %p451 = scmp.ne.s32.totalorder %s436, %s450
      %p452 = scmp.eq.s32.totalorder %s38, 0
      %p453 = por %p451, %p452
      %s455 = sadd.s32 %s454, 1
      %p458 = scmp.eq.s32.totalorder %s32, 1
      %p459 = scmp.ne.s32.totalorder %s454, %s456
      %p460 = scmp.eq.s32.totalorder %s32, 0
      %p461 = por %p459, %p460
      %p462 = scmp.ne.s32.totalorder %s454, %s456
      %p463 = scmp.eq.s32.totalorder %s37, 1
      %p464 = por %p462, %p463
      %p465 = scmp.ne.s32.totalorder %s456, %s457
      %p466 = scmp.eq.s32.totalorder %s37, 0
      %p467 = por %p465, %p466
      %p468 = scmp.ne.s32.totalorder %s456, %s457
      %p469 = scmp.eq.s32.totalorder %s38, 1
      %p470 = por %p468, %p469
      %p472 = scmp.ne.s32.totalorder %s457, %s471
      %p473 = scmp.eq.s32.totalorder %s38, 0
      %p474 = por %p472, %p473
      %s476 = sadd.s32 %s475, 1
      %p479 = scmp.eq.s32.totalorder %s32, 1
      %p480 = scmp.ne.s32.totalorder %s475, %s477
      %p481 = scmp.eq.s32.totalorder %s32, 0
      %p482 = por %p480, %p481
      %p483 = scmp.ne.s32.totalorder %s475, %s477
      %p484 = scmp.eq.s32.totalorder %s37, 1
      %p485 = por %p483, %p484
      %p486 = scmp.ne.s32.totalorder %s477, %s478
      %p487 = scmp.eq.s32.totalorder %s37, 0
      %p488 = por %p486, %p487
      %p489 = scmp.ne.s32.totalorder %s477, %s478
      %p490 = scmp.eq.s32.totalorder %s38, 1
      %p491 = por %p489, %p490
      %p493 = scmp.ne.s32.totalorder %s478, %s492
      %p494 = scmp.eq.s32.totalorder %s38, 0
      %p495 = por %p493, %p494
      %s497 = sadd.s32 %s496, 1
      %p500 = scmp.eq.s32.totalorder %s32, 1
      %p501 = scmp.ne.s32.totalorder %s496, %s498
      %p502 = scmp.eq.s32.totalorder %s32, 0
      %p503 = por %p501, %p502
      %p504 = scmp.ne.s32.totalorder %s496, %s498
      %p505 = scmp.eq.s32.totalorder %s37, 1
      %p506 = por %p504, %p505
      %p507 = scmp.ne.s32.totalorder %s498, %s499
      %p508 = scmp.eq.s32.totalorder %s37, 0
      %p509 = por %p507, %p508
      %p510 = scmp.ne.s32.totalorder %s498, %s499
      %p511 = scmp.eq.s32.totalorder %s38, 1
      %p512 = por %p510, %p511
      %p514 = scmp.ne.s32.totalorder %s499, %s513
      %p515 = scmp.eq.s32.totalorder %s38, 0
      %p516 = por %p514, %p515
      %s517 = ssub.s32 %s32, %s39
      %p518 = scmp.eq.s32.totalorder %s517, 0
      %s520 = sadd.s32 %s519, 1
      %s521 = scalar_select %p518, %s519, %s520
      %p524 = pneg %p518
      %p525 = scmp.eq.s32.totalorder %s32, 1
      %p526 = por %p524, %p525
      %p527 = scmp.ne.s32.totalorder %s519, %s522
      %p528 = scmp.eq.s32.totalorder %s32, 0
      %p529 = por %p527, %p528
      %p530 = scmp.ne.s32.totalorder %s519, %s522
      %p531 = scmp.eq.s32.totalorder %s37, 1
      %p532 = por %p530, %p531
      %p533 = scmp.ne.s32.totalorder %s522, %s523
      %p534 = scmp.eq.s32.totalorder %s37, 0
      %p535 = por %p533, %p534
      %p536 = scmp.ne.s32.totalorder %s522, %s523
      %p537 = scmp.eq.s32.totalorder %s38, 1
      %p538 = por %p536, %p537
      %p540 = scmp.ne.s32.totalorder %s523, %s539
      %p541 = scmp.eq.s32.totalorder %s38, 0
      %p542 = por %p540, %p541
      %p543 = scmp.le.s32.totalorder 1, %s32
      %p544 = scmp.lt.s32.totalorder %s32, 3
      %p545 = pnand %p543, %p544
      %p546 = pneg %p545
      // Predicated region
      $region9: #{tpu_custom_call.1} parent=5 // pred_check
        _
      $region10: #{tpu_custom_call.1} parent=5 // pred_check_branch
        %548 = sbr.rel (%p545) target = $region12
      $region11: #{tpu_custom_call.1} parent=5 // pred_region
        %s549 = ssub.s32 %s32, 1
        // Predicated region
        $region13: #{tpu_custom_call.1} parent=11 // pred_check
          %p550 = pneg %p131
        $region14: #{tpu_custom_call.1} parent=11 // pred_check_branch
          %552 = sbr.rel (%p550) target = $region16
        $region15: #{tpu_custom_call.1} parent=11 // pred_region
          _
        $region16: #{tpu_custom_call.1} parent=11 // pred_fallthru
          _
        // Predicated region
        $region17: #{tpu_custom_call.1} parent=11 // pred_check
          %p553 = pneg %p152
        $region18: #{tpu_custom_call.1} parent=11 // pred_check_branch
          %555 = sbr.rel (%p553) target = $region20
        $region19: #{tpu_custom_call.1} parent=11 // pred_region
          _
        $region20: #{tpu_custom_call.1} parent=11 // pred_fallthru
          _
        // Predicated region
        $region21: #{tpu_custom_call.1} parent=11 // pred_check
          %p556 = pneg %p173
        $region22: #{tpu_custom_call.1} parent=11 // pred_check_branch
          %558 = sbr.rel (%p556) target = $region24
        $region23: #{tpu_custom_call.1} parent=11 // pred_region
          _
        $region24: #{tpu_custom_call.1} parent=11 // pred_fallthru
          _
        // Predicated region
        $region25: #{tpu_custom_call.1} parent=11 // pred_check
          %p559 = pneg %p194
        $region26: #{tpu_custom_call.1} parent=11 // pred_check_branch
          %561 = sbr.rel (%p559) target = $region28
        $region27: #{tpu_custom_call.1} parent=11 // pred_region
          _
        $region28: #{tpu_custom_call.1} parent=11 // pred_fallthru
          _
        // Predicated region
        $region29: #{tpu_custom_call.1} parent=11 // pred_check
          %p562 = pneg %p215
        $region30: #{tpu_custom_call.1} parent=11 // pred_check_branch
          %564 = sbr.rel (%p562) target = $region32
        $region31: #{tpu_custom_call.1} parent=11 // pred_region
          _
        $region32: #{tpu_custom_call.1} parent=11 // pred_fallthru
          _
        // Predicated region
        $region33: #{tpu_custom_call.1} parent=11 // pred_check
          %p565 = pneg %p236
        $region34: #{tpu_custom_call.1} parent=11 // pred_check_branch
          %567 = sbr.rel (%p565) target = $region36
        $region35: #{tpu_custom_call.1} parent=11 // pred_region
          _
        $region36: #{tpu_custom_call.1} parent=11 // pred_fallthru
          _
        // Predicated region
        $region37: #{tpu_custom_call.1} parent=11 // pred_check
          %p568 = pneg %p257
        $region38: #{tpu_custom_call.1} parent=11 // pred_check_branch
          %570 = sbr.rel (%p568) target = $region40
        $region39: #{tpu_custom_call.1} parent=11 // pred_region
          _
        $region40: #{tpu_custom_call.1} parent=11 // pred_fallthru
          _
        // Predicated region
        $region41: #{tpu_custom_call.1} parent=11 // pred_check
          %p571 = pneg %p278
        $region42: #{tpu_custom_call.1} parent=11 // pred_check_branch
          %573 = sbr.rel (%p571) target = $region44
        $region43: #{tpu_custom_call.1} parent=11 // pred_region
          _
        $region44: #{tpu_custom_call.1} parent=11 // pred_fallthru
          _
        // Predicated region
        $region45: #{tpu_custom_call.1} parent=11 // pred_check
          %p574 = pneg %p299
        $region46: #{tpu_custom_call.1} parent=11 // pred_check_branch
          %576 = sbr.rel (%p574) target = $region48
        $region47: #{tpu_custom_call.1} parent=11 // pred_region
          _
        $region48: #{tpu_custom_call.1} parent=11 // pred_fallthru
          _
        // Predicated region
        $region49: #{tpu_custom_call.1} parent=11 // pred_check
          %p577 = pneg %p320
        $region50: #{tpu_custom_call.1} parent=11 // pred_check_branch
          %579 = sbr.rel (%p577) target = $region52
        $region51: #{tpu_custom_call.1} parent=11 // pred_region
          _
        $region52: #{tpu_custom_call.1} parent=11 // pred_fallthru
          _
        // Predicated region
        $region53: #{tpu_custom_call.1} parent=11 // pred_check
          %p580 = pneg %p341
        $region54: #{tpu_custom_call.1} parent=11 // pred_check_branch
          %582 = sbr.rel (%p580) target = $region56
        $region55: #{tpu_custom_call.1} parent=11 // pred_region
          %s584 = ssub.s32 16, 16
          %585 = vsyncadd [#allocation4], %s584
          %s587 = sshll.u32 %s13, 4
          %s588 = int_to_ptr.vmem [resolvable:$true] %s587
          %590 = dma.vmem_to_smem %s588, 16, [#allocation2], [#allocation4]
        $region56: #{tpu_custom_call.1} parent=11 // pred_fallthru
          _
        // Predicated region
        $region57: #{tpu_custom_call.1} parent=11 // pred_check
          %p591 = pneg %p362
        $region58: #{tpu_custom_call.1} parent=11 // pred_check_branch
          %593 = sbr.rel (%p591) target = $region60
        $region59: #{tpu_custom_call.1} parent=11 // pred_region
          _
        $region60: #{tpu_custom_call.1} parent=11 // pred_fallthru
          _
        // Predicated region
        $region61: #{tpu_custom_call.1} parent=11 // pred_check
          %p594 = pneg %p383
        $region62: #{tpu_custom_call.1} parent=11 // pred_check_branch
          %596 = sbr.rel (%p594) target = $region64
        $region63: #{tpu_custom_call.1} parent=11 // pred_region
          _
        $region64: #{tpu_custom_call.1} parent=11 // pred_fallthru
          _
        // Predicated region
        $region65: #{tpu_custom_call.1} parent=11 // pred_check
          %p597 = pneg %p404
        $region66: #{tpu_custom_call.1} parent=11 // pred_check_branch
          %599 = sbr.rel (%p597) target = $region68
        $region67: #{tpu_custom_call.1} parent=11 // pred_region
          _
        $region68: #{tpu_custom_call.1} parent=11 // pred_fallthru
          _
        // Predicated region
        $region69: #{tpu_custom_call.1} parent=11 // pred_check
          %p600 = pneg %p425
        $region70: #{tpu_custom_call.1} parent=11 // pred_check_branch
          %602 = sbr.rel (%p600) target = $region72
        $region71: #{tpu_custom_call.1} parent=11 // pred_region
          _
        $region72: #{tpu_custom_call.1} parent=11 // pred_fallthru
          _
        // Predicated region
        $region73: #{tpu_custom_call.1} parent=11 // pred_check
          %p603 = pneg %p446
        $region74: #{tpu_custom_call.1} parent=11 // pred_check_branch
          %605 = sbr.rel (%p603) target = $region76
        $region75: #{tpu_custom_call.1} parent=11 // pred_region
          _
        $region76: #{tpu_custom_call.1} parent=11 // pred_fallthru
          _
        // Predicated region
        $region77: #{tpu_custom_call.1} parent=11 // pred_check
          %p606 = pneg %p467
        $region78: #{tpu_custom_call.1} parent=11 // pred_check_branch
          %608 = sbr.rel (%p606) target = $region80
        $region79: #{tpu_custom_call.1} parent=11 // pred_region
          _
        $region80: #{tpu_custom_call.1} parent=11 // pred_fallthru
          _
        // Predicated region
        $region81: #{tpu_custom_call.1} parent=11 // pred_check
          %p609 = pneg %p488
        $region82: #{tpu_custom_call.1} parent=11 // pred_check_branch
          %611 = sbr.rel (%p609) target = $region84
        $region83: #{tpu_custom_call.1} parent=11 // pred_region
          _
        $region84: #{tpu_custom_call.1} parent=11 // pred_fallthru
          _
        // Predicated region
        $region85: #{tpu_custom_call.1} parent=11 // pred_check
          %p612 = pneg %p509
        $region86: #{tpu_custom_call.1} parent=11 // pred_check_branch
          %614 = sbr.rel (%p612) target = $region88
        $region87: #{tpu_custom_call.1} parent=11 // pred_region
          _
        $region88: #{tpu_custom_call.1} parent=11 // pred_fallthru
          _
      $region12: #{tpu_custom_call.1} parent=5 // pred_fallthru
        _
      %p615 = scmp.lt.s32.totalorder %s32, 2
      // Predicated region
      $region89: #{tpu_custom_call.1} parent=5 // pred_check
        %p616 = pneg %p615
      $region90: #{tpu_custom_call.1} parent=5 // pred_check_branch
        %618 = sbr.rel (%p616) target = $region92
      $region91: #{tpu_custom_call.1} parent=5 // pred_region
        // Predicated region
        $region93: #{tpu_custom_call.1} parent=91 // pred_check
          %p619 = pneg %p52
        $region94: #{tpu_custom_call.1} parent=91 // pred_check_branch
          %621 = sbr.rel (%p619) target = $region96
        $region95: #{tpu_custom_call.1} parent=91 // pred_region
          %p622 = scmp.lt.s32.totalorder %s32, 1
          %s623 = scalar_select %p622, %s32, 1
          %s624 = smul.addr %s623, 2
          %s625 = smul.addr %s624, 8
          %s626 = scalar_lea.vmem %s0, %s625
        $region96: #{tpu_custom_call.1} parent=91 // pred_fallthru
          _
        // Predicated region
        $region97: #{tpu_custom_call.1} parent=91 // pred_check
          %p627 = pneg %p78
        $region98: #{tpu_custom_call.1} parent=91 // pred_check_branch
          %629 = sbr.rel (%p627) target = $region100
        $region99: #{tpu_custom_call.1} parent=91 // pred_region
          %p630 = scmp.lt.s32.totalorder %s32, 1
          %s631 = scalar_select %p630, %s32, 1
          %s632 = smul.addr %s631, 2
          %s633 = smul.addr %s632, 8
          %s634 = scalar_lea.vmem %s1, %s633
        $region100: #{tpu_custom_call.1} parent=91 // pred_fallthru
          _
        // Predicated region
        $region101: #{tpu_custom_call.1} parent=91 // pred_check
          %p635 = pneg %p104
        $region102: #{tpu_custom_call.1} parent=91 // pred_check_branch
          %637 = sbr.rel (%p635) target = $region104
        $region103: #{tpu_custom_call.1} parent=91 // pred_region
          %p638 = scmp.lt.s32.totalorder %s32, 1
          %s639 = scalar_select %p638, %s32, 1
          %s640 = smul.addr %s639, 2
          %s641 = smul.addr %s640, 8
          %s642 = scalar_lea.vmem %s2, %s641
        $region104: #{tpu_custom_call.1} parent=91 // pred_fallthru
          _
      $region92: #{tpu_custom_call.1} parent=5 // pred_fallthru
        _
      %p643 = scmp.le.s32.totalorder 1, %s32
      %p644 = scmp.lt.s32.totalorder %s32, 3
      %p645 = pnand %p643, %p644
      %p646 = pneg %p645
      // Predicated region
      $region105: #{tpu_custom_call.1} parent=5 // pred_check
        _
      $region106: #{tpu_custom_call.1} parent=5 // pred_check_branch
        %648 = sbr.rel (%p645) target = $region108
      $region107: #{tpu_custom_call.1} parent=5 // pred_region
        %s649 = ssub.s32 %s32, 1
        // Predicated region
        $region109: #{tpu_custom_call.1} parent=107 // pred_check
          %p650 = pneg %p341
        $region110: #{tpu_custom_call.1} parent=107 // pred_check_branch
          %652 = sbr.rel (%p650) target = $region112
        $region111: #{tpu_custom_call.1} parent=107 // pred_region
          %653 = dma.done [#allocation4], 16
        $region112: #{tpu_custom_call.1} parent=107 // pred_fallthru
          _
        %654 = sfence
        %p655 = scmp.lt.s32.totalorder %s37, 1
        %s656 = scalar_select %p655, %s37, 1
        %s657 = smul.addr %s656, 2
        %s658 = smul.addr %s657, 8
        %s659 = scalar_lea.vmem %s0, %s658
        %p660 = pneg %p58
        %p661 = pneg %p55
        %p662 = scmp.lt.s32.totalorder %s37, 1
        %s663 = scalar_select %p662, %s37, 1
        %s664 = smul.addr %s663, 2
        %s665 = smul.addr %s664, 8
        %s666 = scalar_lea.vmem %s1, %s665
        %p667 = pneg %p84
        %p668 = pneg %p81
        %p669 = scmp.lt.s32.totalorder %s37, 1
        %s670 = scalar_select %p669, %s37, 1
        %s671 = smul.addr %s670, 2
        %s672 = smul.addr %s671, 8
        %s673 = scalar_lea.vmem %s2, %s672
        %p674 = pneg %p110
        %p675 = pneg %p107
        %p676 = pneg %p131
        %p677 = pneg %p128
        %p678 = pneg %p152
        %p679 = pneg %p149
        %p680 = pneg %p173
        %p681 = pneg %p170
        %p682 = pneg %p194
        %p683 = pneg %p191
        %p684 = pneg %p215
        %p685 = pneg %p212
        %p686 = pneg %p236
        %p687 = pneg %p233
        %p688 = pneg %p257
        %p689 = pneg %p254
        %p690 = pneg %p278
        %p691 = pneg %p275
        %p692 = pneg %p299
        %p693 = pneg %p296
        %p694 = pneg %p320
        %p695 = pneg %p317
        %p696 = pneg %p341
        %p697 = pneg %p338
        %p698 = pneg %p362
        %p699 = pneg %p359
        %p700 = pneg %p383
        %p701 = pneg %p380
        %p702 = pneg %p404
        %p703 = pneg %p401
        %p704 = pneg %p425
        %p705 = pneg %p422
        %p706 = pneg %p446
        %p707 = pneg %p443
        %p708 = pneg %p467
        %p709 = pneg %p464
        %p710 = pneg %p488
        %p711 = pneg %p485
        %p712 = pneg %p509
        %p713 = pneg %p506
        %p714 = pneg %p535
        %p715 = pneg %p532
        %s716 = sand.u32 %s522, 1
        %s717 = scalar_lea.sflag [#allocation3], %s716
        %s718 = sand.u32 %s522, 1
        %s719 = smul.addr %s718, 16
        %s720 = scalar_lea.vmem [#allocation5], %s719
        %p721 = scmp.lt.s32.totalorder %s37, 1
        %s722 = scalar_select %p721, %s37, 1
        %s723 = smul.addr %s722, 2
        %s724 = smul.addr %s723, 8
        %s725 = scalar_lea.vmem %s0, %s724
        %p726 = scmp.lt.s32.totalorder %s37, 1
        %s727 = scalar_select %p726, %s37, 1
        %s728 = smul.addr %s727, 2
        %s729 = smul.addr %s728, 8
        %s730 = scalar_lea.vmem %s1, %s729
        %p731 = scmp.lt.s32.totalorder %s37, 1
        %s732 = scalar_select %p731, %s37, 1
        %s733 = smul.addr %s732, 2
        %s734 = smul.addr %s733, 8
        %s735 = scalar_lea.vmem %s2, %s734
        %v736 = vld [vmem:[%s725] sm:$0xff]
        %v737 = vld [vmem:[%s725 + $0x8] sm:$0xff]
        %v738 = vld [vmem:[%s730] sm:$0xff]
        %v739 = vld [vmem:[%s730 + $0x8] sm:$0xff]
        %v740 = vld [vmem:[%s735] sm:$0xff]
        %v741 = vld [vmem:[%s735 + $0x8] sm:$0xff]
        %v742 = vld [vmem:[%s3] sm:$0xff]
        %v743 = vld [vmem:[%s3 + $0x8] sm:$0xff]
        %v744 = vld [vmem:[%s3 + $0x10] sm:$0xff]
        %v745 = vld [vmem:[%s3 + $0x18] sm:$0xff]
        %vm746 = vcmask 261120
        %v748 = vsel %vm746, %v736, 0
        %v751 = vsel %vm746, %v737, 0
        %v754 = vsel %vm746, %v742, 0
        %v757 = vsel %vm746, %v743, 0
        %v760 = vsel %vm746, %v744, 0
        %v763 = vsel %vm746, %v745, 0
        %765 = vmatprep.subr.mxu0 0.0
        %766 = vmatpush1.xpose.msra.mxu0 %v754
        %767 = vmatprep.subr.mxu0 0.0
        %768 = vmatpush1.xpose.msra.mxu0 %v757
        %769 = vmatprep.subr.mxu0 0.0
        %770 = vmatpush1.xpose.msra.mxu0 %v760
        %771 = vmatprep.subr.mxu0 0.0
        %772 = vmatpush1.xpose.msra.mxu0 %v763
        %773 = vmatprep.subr.mxu0 0.0
        %774 = vmatpush1.xpose.msra.mxu0 0.0
        %775 = vmatprep.subr.mxu0 0.0
        %776 = vmatpush1.xpose.msra.mxu0 0.0
        %777 = vmatprep.subr.mxu0 0.0
        %778 = vmatpush1.xpose.msra.mxu0 0.0
        %779 = vmatprep.subr.mxu0 0.0
        %780 = vmatpush1.xpose.msra.mxu0 0.0
        %781 = vmatprep.subr.mxu0 0.0
        %782 = vmatpush1.xpose.msra.mxu0 0.0
        %783 = vmatprep.subr.mxu0 0.0
        %784 = vmatpush1.xpose.msra.mxu0 0.0
        %785 = vmatprep.subr.mxu0 0.0
        %786 = vmatpush1.xpose.msra.mxu0 0.0
        %787 = vmatprep.subr.mxu0 0.0
        %788 = vmatpush1.xpose.msra.mxu0 0.0
        %789 = vmatprep.subr.mxu0 0.0
        %790 = vmatpush1.xpose.msra.mxu0 0.0
        %791 = vmatprep.subr.mxu0 0.0
        %792 = vmatpush1.xpose.msra.mxu0 0.0
        %793 = vmatprep.subr.mxu0 0.0
        %794 = vmatpush1.xpose.msra.mxu0 0.0
        %795 = vmatprep.subr.mxu0 0.0
        %796 = vmatpush1.xpose.msra.mxu0 0.0
        %797 = vmatprep.subr.mxu0 0.0
        %798 = vmatpush1.xpose.msra.mxu0 0.0
        %799 = vmatprep.subr.mxu0 0.0
        %800 = vmatpush1.xpose.msra.mxu0 0.0
        %801 = vmatprep.subr.mxu0 0.0
        %802 = vmatpush1.xpose.msra.mxu0 0.0
        %803 = vmatprep.subr.mxu0 0.0
        %804 = vmatpush1.xpose.msra.mxu0 0.0
        %805 = vmatprep.subr.mxu0 0.0
        %806 = vmatpush1.xpose.msra.mxu0 0.0
        %807 = vmatprep.subr.mxu0 0.0
        %808 = vmatpush1.xpose.msra.mxu0 0.0
        %809 = vmatprep.subr.mxu0 0.0
        %810 = vmatpush1.xpose.msra.mxu0 0.0
        %811 = vmatprep.subr.mxu0 0.0
        %812 = vmatpush1.xpose.msra.mxu0 0.0
        %813 = vmatprep.subr.mxu0 0.0
        %814 = vmatpush1.xpose.msra.mxu0 0.0
        %815 = vmatprep.subr.mxu0 0.0
        %816 = vmatpush1.xpose.msra.mxu0 0.0
        %817 = vmatprep.subr.mxu0 0.0
        %818 = vmatpush1.xpose.msra.mxu0 0.0
        %819 = vmatprep.subr.mxu0 0.0
        %820 = vmatpush1.xpose.msra.mxu0 0.0
        %821 = vmatprep.subr.mxu0 0.0
        %822 = vmatpush1.xpose.msra.mxu0 0.0
        %823 = vmatprep.subr.mxu0 0.0
        %824 = vmatpush1.xpose.msra.mxu0 0.0
        %825 = vmatprep.subr.mxu0 0.0
        %826 = vmatpush1.xpose.msra.mxu0 0.0
        %827 = vmatprep.subr.mxu0 0.0
        %828 = vmatpush1.xpose.msra.mxu0 0.0
        %829 = vmatprep.mubr.f32.mxu0 0.0
        %830 = vmatmul.mubr.f32.gmra.mrb[0].mxu0 %v748
        %v831 = vpop.f32.mrb[0].mxu0
        %v832 = vadd.f32 0.0, %v831
        %v833 = vpop.f32.mrb[0].mxu0
        %834 = vmatprep.mubr.f32.mxu0 0.0
        %835 = vmatmul.mubr.f32.gmra.mrb[0].mxu0 %v751
        %v836 = vpop.f32.mrb[0].mxu0
        %v837 = vadd.f32 0.0, %v836
        %v838 = vpop.f32.mrb[0].mxu0
        %839 = vdwg.mxu0
        %v840 = vld [vmem:[%s4] sm:$0xff]
        %v841 = vld [vmem:[%s4 + $0x8] sm:$0xff]
        %v842 = vld [vmem:[%s4 + $0x10] sm:$0xff]
        %v843 = vld [vmem:[%s4 + $0x18] sm:$0xff]
        %v845 = vsel %vm746, %v738, 0
        %v848 = vsel %vm746, %v739, 0
        %v851 = vsel %vm746, %v840, 0
        %v854 = vsel %vm746, %v841, 0
        %v857 = vsel %vm746, %v842, 0
        %v860 = vsel %vm746, %v843, 0
        %862 = vmatprep.subr.mxu0 0.0
        %863 = vmatpush1.xpose.msra.mxu0 %v851
        %864 = vmatprep.subr.mxu0 0.0
        %865 = vmatpush1.xpose.msra.mxu0 %v854
        %866 = vmatprep.subr.mxu0 0.0
        %867 = vmatpush1.xpose.msra.mxu0 %v857
        %868 = vmatprep.subr.mxu0 0.0
        %869 = vmatpush1.xpose.msra.mxu0 %v860
        %870 = vmatprep.subr.mxu0 0.0
        %871 = vmatpush1.xpose.msra.mxu0 0.0
        %872 = vmatprep.subr.mxu0 0.0
        %873 = vmatpush1.xpose.msra.mxu0 0.0
        %874 = vmatprep.subr.mxu0 0.0
        %875 = vmatpush1.xpose.msra.mxu0 0.0
        %876 = vmatprep.subr.mxu0 0.0
        %877 = vmatpush1.xpose.msra.mxu0 0.0
        %878 = vmatprep.subr.mxu0 0.0
        %879 = vmatpush1.xpose.msra.mxu0 0.0
        %880 = vmatprep.subr.mxu0 0.0
        %881 = vmatpush1.xpose.msra.mxu0 0.0
        %882 = vmatprep.subr.mxu0 0.0
        %883 = vmatpush1.xpose.msra.mxu0 0.0
        %884 = vmatprep.subr.mxu0 0.0
        %885 = vmatpush1.xpose.msra.mxu0 0.0
        %886 = vmatprep.subr.mxu0 0.0
        %887 = vmatpush1.xpose.msra.mxu0 0.0
        %888 = vmatprep.subr.mxu0 0.0
        %889 = vmatpush1.xpose.msra.mxu0 0.0
        %890 = vmatprep.subr.mxu0 0.0
        %891 = vmatpush1.xpose.msra.mxu0 0.0
        %892 = vmatprep.subr.mxu0 0.0
        %893 = vmatpush1.xpose.msra.mxu0 0.0
        %894 = vmatprep.subr.mxu0 0.0
        %895 = vmatpush1.xpose.msra.mxu0 0.0
        %896 = vmatprep.subr.mxu0 0.0
        %897 = vmatpush1.xpose.msra.mxu0 0.0
        %898 = vmatprep.subr.mxu0 0.0
        %899 = vmatpush1.xpose.msra.mxu0 0.0
        %900 = vmatprep.subr.mxu0 0.0
        %901 = vmatpush1.xpose.msra.mxu0 0.0
        %902 = vmatprep.subr.mxu0 0.0
        %903 = vmatpush1.xpose.msra.mxu0 0.0
        %904 = vmatprep.subr.mxu0 0.0
        %905 = vmatpush1.xpose.msra.mxu0 0.0
        %906 = vmatprep.subr.mxu0 0.0
        %907 = vmatpush1.xpose.msra.mxu0 0.0
        %908 = vmatprep.subr.mxu0 0.0
        %909 = vmatpush1.xpose.msra.mxu0 0.0
        %910 = vmatprep.subr.mxu0 0.0
        %911 = vmatpush1.xpose.msra.mxu0 0.0
        %912 = vmatprep.subr.mxu0 0.0
        %913 = vmatpush1.xpose.msra.mxu0 0.0
        %914 = vmatprep.subr.mxu0 0.0
        %915 = vmatpush1.xpose.msra.mxu0 0.0
        %916 = vmatprep.subr.mxu0 0.0
        %917 = vmatpush1.xpose.msra.mxu0 0.0
        %918 = vmatprep.subr.mxu0 0.0
        %919 = vmatpush1.xpose.msra.mxu0 0.0
        %920 = vmatprep.subr.mxu0 0.0
        %921 = vmatpush1.xpose.msra.mxu0 0.0
        %922 = vmatprep.subr.mxu0 0.0
        %923 = vmatpush1.xpose.msra.mxu0 0.0
        %924 = vmatprep.subr.mxu0 0.0
        %925 = vmatpush1.xpose.msra.mxu0 0.0
        %926 = vmatprep.mubr.f32.mxu0 0.0
        %927 = vmatmul.mubr.f32.gmra.mrb[0].mxu0 %v845
        %v928 = vpop.f32.mrb[0].mxu0
        %v929 = vadd.f32 0.0, %v928
        %v930 = vpop.f32.mrb[0].mxu0
        %931 = vmatprep.mubr.f32.mxu0 0.0
        %932 = vmatmul.mubr.f32.gmra.mrb[0].mxu0 %v848
        %v933 = vpop.f32.mrb[0].mxu0
        %v934 = vadd.f32 0.0, %v933
        %v935 = vpop.f32.mrb[0].mxu0
        %936 = vdwg.mxu0
        %v937 = vld [vmem:[%s5] sm:$0xff]
        %v938 = vld [vmem:[%s5 + $0x8] sm:$0xff]
        %v939 = vld [vmem:[%s5 + $0x10] sm:$0xff]
        %v940 = vld [vmem:[%s5 + $0x18] sm:$0xff]
        %v942 = vsel %vm746, %v937, 0
        %v945 = vsel %vm746, %v938, 0
        %v948 = vsel %vm746, %v939, 0
        %v951 = vsel %vm746, %v940, 0
        %953 = vmatprep.subr.mxu0 0.0
        %954 = vmatpush1.xpose.msra.mxu0 %v942
        %955 = vmatprep.subr.mxu0 0.0
        %956 = vmatpush1.xpose.msra.mxu0 %v945
        %957 = vmatprep.subr.mxu0 0.0
        %958 = vmatpush1.xpose.msra.mxu0 %v948
        %959 = vmatprep.subr.mxu0 0.0
        %960 = vmatpush1.xpose.msra.mxu0 %v951
        %961 = vmatprep.subr.mxu0 0.0
        %962 = vmatpush1.xpose.msra.mxu0 0.0
        %963 = vmatprep.subr.mxu0 0.0
        %964 = vmatpush1.xpose.msra.mxu0 0.0
        %965 = vmatprep.subr.mxu0 0.0
        %966 = vmatpush1.xpose.msra.mxu0 0.0
        %967 = vmatprep.subr.mxu0 0.0
        %968 = vmatpush1.xpose.msra.mxu0 0.0
        %969 = vmatprep.subr.mxu0 0.0
        %970 = vmatpush1.xpose.msra.mxu0 0.0
        %971 = vmatprep.subr.mxu0 0.0
        %972 = vmatpush1.xpose.msra.mxu0 0.0
        %973 = vmatprep.subr.mxu0 0.0
        %974 = vmatpush1.xpose.msra.mxu0 0.0
        %975 = vmatprep.subr.mxu0 0.0
        %976 = vmatpush1.xpose.msra.mxu0 0.0
        %977 = vmatprep.subr.mxu0 0.0
        %978 = vmatpush1.xpose.msra.mxu0 0.0
        %979 = vmatprep.subr.mxu0 0.0
        %980 = vmatpush1.xpose.msra.mxu0 0.0
        %981 = vmatprep.subr.mxu0 0.0
        %982 = vmatpush1.xpose.msra.mxu0 0.0
        %983 = vmatprep.subr.mxu0 0.0
        %984 = vmatpush1.xpose.msra.mxu0 0.0
        %985 = vmatprep.subr.mxu0 0.0
        %986 = vmatpush1.xpose.msra.mxu0 0.0
        %987 = vmatprep.subr.mxu0 0.0
        %988 = vmatpush1.xpose.msra.mxu0 0.0
        %989 = vmatprep.subr.mxu0 0.0
        %990 = vmatpush1.xpose.msra.mxu0 0.0
        %991 = vmatprep.subr.mxu0 0.0
        %992 = vmatpush1.xpose.msra.mxu0 0.0
        %993 = vmatprep.subr.mxu0 0.0
        %994 = vmatpush1.xpose.msra.mxu0 0.0
        %995 = vmatprep.subr.mxu0 0.0
        %996 = vmatpush1.xpose.msra.mxu0 0.0
        %997 = vmatprep.subr.mxu0 0.0
        %998 = vmatpush1.xpose.msra.mxu0 0.0
        %999 = vmatprep.subr.mxu0 0.0
        %1000 = vmatpush1.xpose.msra.mxu0 0.0
        %1001 = vmatprep.subr.mxu0 0.0
        %1002 = vmatpush1.xpose.msra.mxu0 0.0
        %1003 = vmatprep.subr.mxu0 0.0
        %1004 = vmatpush1.xpose.msra.mxu0 0.0
        %1005 = vmatprep.subr.mxu0 0.0
        %1006 = vmatpush1.xpose.msra.mxu0 0.0
        %1007 = vmatprep.subr.mxu0 0.0
        %1008 = vmatpush1.xpose.msra.mxu0 0.0
        %1009 = vmatprep.subr.mxu0 0.0
        %1010 = vmatpush1.xpose.msra.mxu0 0.0
        %1011 = vmatprep.subr.mxu0 0.0
        %1012 = vmatpush1.xpose.msra.mxu0 0.0
        %1013 = vmatprep.subr.mxu0 0.0
        %1014 = vmatpush1.xpose.msra.mxu0 0.0
        %1015 = vmatprep.subr.mxu0 0.0
        %1016 = vmatpush1.xpose.msra.mxu0 0.0
        %1017 = vmatprep.mubr.f32.mxu0 0.0
        %1018 = vmatmul.mubr.f32.gmra.mrb[0].mxu0 %v845
        %v1019 = vpop.f32.mrb[0].mxu0
        %v1020 = vadd.f32 0.0, %v1019
        %v1021 = vpop.f32.mrb[0].mxu0
        %1022 = vmatprep.mubr.f32.mxu0 0.0
        %1023 = vmatmul.mubr.f32.gmra.mrb[0].mxu0 %v848
        %v1024 = vpop.f32.mrb[0].mxu0
        %v1025 = vadd.f32 0.0, %v1024
        %v1026 = vpop.f32.mrb[0].mxu0
        %1027 = vdwg.mxu0
        %v1028 = vld [vmem:[%s9] sm:$0xff]
        %vm1029 = vcmask 64512
        %v1031 = vsel %vm1029, %v740, 0
        %v1034 = vsel %vm1029, %v741, 0
        %1036 = vmatprep.subr.mxu0 0.0
        %1037 = vmatpush1.msra.mxu0 %v1028
        %1038 = vmatprep.subr.mxu0 0.0
        %1039 = vmatpush1.msra.mxu0 0.0
        %1040 = vmatprep.subr.mxu0 0.0
        %1041 = vmatpush1.msra.mxu0 0.0
        %1042 = vmatprep.subr.mxu0 0.0
        %1043 = vmatpush1.msra.mxu0 0.0
        %1044 = vmatprep.subr.mxu0 0.0
        %1045 = vmatpush1.msra.mxu0 0.0
        %1046 = vmatprep.subr.mxu0 0.0
        %1047 = vmatpush1.msra.mxu0 0.0
        %1048 = vmatprep.subr.mxu0 0.0
        %1049 = vmatpush1.msra.mxu0 0.0
        %1050 = vmatprep.subr.mxu0 0.0
        %1051 = vmatpush1.msra.mxu0 0.0
        %1052 = vmatprep.subr.mxu0 0.0
        %1053 = vmatpush1.msra.mxu0 0.0
        %1054 = vmatprep.subr.mxu0 0.0
        %1055 = vmatpush1.msra.mxu0 0.0
        %1056 = vmatprep.subr.mxu0 0.0
        %1057 = vmatpush1.msra.mxu0 0.0
        %1058 = vmatprep.subr.mxu0 0.0
        %1059 = vmatpush1.msra.mxu0 0.0
        %1060 = vmatprep.subr.mxu0 0.0
        %1061 = vmatpush1.msra.mxu0 0.0
        %1062 = vmatprep.subr.mxu0 0.0
        %1063 = vmatpush1.msra.mxu0 0.0
        %1064 = vmatprep.subr.mxu0 0.0
        %1065 = vmatpush1.msra.mxu0 0.0
        %1066 = vmatprep.subr.mxu0 0.0
        %1067 = vmatpush1.msra.mxu0 0.0
        %1068 = vmatprep.subr.mxu0 0.0
        %1069 = vmatpush1.msra.mxu0 0.0
        %1070 = vmatprep.subr.mxu0 0.0
        %1071 = vmatpush1.msra.mxu0 0.0
        %1072 = vmatprep.subr.mxu0 0.0
        %1073 = vmatpush1.msra.mxu0 0.0
        %1074 = vmatprep.subr.mxu0 0.0
        %1075 = vmatpush1.msra.mxu0 0.0
        %1076 = vmatprep.subr.mxu0 0.0
        %1077 = vmatpush1.msra.mxu0 0.0
        %1078 = vmatprep.subr.mxu0 0.0
        %1079 = vmatpush1.msra.mxu0 0.0
        %1080 = vmatprep.subr.mxu0 0.0
        %1081 = vmatpush1.msra.mxu0 0.0
        %1082 = vmatprep.subr.mxu0 0.0
        %1083 = vmatpush1.msra.mxu0 0.0
        %1084 = vmatprep.subr.mxu0 0.0
        %1085 = vmatpush1.msra.mxu0 0.0
        %1086 = vmatprep.subr.mxu0 0.0
        %1087 = vmatpush1.msra.mxu0 0.0
        %1088 = vmatprep.subr.mxu0 0.0
        %1089 = vmatpush1.msra.mxu0 0.0
        %1090 = vmatprep.subr.mxu0 0.0
        %1091 = vmatpush1.msra.mxu0 0.0
        %1092 = vmatprep.subr.mxu0 0.0
        %1093 = vmatpush1.msra.mxu0 0.0
        %1094 = vmatprep.subr.mxu0 0.0
        %1095 = vmatpush1.msra.mxu0 0.0
        %1096 = vmatprep.subr.mxu0 0.0
        %1097 = vmatpush1.msra.mxu0 0.0
        %1098 = vmatprep.subr.mxu0 0.0
        %1099 = vmatpush1.msra.mxu0 0.0
        %1100 = vmatprep.mubr.f32.mxu0 0.0
        %1101 = vmatmul.mubr.f32.gmra.mrb[0].mxu0 %v1031
        %v1102 = vpop.f32.mrb[0].mxu0
        %v1103 = vadd.f32 0.0, %v1102
        %v1104 = vpop.f32.mrb[0].mxu0
        %1105 = vmatprep.mubr.f32.mxu0 0.0
        %1106 = vmatmul.mubr.f32.gmra.mrb[0].mxu0 %v1034
        %v1107 = vpop.f32.mrb[0].mxu0
        %v1108 = vadd.f32 0.0, %v1107
        %v1109 = vpop.f32.mrb[0].mxu0
        %1110 = vdwg.mxu0
        %v1112 = vsel %vm1029, %v832, 0
        %v1115 = vsel %vm1029, %v929, 0
        %1117 = vmatprep.subr.mxu0 0.0
        %1118 = vmatpush1.xpose.msra.mxu0 %v1115
        %1119 = vmatprep.subr.mxu0 0.0
        %1120 = vmatpush1.xpose.msra.mxu0 0.0
        %1121 = vmatprep.subr.mxu0 0.0
        %1122 = vmatpush1.xpose.msra.mxu0 0.0
        %1123 = vmatprep.subr.mxu0 0.0
        %1124 = vmatpush1.xpose.msra.mxu0 0.0
        %1125 = vmatprep.subr.mxu0 0.0
        %1126 = vmatpush1.xpose.msra.mxu0 0.0
        %1127 = vmatprep.subr.mxu0 0.0
        %1128 = vmatpush1.xpose.msra.mxu0 0.0
        %1129 = vmatprep.subr.mxu0 0.0
        %1130 = vmatpush1.xpose.msra.mxu0 0.0
        %1131 = vmatprep.subr.mxu0 0.0
        %1132 = vmatpush1.xpose.msra.mxu0 0.0
        %1133 = vmatprep.subr.mxu0 0.0
        %1134 = vmatpush1.xpose.msra.mxu0 0.0
        %1135 = vmatprep.subr.mxu0 0.0
        %1136 = vmatpush1.xpose.msra.mxu0 0.0
        %1137 = vmatprep.subr.mxu0 0.0
        %1138 = vmatpush1.xpose.msra.mxu0 0.0
        %1139 = vmatprep.subr.mxu0 0.0
        %1140 = vmatpush1.xpose.msra.mxu0 0.0
        %1141 = vmatprep.subr.mxu0 0.0
        %1142 = vmatpush1.xpose.msra.mxu0 0.0
        %1143 = vmatprep.subr.mxu0 0.0
        %1144 = vmatpush1.xpose.msra.mxu0 0.0
        %1145 = vmatprep.subr.mxu0 0.0
        %1146 = vmatpush1.xpose.msra.mxu0 0.0
        %1147 = vmatprep.subr.mxu0 0.0
        %1148 = vmatpush1.xpose.msra.mxu0 0.0
        %1149 = vmatprep.subr.mxu0 0.0
        %1150 = vmatpush1.xpose.msra.mxu0 0.0
        %1151 = vmatprep.subr.mxu0 0.0
        %1152 = vmatpush1.xpose.msra.mxu0 0.0
        %1153 = vmatprep.subr.mxu0 0.0
        %1154 = vmatpush1.xpose.msra.mxu0 0.0
        %1155 = vmatprep.subr.mxu0 0.0
        %1156 = vmatpush1.xpose.msra.mxu0 0.0
        %1157 = vmatprep.subr.mxu0 0.0
        %1158 = vmatpush1.xpose.msra.mxu0 0.0
        %1159 = vmatprep.subr.mxu0 0.0
        %1160 = vmatpush1.xpose.msra.mxu0 0.0
        %1161 = vmatprep.subr.mxu0 0.0
        %1162 = vmatpush1.xpose.msra.mxu0 0.0
        %1163 = vmatprep.subr.mxu0 0.0
        %1164 = vmatpush1.xpose.msra.mxu0 0.0
        %1165 = vmatprep.subr.mxu0 0.0
        %1166 = vmatpush1.xpose.msra.mxu0 0.0
        %1167 = vmatprep.subr.mxu0 0.0
        %1168 = vmatpush1.xpose.msra.mxu0 0.0
        %1169 = vmatprep.subr.mxu0 0.0
        %1170 = vmatpush1.xpose.msra.mxu0 0.0
        %1171 = vmatprep.subr.mxu0 0.0
        %1172 = vmatpush1.xpose.msra.mxu0 0.0
        %1173 = vmatprep.subr.mxu0 0.0
        %1174 = vmatpush1.xpose.msra.mxu0 0.0
        %1175 = vmatprep.subr.mxu0 0.0
        %1176 = vmatpush1.xpose.msra.mxu0 0.0
        %1177 = vmatprep.subr.mxu0 0.0
        %1178 = vmatpush1.xpose.msra.mxu0 0.0
        %1179 = vmatprep.subr.mxu0 0.0
        %1180 = vmatpush1.xpose.msra.mxu0 0.0
        %1181 = vmatprep.mubr.f32.mxu0 0.0
        %1182 = vmatmul.mubr.f32.gmra.mrb[0].mxu0 %v1112
        %v1183 = vpop.f32.mrb[0].mxu0
        %v1184 = vadd.f32 0.0, %v1183
        %v1185 = vpop.f32.mrb[0].mxu0
        %1186 = vdwg.mxu0
        %v1188 = vsel %vm1029, %v837, 0
        %v1191 = vsel %vm1029, %v934, 0
        %1193 = vmatprep.subr.mxu0 0.0
        %1194 = vmatpush1.xpose.msra.mxu0 %v1191
        %1195 = vmatprep.subr.mxu0 0.0
        %1196 = vmatpush1.xpose.msra.mxu0 0.0
        %1197 = vmatprep.subr.mxu0 0.0
        %1198 = vmatpush1.xpose.msra.mxu0 0.0
        %1199 = vmatprep.subr.mxu0 0.0
        %1200 = vmatpush1.xpose.msra.mxu0 0.0
        %1201 = vmatprep.subr.mxu0 0.0
        %1202 = vmatpush1.xpose.msra.mxu0 0.0
        %1203 = vmatprep.subr.mxu0 0.0
        %1204 = vmatpush1.xpose.msra.mxu0 0.0
        %1205 = vmatprep.subr.mxu0 0.0
        %1206 = vmatpush1.xpose.msra.mxu0 0.0
        %1207 = vmatprep.subr.mxu0 0.0
        %1208 = vmatpush1.xpose.msra.mxu0 0.0
        %1209 = vmatprep.subr.mxu0 0.0
        %1210 = vmatpush1.xpose.msra.mxu0 0.0
        %1211 = vmatprep.subr.mxu0 0.0
        %1212 = vmatpush1.xpose.msra.mxu0 0.0
        %1213 = vmatprep.subr.mxu0 0.0
        %1214 = vmatpush1.xpose.msra.mxu0 0.0
        %1215 = vmatprep.subr.mxu0 0.0
        %1216 = vmatpush1.xpose.msra.mxu0 0.0
        %1217 = vmatprep.subr.mxu0 0.0
        %1218 = vmatpush1.xpose.msra.mxu0 0.0
        %1219 = vmatprep.subr.mxu0 0.0
        %1220 = vmatpush1.xpose.msra.mxu0 0.0
        %1221 = vmatprep.subr.mxu0 0.0
        %1222 = vmatpush1.xpose.msra.mxu0 0.0
        %1223 = vmatprep.subr.mxu0 0.0
        %1224 = vmatpush1.xpose.msra.mxu0 0.0
        %1225 = vmatprep.subr.mxu0 0.0
        %1226 = vmatpush1.xpose.msra.mxu0 0.0
        %1227 = vmatprep.subr.mxu0 0.0
        %1228 = vmatpush1.xpose.msra.mxu0 0.0
        %1229 = vmatprep.subr.mxu0 0.0
        %1230 = vmatpush1.xpose.msra.mxu0 0.0
        %1231 = vmatprep.subr.mxu0 0.0
        %1232 = vmatpush1.xpose.msra.mxu0 0.0
        %1233 = vmatprep.subr.mxu0 0.0
        %1234 = vmatpush1.xpose.msra.mxu0 0.0
        %1235 = vmatprep.subr.mxu0 0.0
        %1236 = vmatpush1.xpose.msra.mxu0 0.0
        %1237 = vmatprep.subr.mxu0 0.0
        %1238 = vmatpush1.xpose.msra.mxu0 0.0
        %1239 = vmatprep.subr.mxu0 0.0
        %1240 = vmatpush1.xpose.msra.mxu0 0.0
        %1241 = vmatprep.subr.mxu0 0.0
        %1242 = vmatpush1.xpose.msra.mxu0 0.0
        %1243 = vmatprep.subr.mxu0 0.0
        %1244 = vmatpush1.xpose.msra.mxu0 0.0
        %1245 = vmatprep.subr.mxu0 0.0
        %1246 = vmatpush1.xpose.msra.mxu0 0.0
        %1247 = vmatprep.subr.mxu0 0.0
        %1248 = vmatpush1.xpose.msra.mxu0 0.0
        %1249 = vmatprep.subr.mxu0 0.0
        %1250 = vmatpush1.xpose.msra.mxu0 0.0
        %1251 = vmatprep.subr.mxu0 0.0
        %1252 = vmatpush1.xpose.msra.mxu0 0.0
        %1253 = vmatprep.subr.mxu0 0.0
        %1254 = vmatpush1.xpose.msra.mxu0 0.0
        %1255 = vmatprep.subr.mxu0 0.0
        %1256 = vmatpush1.xpose.msra.mxu0 0.0
        %1257 = vmatprep.mubr.f32.mxu0 0.0
        %1258 = vmatmul.mubr.f32.gmra.mrb[0].mxu0 %v1188
        %v1259 = vpop.f32.mrb[0].mxu0
        %v1260 = vadd.f32 0.0, %v1259
        %v1261 = vpop.f32.mrb[0].mxu0
        %1262 = vdwg.mxu0
        %v1263 = vmul.f32 %v1184, 0.35355338
        %v1264 = vmul.f32 %v1260, 0.35355338
        %v1265 = vld [vmem:[%s8] sm:$0xff]
        %v1266 = vld [vmem:[%s10] sm:$0x1]
        %v1268 = vlaneseq
        %v1269 = vshrl.u32 %v1268, 7
        %v1270 = vsub.s32 0, %v1269
        %v1271 = vrot.slane %v1266, %v1270
        %v1273 = vmul.f32 %v1103, %v1271
        %v1274 = vmul.f32 %v1108, %v1271
        %v1276 = vsel %vm1029, %v1263, 0
        %v1279 = vsel %vm1029, %v1264, 0
        %1281 = vmatprep.subr.mxu0 0.0
        %1282 = vmatpush1.msra.mxu0 %v1265
        %1283 = vmatprep.subr.mxu0 0.0
        %1284 = vmatpush1.msra.mxu0 0.0
        %1285 = vmatprep.subr.mxu0 0.0
        %1286 = vmatpush1.msra.mxu0 0.0
        %1287 = vmatprep.subr.mxu0 0.0
        %1288 = vmatpush1.msra.mxu0 0.0
        %1289 = vmatprep.subr.mxu0 0.0
        %1290 = vmatpush1.msra.mxu0 0.0
        %1291 = vmatprep.subr.mxu0 0.0
        %1292 = vmatpush1.msra.mxu0 0.0
        %1293 = vmatprep.subr.mxu0 0.0
        %1294 = vmatpush1.msra.mxu0 0.0
        %1295 = vmatprep.subr.mxu0 0.0
        %1296 = vmatpush1.msra.mxu0 0.0
        %1297 = vmatprep.subr.mxu0 0.0
        %1298 = vmatpush1.msra.mxu0 0.0
        %1299 = vmatprep.subr.mxu0 0.0
        %1300 = vmatpush1.msra.mxu0 0.0
        %1301 = vmatprep.subr.mxu0 0.0
        %1302 = vmatpush1.msra.mxu0 0.0
        %1303 = vmatprep.subr.mxu0 0.0
        %1304 = vmatpush1.msra.mxu0 0.0
        %1305 = vmatprep.subr.mxu0 0.0
        %1306 = vmatpush1.msra.mxu0 0.0
        %1307 = vmatprep.subr.mxu0 0.0
        %1308 = vmatpush1.msra.mxu0 0.0
        %1309 = vmatprep.subr.mxu0 0.0
        %1310 = vmatpush1.msra.mxu0 0.0
        %1311 = vmatprep.subr.mxu0 0.0
        %1312 = vmatpush1.msra.mxu0 0.0
        %1313 = vmatprep.subr.mxu0 0.0
        %1314 = vmatpush1.msra.mxu0 0.0
        %1315 = vmatprep.subr.mxu0 0.0
        %1316 = vmatpush1.msra.mxu0 0.0
        %1317 = vmatprep.subr.mxu0 0.0
        %1318 = vmatpush1.msra.mxu0 0.0
        %1319 = vmatprep.subr.mxu0 0.0
        %1320 = vmatpush1.msra.mxu0 0.0
        %1321 = vmatprep.subr.mxu0 0.0
        %1322 = vmatpush1.msra.mxu0 0.0
        %1323 = vmatprep.subr.mxu0 0.0
        %1324 = vmatpush1.msra.mxu0 0.0
        %1325 = vmatprep.subr.mxu0 0.0
        %1326 = vmatpush1.msra.mxu0 0.0
        %1327 = vmatprep.subr.mxu0 0.0
        %1328 = vmatpush1.msra.mxu0 0.0
        %1329 = vmatprep.subr.mxu0 0.0
        %1330 = vmatpush1.msra.mxu0 0.0
        %1331 = vmatprep.subr.mxu0 0.0
        %1332 = vmatpush1.msra.mxu0 0.0
        %1333 = vmatprep.subr.mxu0 0.0
        %1334 = vmatpush1.msra.mxu0 0.0
        %1335 = vmatprep.subr.mxu0 0.0
        %1336 = vmatpush1.msra.mxu0 0.0
        %1337 = vmatprep.subr.mxu0 0.0
        %1338 = vmatpush1.msra.mxu0 0.0
        %1339 = vmatprep.subr.mxu0 0.0
        %1340 = vmatpush1.msra.mxu0 0.0
        %1341 = vmatprep.subr.mxu0 0.0
        %1342 = vmatpush1.msra.mxu0 0.0
        %1343 = vmatprep.subr.mxu0 0.0
        %1344 = vmatpush1.msra.mxu0 0.0
        %1345 = vmatprep.mubr.f32.mxu0 0.0
        %1346 = vmatmul.mubr.f32.gmra.mrb[0].mxu0 %v1276
        %v1347 = vpop.f32.mrb[0].mxu0
        %v1348 = vadd.f32 %v1273, %v1347
        %v1349 = vpop.f32.mrb[0].mxu0
        %1350 = vmatprep.mubr.f32.mxu0 0.0
        %1351 = vmatmul.mubr.f32.gmra.mrb[0].mxu0 %v1279
        %v1352 = vpop.f32.mrb[0].mxu0
        %v1353 = vadd.f32 %v1274, %v1352
        %v1354 = vpop.f32.mrb[0].mxu0
        %1355 = vdwg.mxu0
        %v1356 = vld [vmem:[%s11] sm:$0x1]
        %v1358 = vlaneseq
        %v1359 = vshrl.u32 %v1358, 7
        %v1360 = vsub.s32 0, %v1359
        %v1361 = vrot.slane %v1356, %v1360
        %v1363 = vadd.f32 %v1348, %v1361
        %v1364 = vadd.f32 %v1353, %v1361
        %v1365 = vmax.f32 %v1363, 0.0
        %v1366 = vmax.f32 %v1364, 0.0
        %v1367 = vld [vmem:[%s12] sm:$0xff]
        %v1368 = vld [vmem:[%s12 + $0x8] sm:$0xff]
        %v1369 = vld [vmem:[%s12 + $0x10] sm:$0xff]
        %v1370 = vld [vmem:[%s12 + $0x18] sm:$0xff]
        %v1371 = vld [vmem:[%s12 + $0x20] sm:$0xff]
        %v1372 = vld [vmem:[%s12 + $0x28] sm:$0xff]
        %v1373 = vld [vmem:[%s12 + $0x30] sm:$0xff]
        %v1374 = vld [vmem:[%s12 + $0x38] sm:$0xff]
        %v1375 = vld [vmem:[%s12 + $0x40] sm:$0xff]
        %v1376 = vld [vmem:[%s12 + $0x48] sm:$0xff]
        %v1377 = vld [vmem:[%s12 + $0x50] sm:$0xff]
        %v1378 = vld [vmem:[%s12 + $0x58] sm:$0xff]
        %v1379 = vld [vmem:[%s12 + $0x60] sm:$0xff]
        %v1380 = vld [vmem:[%s12 + $0x68] sm:$0xff]
        %v1381 = vld [vmem:[%s12 + $0x70] sm:$0xff]
        %v1382 = vld [vmem:[%s12 + $0x78] sm:$0xff]
        %s1383 = sld [smem:[#allocation2]]
        %v1384 = vstv %s1383
        %1385 = vmatprep.subr.mxu0 0.0
        %1386 = vmatpush1.msra.mxu0 %v1367
        %1387 = vmatprep.subr.mxu0 0.0
        %1388 = vmatpush1.msra.mxu0 %v1368
        %1389 = vmatprep.subr.mxu0 0.0
        %1390 = vmatpush1.msra.mxu0 %v1369
        %1391 = vmatprep.subr.mxu0 0.0
        %1392 = vmatpush1.msra.mxu0 %v1370
        %1393 = vmatprep.subr.mxu0 0.0
        %1394 = vmatpush1.msra.mxu0 %v1371
        %1395 = vmatprep.subr.mxu0 0.0
        %1396 = vmatpush1.msra.mxu0 %v1372
        %1397 = vmatprep.subr.mxu0 0.0
        %1398 = vmatpush1.msra.mxu0 %v1373
        %1399 = vmatprep.subr.mxu0 0.0
        %1400 = vmatpush1.msra.mxu0 %v1374
        %1401 = vmatprep.subr.mxu0 0.0
        %1402 = vmatpush1.msra.mxu0 %v1375
        %1403 = vmatprep.subr.mxu0 0.0
        %1404 = vmatpush1.msra.mxu0 %v1376
        %1405 = vmatprep.subr.mxu0 0.0
        %1406 = vmatpush1.msra.mxu0 %v1377
        %1407 = vmatprep.subr.mxu0 0.0
        %1408 = vmatpush1.msra.mxu0 %v1378
        %1409 = vmatprep.subr.mxu0 0.0
        %1410 = vmatpush1.msra.mxu0 %v1379
        %1411 = vmatprep.subr.mxu0 0.0
        %1412 = vmatpush1.msra.mxu0 %v1380
        %1413 = vmatprep.subr.mxu0 0.0
        %1414 = vmatpush1.msra.mxu0 %v1381
        %1415 = vmatprep.subr.mxu0 0.0
        %1416 = vmatpush1.msra.mxu0 %v1382
        %1417 = vmatprep.subr.mxu0 0.0
        %1418 = vmatpush1.msra.mxu0 0.0
        %1419 = vmatprep.subr.mxu0 0.0
        %1420 = vmatpush1.msra.mxu0 0.0
        %1421 = vmatprep.subr.mxu0 0.0
        %1422 = vmatpush1.msra.mxu0 0.0
        %1423 = vmatprep.subr.mxu0 0.0
        %1424 = vmatpush1.msra.mxu0 0.0
        %1425 = vmatprep.subr.mxu0 0.0
        %1426 = vmatpush1.msra.mxu0 0.0
        %1427 = vmatprep.subr.mxu0 0.0
        %1428 = vmatpush1.msra.mxu0 0.0
        %1429 = vmatprep.subr.mxu0 0.0
        %1430 = vmatpush1.msra.mxu0 0.0
        %1431 = vmatprep.subr.mxu0 0.0
        %1432 = vmatpush1.msra.mxu0 0.0
        %1433 = vmatprep.subr.mxu0 0.0
        %1434 = vmatpush1.msra.mxu0 0.0
        %1435 = vmatprep.subr.mxu0 0.0
        %1436 = vmatpush1.msra.mxu0 0.0
        %1437 = vmatprep.subr.mxu0 0.0
        %1438 = vmatpush1.msra.mxu0 0.0
        %1439 = vmatprep.subr.mxu0 0.0
        %1440 = vmatpush1.msra.mxu0 0.0
        %1441 = vmatprep.subr.mxu0 0.0
        %1442 = vmatpush1.msra.mxu0 0.0
        %1443 = vmatprep.subr.mxu0 0.0
        %1444 = vmatpush1.msra.mxu0 0.0
        %1445 = vmatprep.subr.mxu0 0.0
        %1446 = vmatpush1.msra.mxu0 0.0
        %1447 = vmatprep.subr.mxu0 0.0
        %1448 = vmatpush1.msra.mxu0 0.0
        %1449 = vmatprep.mubr.f32.mxu0 0.0
        %1450 = vmatmul.mubr.f32.gmra.mrb[0].mxu0 %v1365
        %v1451 = vpop.f32.mrb[0].mxu0
        %v1452 = vadd.f32 %v1384, %v1451
        %v1453 = vpop.f32.mrb[0].mxu0
        %1454 = vmatprep.mubr.f32.mxu0 0.0
        %1455 = vmatmul.mubr.f32.gmra.mrb[0].mxu0 %v1366
        %v1456 = vpop.f32.mrb[0].mxu0
        %v1457 = vadd.f32 %v1384, %v1456
        %v1458 = vpop.f32.mrb[0].mxu0
        %1459 = vdwg.mxu0
        %v1460 = vsel %vm1029, %v1452, -inf
        %1461 = vmax.xlane.f32.xlu0 %v1460
        %v1462 = vpop.xlane.xlu0 %1461
        %v1463 = vsel %vm1029, %v1457, -inf
        %1464 = vmax.xlane.f32.xlu0 %v1463
        %v1465 = vpop.xlane.xlu0 %1464
        %v1466 = vsub.f32 %v1452, %v1462
        %v1467 = vsub.f32 %v1457, %v1465
        %v1468 = vmul.f32 %v1466, 1.442695
        %v1469 = vpow.pop %v1468
        %v1470 = vmul.f32 %v1467, 1.442695
        %v1471 = vpow.pop %v1470
        %v1472 = vsel %vm1029, %v1469, 0.0
        %1473 = vadd.xlane.f32.xlu0 %v1472
        %v1474 = vpop.xlane.xlu0 %1473
        %v1475 = vsel %vm1029, %v1471, 0.0
        %1476 = vadd.xlane.f32.xlu0 %v1475
        %v1477 = vpop.xlane.xlu0 %1476
        %v1478 = vrcp.pop %v1474
        %v1479 = vmul.f32 %v1469, %v1478
        %v1480 = vrcp.pop %v1477
        %v1481 = vmul.f32 %v1471, %v1480
        %v1483 = vsel %vm1029, %v1479, 0
        %1485 = vmatprep.subr.mxu0 0.0
        %1486 = vmatpush1.msra.mxu0 %v1020
        %1487 = vmatprep.subr.mxu0 0.0
        %1488 = vmatpush1.msra.mxu0 0.0
        %1489 = vmatprep.subr.mxu0 0.0
        %1490 = vmatpush1.msra.mxu0 0.0
        %1491 = vmatprep.subr.mxu0 0.0
        %1492 = vmatpush1.msra.mxu0 0.0
        %1493 = vmatprep.subr.mxu0 0.0
        %1494 = vmatpush1.msra.mxu0 0.0
        %1495 = vmatprep.subr.mxu0 0.0
        %1496 = vmatpush1.msra.mxu0 0.0
        %1497 = vmatprep.subr.mxu0 0.0
        %1498 = vmatpush1.msra.mxu0 0.0
        %1499 = vmatprep.subr.mxu0 0.0
        %1500 = vmatpush1.msra.mxu0 0.0
        %1501 = vmatprep.subr.mxu0 0.0
        %1502 = vmatpush1.msra.mxu0 0.0
        %1503 = vmatprep.subr.mxu0 0.0
        %1504 = vmatpush1.msra.mxu0 0.0
        %1505 = vmatprep.subr.mxu0 0.0
        %1506 = vmatpush1.msra.mxu0 0.0
        %1507 = vmatprep.subr.mxu0 0.0
        %1508 = vmatpush1.msra.mxu0 0.0
        %1509 = vmatprep.subr.mxu0 0.0
        %1510 = vmatpush1.msra.mxu0 0.0
        %1511 = vmatprep.subr.mxu0 0.0
        %1512 = vmatpush1.msra.mxu0 0.0
        %1513 = vmatprep.subr.mxu0 0.0
        %1514 = vmatpush1.msra.mxu0 0.0
        %1515 = vmatprep.subr.mxu0 0.0
        %1516 = vmatpush1.msra.mxu0 0.0
        %1517 = vmatprep.subr.mxu0 0.0
        %1518 = vmatpush1.msra.mxu0 0.0
        %1519 = vmatprep.subr.mxu0 0.0
        %1520 = vmatpush1.msra.mxu0 0.0
        %1521 = vmatprep.subr.mxu0 0.0
        %1522 = vmatpush1.msra.mxu0 0.0
        %1523 = vmatprep.subr.mxu0 0.0
        %1524 = vmatpush1.msra.mxu0 0.0
        %1525 = vmatprep.subr.mxu0 0.0
        %1526 = vmatpush1.msra.mxu0 0.0
        %1527 = vmatprep.subr.mxu0 0.0
        %1528 = vmatpush1.msra.mxu0 0.0
        %1529 = vmatprep.subr.mxu0 0.0
        %1530 = vmatpush1.msra.mxu0 0.0
        %1531 = vmatprep.subr.mxu0 0.0
        %1532 = vmatpush1.msra.mxu0 0.0
        %1533 = vmatprep.subr.mxu0 0.0
        %1534 = vmatpush1.msra.mxu0 0.0
        %1535 = vmatprep.subr.mxu0 0.0
        %1536 = vmatpush1.msra.mxu0 0.0
        %1537 = vmatprep.subr.mxu0 0.0
        %1538 = vmatpush1.msra.mxu0 0.0
        %1539 = vmatprep.subr.mxu0 0.0
        %1540 = vmatpush1.msra.mxu0 0.0
        %1541 = vmatprep.subr.mxu0 0.0
        %1542 = vmatpush1.msra.mxu0 0.0
        %1543 = vmatprep.subr.mxu0 0.0
        %1544 = vmatpush1.msra.mxu0 0.0
        %1545 = vmatprep.subr.mxu0 0.0
        %1546 = vmatpush1.msra.mxu0 0.0
        %1547 = vmatprep.subr.mxu0 0.0
        %1548 = vmatpush1.msra.mxu0 0.0
        %1549 = vmatprep.mubr.f32.mxu0 0.0
        %1550 = vmatmul.mubr.f32.gmra.mrb[0].mxu0 %v1483
        %v1551 = vpop.f32.mrb[0].mxu0
        %v1552 = vadd.f32 0.0, %v1551
        %v1553 = vpop.f32.mrb[0].mxu0
        %1554 = vdwg.mxu0
        %v1556 = vsel %vm1029, %v1481, 0
        %1558 = vmatprep.subr.mxu0 0.0
        %1559 = vmatpush1.msra.mxu0 %v1025
        %1560 = vmatprep.subr.mxu0 0.0
        %1561 = vmatpush1.msra.mxu0 0.0
        %1562 = vmatprep.subr.mxu0 0.0
        %1563 = vmatpush1.msra.mxu0 0.0
        %1564 = vmatprep.subr.mxu0 0.0
        %1565 = vmatpush1.msra.mxu0 0.0
        %1566 = vmatprep.subr.mxu0 0.0
        %1567 = vmatpush1.msra.mxu0 0.0
        %1568 = vmatprep.subr.mxu0 0.0
        %1569 = vmatpush1.msra.mxu0 0.0
        %1570 = vmatprep.subr.mxu0 0.0
        %1571 = vmatpush1.msra.mxu0 0.0
        %1572 = vmatprep.subr.mxu0 0.0
        %1573 = vmatpush1.msra.mxu0 0.0
        %1574 = vmatprep.subr.mxu0 0.0
        %1575 = vmatpush1.msra.mxu0 0.0
        %1576 = vmatprep.subr.mxu0 0.0
        %1577 = vmatpush1.msra.mxu0 0.0
        %1578 = vmatprep.subr.mxu0 0.0
        %1579 = vmatpush1.msra.mxu0 0.0
        %1580 = vmatprep.subr.mxu0 0.0
        %1581 = vmatpush1.msra.mxu0 0.0
        %1582 = vmatprep.subr.mxu0 0.0
        %1583 = vmatpush1.msra.mxu0 0.0
        %1584 = vmatprep.subr.mxu0 0.0
        %1585 = vmatpush1.msra.mxu0 0.0
        %1586 = vmatprep.subr.mxu0 0.0
        %1587 = vmatpush1.msra.mxu0 0.0
        %1588 = vmatprep.subr.mxu0 0.0
        %1589 = vmatpush1.msra.mxu0 0.0
        %1590 = vmatprep.subr.mxu0 0.0
        %1591 = vmatpush1.msra.mxu0 0.0
        %1592 = vmatprep.subr.mxu0 0.0
        %1593 = vmatpush1.msra.mxu0 0.0
        %1594 = vmatprep.subr.mxu0 0.0
        %1595 = vmatpush1.msra.mxu0 0.0
        %1596 = vmatprep.subr.mxu0 0.0
        %1597 = vmatpush1.msra.mxu0 0.0
        %1598 = vmatprep.subr.mxu0 0.0
        %1599 = vmatpush1.msra.mxu0 0.0
        %1600 = vmatprep.subr.mxu0 0.0
        %1601 = vmatpush1.msra.mxu0 0.0
        %1602 = vmatprep.subr.mxu0 0.0
        %1603 = vmatpush1.msra.mxu0 0.0
        %1604 = vmatprep.subr.mxu0 0.0
        %1605 = vmatpush1.msra.mxu0 0.0
        %1606 = vmatprep.subr.mxu0 0.0
        %1607 = vmatpush1.msra.mxu0 0.0
        %1608 = vmatprep.subr.mxu0 0.0
        %1609 = vmatpush1.msra.mxu0 0.0
        %1610 = vmatprep.subr.mxu0 0.0
        %1611 = vmatpush1.msra.mxu0 0.0
        %1612 = vmatprep.subr.mxu0 0.0
        %1613 = vmatpush1.msra.mxu0 0.0
        %1614 = vmatprep.subr.mxu0 0.0
        %1615 = vmatpush1.msra.mxu0 0.0
        %1616 = vmatprep.subr.mxu0 0.0
        %1617 = vmatpush1.msra.mxu0 0.0
        %1618 = vmatprep.subr.mxu0 0.0
        %1619 = vmatpush1.msra.mxu0 0.0
        %1620 = vmatprep.subr.mxu0 0.0
        %1621 = vmatpush1.msra.mxu0 0.0
        %1622 = vmatprep.mubr.f32.mxu0 0.0
        %1623 = vmatmul.mubr.f32.gmra.mrb[0].mxu0 %v1556
        %v1624 = vpop.f32.mrb[0].mxu0
        %v1625 = vadd.f32 0.0, %v1624
        %v1626 = vpop.f32.mrb[0].mxu0
        %1627 = vdwg.mxu0
        %1628 = vrot.lane.b32.xlu0 %v832, 120
        %v1629 = vpop.permute.xlu0 %1628
        %1630 = vrot.lane.b32.xlu0 %v929, 120
        %v1631 = vpop.permute.xlu0 %1630
        %v1632 = vsel %vm1029, %v1629, 0
        %v1634 = vsel %vm1029, %v1631, 0
        %1636 = vmatprep.subr.mxu0 0.0
        %1637 = vmatpush1.xpose.msra.mxu0 %v1634
        %1638 = vmatprep.subr.mxu0 0.0
        %1639 = vmatpush1.xpose.msra.mxu0 0.0
        %1640 = vmatprep.subr.mxu0 0.0
        %1641 = vmatpush1.xpose.msra.mxu0 0.0
        %1642 = vmatprep.subr.mxu0 0.0
        %1643 = vmatpush1.xpose.msra.mxu0 0.0
        %1644 = vmatprep.subr.mxu0 0.0
        %1645 = vmatpush1.xpose.msra.mxu0 0.0
        %1646 = vmatprep.subr.mxu0 0.0
        %1647 = vmatpush1.xpose.msra.mxu0 0.0
        %1648 = vmatprep.subr.mxu0 0.0
        %1649 = vmatpush1.xpose.msra.mxu0 0.0
        %1650 = vmatprep.subr.mxu0 0.0
        %1651 = vmatpush1.xpose.msra.mxu0 0.0
        %1652 = vmatprep.subr.mxu0 0.0
        %1653 = vmatpush1.xpose.msra.mxu0 0.0
        %1654 = vmatprep.subr.mxu0 0.0
        %1655 = vmatpush1.xpose.msra.mxu0 0.0
        %1656 = vmatprep.subr.mxu0 0.0
        %1657 = vmatpush1.xpose.msra.mxu0 0.0
        %1658 = vmatprep.subr.mxu0 0.0
        %1659 = vmatpush1.xpose.msra.mxu0 0.0
        %1660 = vmatprep.subr.mxu0 0.0
        %1661 = vmatpush1.xpose.msra.mxu0 0.0
        %1662 = vmatprep.subr.mxu0 0.0
        %1663 = vmatpush1.xpose.msra.mxu0 0.0
        %1664 = vmatprep.subr.mxu0 0.0
        %1665 = vmatpush1.xpose.msra.mxu0 0.0
        %1666 = vmatprep.subr.mxu0 0.0
        %1667 = vmatpush1.xpose.msra.mxu0 0.0
        %1668 = vmatprep.subr.mxu0 0.0
        %1669 = vmatpush1.xpose.msra.mxu0 0.0
        %1670 = vmatprep.subr.mxu0 0.0
        %1671 = vmatpush1.xpose.msra.mxu0 0.0
        %1672 = vmatprep.subr.mxu0 0.0
        %1673 = vmatpush1.xpose.msra.mxu0 0.0
        %1674 = vmatprep.subr.mxu0 0.0
        %1675 = vmatpush1.xpose.msra.mxu0 0.0
        %1676 = vmatprep.subr.mxu0 0.0
        %1677 = vmatpush1.xpose.msra.mxu0 0.0
        %1678 = vmatprep.subr.mxu0 0.0
        %1679 = vmatpush1.xpose.msra.mxu0 0.0
        %1680 = vmatprep.subr.mxu0 0.0
        %1681 = vmatpush1.xpose.msra.mxu0 0.0
        %1682 = vmatprep.subr.mxu0 0.0
        %1683 = vmatpush1.xpose.msra.mxu0 0.0
        %1684 = vmatprep.subr.mxu0 0.0
        %1685 = vmatpush1.xpose.msra.mxu0 0.0
        %1686 = vmatprep.subr.mxu0 0.0
        %1687 = vmatpush1.xpose.msra.mxu0 0.0
        %1688 = vmatprep.subr.mxu0 0.0
        %1689 = vmatpush1.xpose.msra.mxu0 0.0
        %1690 = vmatprep.subr.mxu0 0.0
        %1691 = vmatpush1.xpose.msra.mxu0 0.0
        %1692 = vmatprep.subr.mxu0 0.0
        %1693 = vmatpush1.xpose.msra.mxu0 0.0
        %1694 = vmatprep.subr.mxu0 0.0
        %1695 = vmatpush1.xpose.msra.mxu0 0.0
        %1696 = vmatprep.subr.mxu0 0.0
        %1697 = vmatpush1.xpose.msra.mxu0 0.0
        %1698 = vmatprep.subr.mxu0 0.0
        %1699 = vmatpush1.xpose.msra.mxu0 0.0
        %1700 = vmatprep.mubr.f32.mxu0 0.0
        %1701 = vmatmul.mubr.f32.gmra.mrb[0].mxu0 %v1632
        %v1702 = vpop.f32.mrb[0].mxu0
        %v1703 = vadd.f32 0.0, %v1702
        %v1704 = vpop.f32.mrb[0].mxu0
        %1705 = vdwg.mxu0
        %1706 = vrot.lane.b32.xlu0 %v837, 120
        %v1707 = vpop.permute.xlu0 %1706
        %1708 = vrot.lane.b32.xlu0 %v934, 120
        %v1709 = vpop.permute.xlu0 %1708
        %v1710 = vsel %vm1029, %v1707, 0
        %v1712 = vsel %vm1029, %v1709, 0
        %1714 = vmatprep.subr.mxu0 0.0
        %1715 = vmatpush1.xpose.msra.mxu0 %v1712
        %1716 = vmatprep.subr.mxu0 0.0
        %1717 = vmatpush1.xpose.msra.mxu0 0.0
        %1718 = vmatprep.subr.mxu0 0.0
        %1719 = vmatpush1.xpose.msra.mxu0 0.0
        %1720 = vmatprep.subr.mxu0 0.0
        %1721 = vmatpush1.xpose.msra.mxu0 0.0
        %1722 = vmatprep.subr.mxu0 0.0
        %1723 = vmatpush1.xpose.msra.mxu0 0.0
        %1724 = vmatprep.subr.mxu0 0.0
        %1725 = vmatpush1.xpose.msra.mxu0 0.0
        %1726 = vmatprep.subr.mxu0 0.0
        %1727 = vmatpush1.xpose.msra.mxu0 0.0
        %1728 = vmatprep.subr.mxu0 0.0
        %1729 = vmatpush1.xpose.msra.mxu0 0.0
        %1730 = vmatprep.subr.mxu0 0.0
        %1731 = vmatpush1.xpose.msra.mxu0 0.0
        %1732 = vmatprep.subr.mxu0 0.0
        %1733 = vmatpush1.xpose.msra.mxu0 0.0
        %1734 = vmatprep.subr.mxu0 0.0
        %1735 = vmatpush1.xpose.msra.mxu0 0.0
        %1736 = vmatprep.subr.mxu0 0.0
        %1737 = vmatpush1.xpose.msra.mxu0 0.0
        %1738 = vmatprep.subr.mxu0 0.0
        %1739 = vmatpush1.xpose.msra.mxu0 0.0
        %1740 = vmatprep.subr.mxu0 0.0
        %1741 = vmatpush1.xpose.msra.mxu0 0.0
        %1742 = vmatprep.subr.mxu0 0.0
        %1743 = vmatpush1.xpose.msra.mxu0 0.0
        %1744 = vmatprep.subr.mxu0 0.0
        %1745 = vmatpush1.xpose.msra.mxu0 0.0
        %1746 = vmatprep.subr.mxu0 0.0
        %1747 = vmatpush1.xpose.msra.mxu0 0.0
        %1748 = vmatprep.subr.mxu0 0.0
        %1749 = vmatpush1.xpose.msra.mxu0 0.0
        %1750 = vmatprep.subr.mxu0 0.0
        %1751 = vmatpush1.xpose.msra.mxu0 0.0
        %1752 = vmatprep.subr.mxu0 0.0
        %1753 = vmatpush1.xpose.msra.mxu0 0.0
        %1754 = vmatprep.subr.mxu0 0.0
        %1755 = vmatpush1.xpose.msra.mxu0 0.0
        %1756 = vmatprep.subr.mxu0 0.0
        %1757 = vmatpush1.xpose.msra.mxu0 0.0
        %1758 = vmatprep.subr.mxu0 0.0
        %1759 = vmatpush1.xpose.msra.mxu0 0.0
        %1760 = vmatprep.subr.mxu0 0.0
        %1761 = vmatpush1.xpose.msra.mxu0 0.0
        %1762 = vmatprep.subr.mxu0 0.0
        %1763 = vmatpush1.xpose.msra.mxu0 0.0
        %1764 = vmatprep.subr.mxu0 0.0
        %1765 = vmatpush1.xpose.msra.mxu0 0.0
        %1766 = vmatprep.subr.mxu0 0.0
        %1767 = vmatpush1.xpose.msra.mxu0 0.0
        %1768 = vmatprep.subr.mxu0 0.0
        %1769 = vmatpush1.xpose.msra.mxu0 0.0
        %1770 = vmatprep.subr.mxu0 0.0
        %1771 = vmatpush1.xpose.msra.mxu0 0.0
        %1772 = vmatprep.subr.mxu0 0.0
        %1773 = vmatpush1.xpose.msra.mxu0 0.0
        %1774 = vmatprep.subr.mxu0 0.0
        %1775 = vmatpush1.xpose.msra.mxu0 0.0
        %1776 = vmatprep.subr.mxu0 0.0
        %1777 = vmatpush1.xpose.msra.mxu0 0.0
        %1778 = vmatprep.mubr.f32.mxu0 0.0
        %1779 = vmatmul.mubr.f32.gmra.mrb[0].mxu0 %v1710
        %v1780 = vpop.f32.mrb[0].mxu0
        %v1781 = vadd.f32 0.0, %v1780
        %v1782 = vpop.f32.mrb[0].mxu0
        %1783 = vdwg.mxu0
        %v1784 = vmul.f32 %v1703, 0.35355338
        %v1785 = vmul.f32 %v1781, 0.35355338
        %s1786 = scalar_lea.vmem %s8, 8
        %v1787 = vld [vmem:[%s1786] sm:$0xff]
        %s1788 = scalar_lea.vmem %s10, 1
        %v1789 = vld [vmem:[%s1788] sm:$0x1]
        %v1791 = vlaneseq
        %v1792 = vshrl.u32 %v1791, 7
        %v1793 = vsub.s32 0, %v1792
        %v1794 = vrot.slane %v1789, %v1793
        %v1796 = vmul.f32 %v1103, %v1794
        %v1797 = vmul.f32 %v1108, %v1794
        %v1799 = vsel %vm1029, %v1784, 0
        %v1802 = vsel %vm1029, %v1785, 0
        %1804 = vmatprep.subr.mxu0 0.0
        %1805 = vmatpush1.msra.mxu0 %v1787
        %1806 = vmatprep.subr.mxu0 0.0
        %1807 = vmatpush1.msra.mxu0 0.0
        %1808 = vmatprep.subr.mxu0 0.0
        %1809 = vmatpush1.msra.mxu0 0.0
        %1810 = vmatprep.subr.mxu0 0.0
        %1811 = vmatpush1.msra.mxu0 0.0
        %1812 = vmatprep.subr.mxu0 0.0
        %1813 = vmatpush1.msra.mxu0 0.0
        %1814 = vmatprep.subr.mxu0 0.0
        %1815 = vmatpush1.msra.mxu0 0.0
        %1816 = vmatprep.subr.mxu0 0.0
        %1817 = vmatpush1.msra.mxu0 0.0
        %1818 = vmatprep.subr.mxu0 0.0
        %1819 = vmatpush1.msra.mxu0 0.0
        %1820 = vmatprep.subr.mxu0 0.0
        %1821 = vmatpush1.msra.mxu0 0.0
        %1822 = vmatprep.subr.mxu0 0.0
        %1823 = vmatpush1.msra.mxu0 0.0
        %1824 = vmatprep.subr.mxu0 0.0
        %1825 = vmatpush1.msra.mxu0 0.0
        %1826 = vmatprep.subr.mxu0 0.0
        %1827 = vmatpush1.msra.mxu0 0.0
        %1828 = vmatprep.subr.mxu0 0.0
        %1829 = vmatpush1.msra.mxu0 0.0
        %1830 = vmatprep.subr.mxu0 0.0
        %1831 = vmatpush1.msra.mxu0 0.0
        %1832 = vmatprep.subr.mxu0 0.0
        %1833 = vmatpush1.msra.mxu0 0.0
        %1834 = vmatprep.subr.mxu0 0.0
        %1835 = vmatpush1.msra.mxu0 0.0
        %1836 = vmatprep.subr.mxu0 0.0
        %1837 = vmatpush1.msra.mxu0 0.0
        %1838 = vmatprep.subr.mxu0 0.0
        %1839 = vmatpush1.msra.mxu0 0.0
        %1840 = vmatprep.subr.mxu0 0.0
        %1841 = vmatpush1.msra.mxu0 0.0
        %1842 = vmatprep.subr.mxu0 0.0
        %1843 = vmatpush1.msra.mxu0 0.0
        %1844 = vmatprep.subr.mxu0 0.0
        %1845 = vmatpush1.msra.mxu0 0.0
        %1846 = vmatprep.subr.mxu0 0.0
        %1847 = vmatpush1.msra.mxu0 0.0
        %1848 = vmatprep.subr.mxu0 0.0
        %1849 = vmatpush1.msra.mxu0 0.0
        %1850 = vmatprep.subr.mxu0 0.0
        %1851 = vmatpush1.msra.mxu0 0.0
        %1852 = vmatprep.subr.mxu0 0.0
        %1853 = vmatpush1.msra.mxu0 0.0
        %1854 = vmatprep.subr.mxu0 0.0
        %1855 = vmatpush1.msra.mxu0 0.0
        %1856 = vmatprep.subr.mxu0 0.0
        %1857 = vmatpush1.msra.mxu0 0.0
        %1858 = vmatprep.subr.mxu0 0.0
        %1859 = vmatpush1.msra.mxu0 0.0
        %1860 = vmatprep.subr.mxu0 0.0
        %1861 = vmatpush1.msra.mxu0 0.0
        %1862 = vmatprep.subr.mxu0 0.0
        %1863 = vmatpush1.msra.mxu0 0.0
        %1864 = vmatprep.subr.mxu0 0.0
        %1865 = vmatpush1.msra.mxu0 0.0
        %1866 = vmatprep.subr.mxu0 0.0
        %1867 = vmatpush1.msra.mxu0 0.0
        %1868 = vmatprep.mubr.f32.mxu0 0.0
        %1869 = vmatmul.mubr.f32.gmra.mrb[0].mxu0 %v1799
        %v1870 = vpop.f32.mrb[0].mxu0
        %v1871 = vadd.f32 %v1796, %v1870
        %v1872 = vpop.f32.mrb[0].mxu0
        %1873 = vmatprep.mubr.f32.mxu0 0.0
        %1874 = vmatmul.mubr.f32.gmra.mrb[0].mxu0 %v1802
        %v1875 = vpop.f32.mrb[0].mxu0
        %v1876 = vadd.f32 %v1797, %v1875
        %v1877 = vpop.f32.mrb[0].mxu0
        %1878 = vdwg.mxu0
        %s1879 = scalar_lea.vmem %s11, 1
        %v1880 = vld [vmem:[%s1879] sm:$0x1]
        %v1882 = vlaneseq
        %v1883 = vshrl.u32 %v1882, 7
        %v1884 = vsub.s32 0, %v1883
        %v1885 = vrot.slane %v1880, %v1884
        %v1887 = vadd.f32 %v1871, %v1885
        %v1888 = vadd.f32 %v1876, %v1885
        %v1889 = vmax.f32 %v1887, 0.0
        %v1890 = vmax.f32 %v1888, 0.0
        %s1891 = scalar_lea.vmem %s12, 128
        %v1892 = vld [vmem:[%s1891] sm:$0xff]
        %v1893 = vld [vmem:[%s1891 + $0x8] sm:$0xff]
        %v1894 = vld [vmem:[%s1891 + $0x10] sm:$0xff]
        %v1895 = vld [vmem:[%s1891 + $0x18] sm:$0xff]
        %v1896 = vld [vmem:[%s1891 + $0x20] sm:$0xff]
        %v1897 = vld [vmem:[%s1891 + $0x28] sm:$0xff]
        %v1898 = vld [vmem:[%s1891 + $0x30] sm:$0xff]
        %v1899 = vld [vmem:[%s1891 + $0x38] sm:$0xff]
        %v1900 = vld [vmem:[%s1891 + $0x40] sm:$0xff]
        %v1901 = vld [vmem:[%s1891 + $0x48] sm:$0xff]
        %v1902 = vld [vmem:[%s1891 + $0x50] sm:$0xff]
        %v1903 = vld [vmem:[%s1891 + $0x58] sm:$0xff]
        %v1904 = vld [vmem:[%s1891 + $0x60] sm:$0xff]
        %v1905 = vld [vmem:[%s1891 + $0x68] sm:$0xff]
        %v1906 = vld [vmem:[%s1891 + $0x70] sm:$0xff]
        %v1907 = vld [vmem:[%s1891 + $0x78] sm:$0xff]
        %s1908 = sld [smem:[#allocation2 + $0x1]]
        %v1909 = vstv %s1908
        %1910 = vmatprep.subr.mxu0 0.0
        %1911 = vmatpush1.msra.mxu0 %v1892
        %1912 = vmatprep.subr.mxu0 0.0
        %1913 = vmatpush1.msra.mxu0 %v1893
        %1914 = vmatprep.subr.mxu0 0.0
        %1915 = vmatpush1.msra.mxu0 %v1894
        %1916 = vmatprep.subr.mxu0 0.0
        %1917 = vmatpush1.msra.mxu0 %v1895
        %1918 = vmatprep.subr.mxu0 0.0
        %1919 = vmatpush1.msra.mxu0 %v1896
        %1920 = vmatprep.subr.mxu0 0.0
        %1921 = vmatpush1.msra.mxu0 %v1897
        %1922 = vmatprep.subr.mxu0 0.0
        %1923 = vmatpush1.msra.mxu0 %v1898
        %1924 = vmatprep.subr.mxu0 0.0
        %1925 = vmatpush1.msra.mxu0 %v1899
        %1926 = vmatprep.subr.mxu0 0.0
        %1927 = vmatpush1.msra.mxu0 %v1900
        %1928 = vmatprep.subr.mxu0 0.0
        %1929 = vmatpush1.msra.mxu0 %v1901
        %1930 = vmatprep.subr.mxu0 0.0
        %1931 = vmatpush1.msra.mxu0 %v1902
        %1932 = vmatprep.subr.mxu0 0.0
        %1933 = vmatpush1.msra.mxu0 %v1903
        %1934 = vmatprep.subr.mxu0 0.0
        %1935 = vmatpush1.msra.mxu0 %v1904
        %1936 = vmatprep.subr.mxu0 0.0
        %1937 = vmatpush1.msra.mxu0 %v1905
        %1938 = vmatprep.subr.mxu0 0.0
        %1939 = vmatpush1.msra.mxu0 %v1906
        %1940 = vmatprep.subr.mxu0 0.0
        %1941 = vmatpush1.msra.mxu0 %v1907
        %1942 = vmatprep.subr.mxu0 0.0
        %1943 = vmatpush1.msra.mxu0 0.0
        %1944 = vmatprep.subr.mxu0 0.0
        %1945 = vmatpush1.msra.mxu0 0.0
        %1946 = vmatprep.subr.mxu0 0.0
        %1947 = vmatpush1.msra.mxu0 0.0
        %1948 = vmatprep.subr.mxu0 0.0
        %1949 = vmatpush1.msra.mxu0 0.0
        %1950 = vmatprep.subr.mxu0 0.0
        %1951 = vmatpush1.msra.mxu0 0.0
        %1952 = vmatprep.subr.mxu0 0.0
        %1953 = vmatpush1.msra.mxu0 0.0
        %1954 = vmatprep.subr.mxu0 0.0
        %1955 = vmatpush1.msra.mxu0 0.0
        %1956 = vmatprep.subr.mxu0 0.0
        %1957 = vmatpush1.msra.mxu0 0.0
        %1958 = vmatprep.subr.mxu0 0.0
        %1959 = vmatpush1.msra.mxu0 0.0
        %1960 = vmatprep.subr.mxu0 0.0
        %1961 = vmatpush1.msra.mxu0 0.0
        %1962 = vmatprep.subr.mxu0 0.0
        %1963 = vmatpush1.msra.mxu0 0.0
        %1964 = vmatprep.subr.mxu0 0.0
        %1965 = vmatpush1.msra.mxu0 0.0
        %1966 = vmatprep.subr.mxu0 0.0
        %1967 = vmatpush1.msra.mxu0 0.0
        %1968 = vmatprep.subr.mxu0 0.0
        %1969 = vmatpush1.msra.mxu0 0.0
        %1970 = vmatprep.subr.mxu0 0.0
        %1971 = vmatpush1.msra.mxu0 0.0
        %1972 = vmatprep.subr.mxu0 0.0
        %1973 = vmatpush1.msra.mxu0 0.0
        %1974 = vmatprep.mubr.f32.mxu0 0.0
        %1975 = vmatmul.mubr.f32.gmra.mrb[0].mxu0 %v1889
        %v1976 = vpop.f32.mrb[0].mxu0
        %v1977 = vadd.f32 %v1909, %v1976
        %v1978 = vpop.f32.mrb[0].mxu0
        %1979 = vmatprep.mubr.f32.mxu0 0.0
        %1980 = vmatmul.mubr.f32.gmra.mrb[0].mxu0 %v1890
        %v1981 = vpop.f32.mrb[0].mxu0
        %v1982 = vadd.f32 %v1909, %v1981
        %v1983 = vpop.f32.mrb[0].mxu0
        %1984 = vdwg.mxu0
        %v1985 = vsel %vm1029, %v1977, -inf
        %1986 = vmax.xlane.f32.xlu0 %v1985
        %v1987 = vpop.xlane.xlu0 %1986
        %v1988 = vsel %vm1029, %v1982, -inf
        %1989 = vmax.xlane.f32.xlu0 %v1988
        %v1990 = vpop.xlane.xlu0 %1989
        %v1991 = vsub.f32 %v1977, %v1987
        %v1992 = vsub.f32 %v1982, %v1990
        %v1993 = vmul.f32 %v1991, 1.442695
        %v1994 = vpow.pop %v1993
        %v1995 = vmul.f32 %v1992, 1.442695
        %v1996 = vpow.pop %v1995
        %v1997 = vsel %vm1029, %v1994, 0.0
        %1998 = vadd.xlane.f32.xlu0 %v1997
        %v1999 = vpop.xlane.xlu0 %1998
        %v2000 = vsel %vm1029, %v1996, 0.0
        %2001 = vadd.xlane.f32.xlu0 %v2000
        %v2002 = vpop.xlane.xlu0 %2001
        %v2003 = vrcp.pop %v1999
        %v2004 = vmul.f32 %v1994, %v2003
        %v2005 = vrcp.pop %v2002
        %v2006 = vmul.f32 %v1996, %v2005
        %2008 = vrot.lane.b32.xlu0 %v1020, 120
        %v2009 = vpop.permute.xlu0 %2008
        %v2012 = vsel %vm1029, %v2004, 0
        %2014 = vmatprep.subr.mxu0 0.0
        %2015 = vmatpush1.msra.mxu0 %v2009
        %2016 = vmatprep.subr.mxu0 0.0
        %2017 = vmatpush1.msra.mxu0 0.0
        %2018 = vmatprep.subr.mxu0 0.0
        %2019 = vmatpush1.msra.mxu0 0.0
        %2020 = vmatprep.subr.mxu0 0.0
        %2021 = vmatpush1.msra.mxu0 0.0
        %2022 = vmatprep.subr.mxu0 0.0
        %2023 = vmatpush1.msra.mxu0 0.0
        %2024 = vmatprep.subr.mxu0 0.0
        %2025 = vmatpush1.msra.mxu0 0.0
        %2026 = vmatprep.subr.mxu0 0.0
        %2027 = vmatpush1.msra.mxu0 0.0
        %2028 = vmatprep.subr.mxu0 0.0
        %2029 = vmatpush1.msra.mxu0 0.0
        %2030 = vmatprep.subr.mxu0 0.0
        %2031 = vmatpush1.msra.mxu0 0.0
        %2032 = vmatprep.subr.mxu0 0.0
        %2033 = vmatpush1.msra.mxu0 0.0
        %2034 = vmatprep.subr.mxu0 0.0
        %2035 = vmatpush1.msra.mxu0 0.0
        %2036 = vmatprep.subr.mxu0 0.0
        %2037 = vmatpush1.msra.mxu0 0.0
        %2038 = vmatprep.subr.mxu0 0.0
        %2039 = vmatpush1.msra.mxu0 0.0
        %2040 = vmatprep.subr.mxu0 0.0
        %2041 = vmatpush1.msra.mxu0 0.0
        %2042 = vmatprep.subr.mxu0 0.0
        %2043 = vmatpush1.msra.mxu0 0.0
        %2044 = vmatprep.subr.mxu0 0.0
        %2045 = vmatpush1.msra.mxu0 0.0
        %2046 = vmatprep.subr.mxu0 0.0
        %2047 = vmatpush1.msra.mxu0 0.0
        %2048 = vmatprep.subr.mxu0 0.0
        %2049 = vmatpush1.msra.mxu0 0.0
        %2050 = vmatprep.subr.mxu0 0.0
        %2051 = vmatpush1.msra.mxu0 0.0
        %2052 = vmatprep.subr.mxu0 0.0
        %2053 = vmatpush1.msra.mxu0 0.0
        %2054 = vmatprep.subr.mxu0 0.0
        %2055 = vmatpush1.msra.mxu0 0.0
        %2056 = vmatprep.subr.mxu0 0.0
        %2057 = vmatpush1.msra.mxu0 0.0
        %2058 = vmatprep.subr.mxu0 0.0
        %2059 = vmatpush1.msra.mxu0 0.0
        %2060 = vmatprep.subr.mxu0 0.0
        %2061 = vmatpush1.msra.mxu0 0.0
        %2062 = vmatprep.subr.mxu0 0.0
        %2063 = vmatpush1.msra.mxu0 0.0
        %2064 = vmatprep.subr.mxu0 0.0
        %2065 = vmatpush1.msra.mxu0 0.0
        %2066 = vmatprep.subr.mxu0 0.0
        %2067 = vmatpush1.msra.mxu0 0.0
        %2068 = vmatprep.subr.mxu0 0.0
        %2069 = vmatpush1.msra.mxu0 0.0
        %2070 = vmatprep.subr.mxu0 0.0
        %2071 = vmatpush1.msra.mxu0 0.0
        %2072 = vmatprep.subr.mxu0 0.0
        %2073 = vmatpush1.msra.mxu0 0.0
        %2074 = vmatprep.subr.mxu0 0.0
        %2075 = vmatpush1.msra.mxu0 0.0
        %2076 = vmatprep.subr.mxu0 0.0
        %2077 = vmatpush1.msra.mxu0 0.0
        %2078 = vmatprep.mubr.f32.mxu0 0.0
        %2079 = vmatmul.mubr.f32.gmra.mrb[0].mxu0 %v2012
        %v2080 = vpop.f32.mrb[0].mxu0
        %v2081 = vadd.f32 0.0, %v2080
        %v2082 = vpop.f32.mrb[0].mxu0
        %2083 = vdwg.mxu0
        %2085 = vrot.lane.b32.xlu0 %v1025, 120
        %v2086 = vpop.permute.xlu0 %2085
        %v2089 = vsel %vm1029, %v2006, 0
        %2091 = vmatprep.subr.mxu0 0.0
        %2092 = vmatpush1.msra.mxu0 %v2086
        %2093 = vmatprep.subr.mxu0 0.0
        %2094 = vmatpush1.msra.mxu0 0.0
        %2095 = vmatprep.subr.mxu0 0.0
        %2096 = vmatpush1.msra.mxu0 0.0
        %2097 = vmatprep.subr.mxu0 0.0
        %2098 = vmatpush1.msra.mxu0 0.0
        %2099 = vmatprep.subr.mxu0 0.0
        %2100 = vmatpush1.msra.mxu0 0.0
        %2101 = vmatprep.subr.mxu0 0.0
        %2102 = vmatpush1.msra.mxu0 0.0
        %2103 = vmatprep.subr.mxu0 0.0
        %2104 = vmatpush1.msra.mxu0 0.0
        %2105 = vmatprep.subr.mxu0 0.0
        %2106 = vmatpush1.msra.mxu0 0.0
        %2107 = vmatprep.subr.mxu0 0.0
        %2108 = vmatpush1.msra.mxu0 0.0
        %2109 = vmatprep.subr.mxu0 0.0
        %2110 = vmatpush1.msra.mxu0 0.0
        %2111 = vmatprep.subr.mxu0 0.0
        %2112 = vmatpush1.msra.mxu0 0.0
        %2113 = vmatprep.subr.mxu0 0.0
        %2114 = vmatpush1.msra.mxu0 0.0
        %2115 = vmatprep.subr.mxu0 0.0
        %2116 = vmatpush1.msra.mxu0 0.0
        %2117 = vmatprep.subr.mxu0 0.0
        %2118 = vmatpush1.msra.mxu0 0.0
        %2119 = vmatprep.subr.mxu0 0.0
        %2120 = vmatpush1.msra.mxu0 0.0
        %2121 = vmatprep.subr.mxu0 0.0
        %2122 = vmatpush1.msra.mxu0 0.0
        %2123 = vmatprep.subr.mxu0 0.0
        %2124 = vmatpush1.msra.mxu0 0.0
        %2125 = vmatprep.subr.mxu0 0.0
        %2126 = vmatpush1.msra.mxu0 0.0
        %2127 = vmatprep.subr.mxu0 0.0
        %2128 = vmatpush1.msra.mxu0 0.0
        %2129 = vmatprep.subr.mxu0 0.0
        %2130 = vmatpush1.msra.mxu0 0.0
        %2131 = vmatprep.subr.mxu0 0.0
        %2132 = vmatpush1.msra.mxu0 0.0
        %2133 = vmatprep.subr.mxu0 0.0
        %2134 = vmatpush1.msra.mxu0 0.0
        %2135 = vmatprep.subr.mxu0 0.0
        %2136 = vmatpush1.msra.mxu0 0.0
        %2137 = vmatprep.subr.mxu0 0.0
        %2138 = vmatpush1.msra.mxu0 0.0
        %2139 = vmatprep.subr.mxu0 0.0
        %2140 = vmatpush1.msra.mxu0 0.0
        %2141 = vmatprep.subr.mxu0 0.0
        %2142 = vmatpush1.msra.mxu0 0.0
        %2143 = vmatprep.subr.mxu0 0.0
        %2144 = vmatpush1.msra.mxu0 0.0
        %2145 = vmatprep.subr.mxu0 0.0
        %2146 = vmatpush1.msra.mxu0 0.0
        %2147 = vmatprep.subr.mxu0 0.0
        %2148 = vmatpush1.msra.mxu0 0.0
        %2149 = vmatprep.subr.mxu0 0.0
        %2150 = vmatpush1.msra.mxu0 0.0
        %2151 = vmatprep.subr.mxu0 0.0
        %2152 = vmatpush1.msra.mxu0 0.0
        %2153 = vmatprep.subr.mxu0 0.0
        %2154 = vmatpush1.msra.mxu0 0.0
        %2155 = vmatprep.mubr.f32.mxu0 0.0
        %2156 = vmatmul.mubr.f32.gmra.mrb[0].mxu0 %v2089
        %v2157 = vpop.f32.mrb[0].mxu0
        %v2158 = vadd.f32 0.0, %v2157
        %v2159 = vpop.f32.mrb[0].mxu0
        %2160 = vdwg.mxu0
        %2161 = vrot.lane.b32.xlu0 %v832, 112
        %v2162 = vpop.permute.xlu0 %2161
        %2163 = vrot.lane.b32.xlu0 %v929, 112
        %v2164 = vpop.permute.xlu0 %2163
        %v2165 = vsel %vm1029, %v2162, 0
        %v2167 = vsel %vm1029, %v2164, 0
        %2169 = vmatprep.subr.mxu0 0.0
        %2170 = vmatpush1.xpose.msra.mxu0 %v2167
        %2171 = vmatprep.subr.mxu0 0.0
        %2172 = vmatpush1.xpose.msra.mxu0 0.0
        %2173 = vmatprep.subr.mxu0 0.0
        %2174 = vmatpush1.xpose.msra.mxu0 0.0
        %2175 = vmatprep.subr.mxu0 0.0
        %2176 = vmatpush1.xpose.msra.mxu0 0.0
        %2177 = vmatprep.subr.mxu0 0.0
        %2178 = vmatpush1.xpose.msra.mxu0 0.0
        %2179 = vmatprep.subr.mxu0 0.0
        %2180 = vmatpush1.xpose.msra.mxu0 0.0
        %2181 = vmatprep.subr.mxu0 0.0
        %2182 = vmatpush1.xpose.msra.mxu0 0.0
        %2183 = vmatprep.subr.mxu0 0.0
        %2184 = vmatpush1.xpose.msra.mxu0 0.0
        %2185 = vmatprep.subr.mxu0 0.0
        %2186 = vmatpush1.xpose.msra.mxu0 0.0
        %2187 = vmatprep.subr.mxu0 0.0
        %2188 = vmatpush1.xpose.msra.mxu0 0.0
        %2189 = vmatprep.subr.mxu0 0.0
        %2190 = vmatpush1.xpose.msra.mxu0 0.0
        %2191 = vmatprep.subr.mxu0 0.0
        %2192 = vmatpush1.xpose.msra.mxu0 0.0
        %2193 = vmatprep.subr.mxu0 0.0
        %2194 = vmatpush1.xpose.msra.mxu0 0.0
        %2195 = vmatprep.subr.mxu0 0.0
        %2196 = vmatpush1.xpose.msra.mxu0 0.0
        %2197 = vmatprep.subr.mxu0 0.0
        %2198 = vmatpush1.xpose.msra.mxu0 0.0
        %2199 = vmatprep.subr.mxu0 0.0
        %2200 = vmatpush1.xpose.msra.mxu0 0.0
        %2201 = vmatprep.subr.mxu0 0.0
        %2202 = vmatpush1.xpose.msra.mxu0 0.0
        %2203 = vmatprep.subr.mxu0 0.0
        %2204 = vmatpush1.xpose.msra.mxu0 0.0
        %2205 = vmatprep.subr.mxu0 0.0
        %2206 = vmatpush1.xpose.msra.mxu0 0.0
        %2207 = vmatprep.subr.mxu0 0.0
        %2208 = vmatpush1.xpose.msra.mxu0 0.0
        %2209 = vmatprep.subr.mxu0 0.0
        %2210 = vmatpush1.xpose.msra.mxu0 0.0
        %2211 = vmatprep.subr.mxu0 0.0
        %2212 = vmatpush1.xpose.msra.mxu0 0.0
        %2213 = vmatprep.subr.mxu0 0.0
        %2214 = vmatpush1.xpose.msra.mxu0 0.0
        %2215 = vmatprep.subr.mxu0 0.0
        %2216 = vmatpush1.xpose.msra.mxu0 0.0
        %2217 = vmatprep.subr.mxu0 0.0
        %2218 = vmatpush1.xpose.msra.mxu0 0.0
        %2219 = vmatprep.subr.mxu0 0.0
        %2220 = vmatpush1.xpose.msra.mxu0 0.0
        %2221 = vmatprep.subr.mxu0 0.0
        %2222 = vmatpush1.xpose.msra.mxu0 0.0
        %2223 = vmatprep.subr.mxu0 0.0
        %2224 = vmatpush1.xpose.msra.mxu0 0.0
        %2225 = vmatprep.subr.mxu0 0.0
        %2226 = vmatpush1.xpose.msra.mxu0 0.0
        %2227 = vmatprep.subr.mxu0 0.0
        %2228 = vmatpush1.xpose.msra.mxu0 0.0
        %2229 = vmatprep.subr.mxu0 0.0
        %2230 = vmatpush1.xpose.msra.mxu0 0.0
        %2231 = vmatprep.subr.mxu0 0.0
        %2232 = vmatpush1.xpose.msra.mxu0 0.0
        %2233 = vmatprep.mubr.f32.mxu0 0.0
        %2234 = vmatmul.mubr.f32.gmra.mrb[0].mxu0 %v2165
        %v2235 = vpop.f32.mrb[0].mxu0
        %v2236 = vadd.f32 0.0, %v2235
        %v2237 = vpop.f32.mrb[0].mxu0
        %2238 = vdwg.mxu0
        %2239 = vrot.lane.b32.xlu0 %v837, 112
        %v2240 = vpop.permute.xlu0 %2239
        %2241 = vrot.lane.b32.xlu0 %v934, 112
        %v2242 = vpop.permute.xlu0 %2241
        %v2243 = vsel %vm1029, %v2240, 0
        %v2245 = vsel %vm1029, %v2242, 0
        %2247 = vmatprep.subr.mxu0 0.0
        %2248 = vmatpush1.xpose.msra.mxu0 %v2245
        %2249 = vmatprep.subr.mxu0 0.0
        %2250 = vmatpush1.xpose.msra.mxu0 0.0
        %2251 = vmatprep.subr.mxu0 0.0
        %2252 = vmatpush1.xpose.msra.mxu0 0.0
        %2253 = vmatprep.subr.mxu0 0.0
        %2254 = vmatpush1.xpose.msra.mxu0 0.0
        %2255 = vmatprep.subr.mxu0 0.0
        %2256 = vmatpush1.xpose.msra.mxu0 0.0
        %2257 = vmatprep.subr.mxu0 0.0
        %2258 = vmatpush1.xpose.msra.mxu0 0.0
        %2259 = vmatprep.subr.mxu0 0.0
        %2260 = vmatpush1.xpose.msra.mxu0 0.0
        %2261 = vmatprep.subr.mxu0 0.0
        %2262 = vmatpush1.xpose.msra.mxu0 0.0
        %2263 = vmatprep.subr.mxu0 0.0
        %2264 = vmatpush1.xpose.msra.mxu0 0.0
        %2265 = vmatprep.subr.mxu0 0.0
        %2266 = vmatpush1.xpose.msra.mxu0 0.0
        %2267 = vmatprep.subr.mxu0 0.0
        %2268 = vmatpush1.xpose.msra.mxu0 0.0
        %2269 = vmatprep.subr.mxu0 0.0
        %2270 = vmatpush1.xpose.msra.mxu0 0.0
        %2271 = vmatprep.subr.mxu0 0.0
        %2272 = vmatpush1.xpose.msra.mxu0 0.0
        %2273 = vmatprep.subr.mxu0 0.0
        %2274 = vmatpush1.xpose.msra.mxu0 0.0
        %2275 = vmatprep.subr.mxu0 0.0
        %2276 = vmatpush1.xpose.msra.mxu0 0.0
        %2277 = vmatprep.subr.mxu0 0.0
        %2278 = vmatpush1.xpose.msra.mxu0 0.0
        %2279 = vmatprep.subr.mxu0 0.0
        %2280 = vmatpush1.xpose.msra.mxu0 0.0
        %2281 = vmatprep.subr.mxu0 0.0
        %2282 = vmatpush1.xpose.msra.mxu0 0.0
        %2283 = vmatprep.subr.mxu0 0.0
        %2284 = vmatpush1.xpose.msra.mxu0 0.0
        %2285 = vmatprep.subr.mxu0 0.0
        %2286 = vmatpush1.xpose.msra.mxu0 0.0
        %2287 = vmatprep.subr.mxu0 0.0
        %2288 = vmatpush1.xpose.msra.mxu0 0.0
        %2289 = vmatprep.subr.mxu0 0.0
        %2290 = vmatpush1.xpose.msra.mxu0 0.0
        %2291 = vmatprep.subr.mxu0 0.0
        %2292 = vmatpush1.xpose.msra.mxu0 0.0
        %2293 = vmatprep.subr.mxu0 0.0
        %2294 = vmatpush1.xpose.msra.mxu0 0.0
        %2295 = vmatprep.subr.mxu0 0.0
        %2296 = vmatpush1.xpose.msra.mxu0 0.0
        %2297 = vmatprep.subr.mxu0 0.0
        %2298 = vmatpush1.xpose.msra.mxu0 0.0
        %2299 = vmatprep.subr.mxu0 0.0
        %2300 = vmatpush1.xpose.msra.mxu0 0.0
        %2301 = vmatprep.subr.mxu0 0.0
        %2302 = vmatpush1.xpose.msra.mxu0 0.0
        %2303 = vmatprep.subr.mxu0 0.0
        %2304 = vmatpush1.xpose.msra.mxu0 0.0
        %2305 = vmatprep.subr.mxu0 0.0
        %2306 = vmatpush1.xpose.msra.mxu0 0.0
        %2307 = vmatprep.subr.mxu0 0.0
        %2308 = vmatpush1.xpose.msra.mxu0 0.0
        %2309 = vmatprep.subr.mxu0 0.0
        %2310 = vmatpush1.xpose.msra.mxu0 0.0
        %2311 = vmatprep.mubr.f32.mxu0 0.0
        %2312 = vmatmul.mubr.f32.gmra.mrb[0].mxu0 %v2243
        %v2313 = vpop.f32.mrb[0].mxu0
        %v2314 = vadd.f32 0.0, %v2313
        %v2315 = vpop.f32.mrb[0].mxu0
        %2316 = vdwg.mxu0
        %v2317 = vmul.f32 %v2236, 0.35355338
        %v2318 = vmul.f32 %v2314, 0.35355338
        %s2319 = scalar_lea.vmem %s8, 16
        %v2320 = vld [vmem:[%s2319] sm:$0xff]
        %s2321 = scalar_lea.vmem %s10, 2
        %v2322 = vld [vmem:[%s2321] sm:$0x1]
        %v2324 = vlaneseq
        %v2325 = vshrl.u32 %v2324, 7
        %v2326 = vsub.s32 0, %v2325
        %v2327 = vrot.slane %v2322, %v2326
        %v2329 = vmul.f32 %v1103, %v2327
        %v2330 = vmul.f32 %v1108, %v2327
        %v2332 = vsel %vm1029, %v2317, 0
        %v2335 = vsel %vm1029, %v2318, 0
        %2337 = vmatprep.subr.mxu0 0.0
        %2338 = vmatpush1.msra.mxu0 %v2320
        %2339 = vmatprep.subr.mxu0 0.0
        %2340 = vmatpush1.msra.mxu0 0.0
        %2341 = vmatprep.subr.mxu0 0.0
        %2342 = vmatpush1.msra.mxu0 0.0
        %2343 = vmatprep.subr.mxu0 0.0
        %2344 = vmatpush1.msra.mxu0 0.0
        %2345 = vmatprep.subr.mxu0 0.0
        %2346 = vmatpush1.msra.mxu0 0.0
        %2347 = vmatprep.subr.mxu0 0.0
        %2348 = vmatpush1.msra.mxu0 0.0
        %2349 = vmatprep.subr.mxu0 0.0
        %2350 = vmatpush1.msra.mxu0 0.0
        %2351 = vmatprep.subr.mxu0 0.0
        %2352 = vmatpush1.msra.mxu0 0.0
        %2353 = vmatprep.subr.mxu0 0.0
        %2354 = vmatpush1.msra.mxu0 0.0
        %2355 = vmatprep.subr.mxu0 0.0
        %2356 = vmatpush1.msra.mxu0 0.0
        %2357 = vmatprep.subr.mxu0 0.0
        %2358 = vmatpush1.msra.mxu0 0.0
        %2359 = vmatprep.subr.mxu0 0.0
        %2360 = vmatpush1.msra.mxu0 0.0
        %2361 = vmatprep.subr.mxu0 0.0
        %2362 = vmatpush1.msra.mxu0 0.0
        %2363 = vmatprep.subr.mxu0 0.0
        %2364 = vmatpush1.msra.mxu0 0.0
        %2365 = vmatprep.subr.mxu0 0.0
        %2366 = vmatpush1.msra.mxu0 0.0
        %2367 = vmatprep.subr.mxu0 0.0
        %2368 = vmatpush1.msra.mxu0 0.0
        %2369 = vmatprep.subr.mxu0 0.0
        %2370 = vmatpush1.msra.mxu0 0.0
        %2371 = vmatprep.subr.mxu0 0.0
        %2372 = vmatpush1.msra.mxu0 0.0
        %2373 = vmatprep.subr.mxu0 0.0
        %2374 = vmatpush1.msra.mxu0 0.0
        %2375 = vmatprep.subr.mxu0 0.0
        %2376 = vmatpush1.msra.mxu0 0.0
        %2377 = vmatprep.subr.mxu0 0.0
        %2378 = vmatpush1.msra.mxu0 0.0
        %2379 = vmatprep.subr.mxu0 0.0
        %2380 = vmatpush1.msra.mxu0 0.0
        %2381 = vmatprep.subr.mxu0 0.0
        %2382 = vmatpush1.msra.mxu0 0.0
        %2383 = vmatprep.subr.mxu0 0.0
        %2384 = vmatpush1.msra.mxu0 0.0
        %2385 = vmatprep.subr.mxu0 0.0
        %2386 = vmatpush1.msra.mxu0 0.0
        %2387 = vmatprep.subr.mxu0 0.0
        %2388 = vmatpush1.msra.mxu0 0.0
        %2389 = vmatprep.subr.mxu0 0.0
        %2390 = vmatpush1.msra.mxu0 0.0
        %2391 = vmatprep.subr.mxu0 0.0
        %2392 = vmatpush1.msra.mxu0 0.0
        %2393 = vmatprep.subr.mxu0 0.0
        %2394 = vmatpush1.msra.mxu0 0.0
        %2395 = vmatprep.subr.mxu0 0.0
        %2396 = vmatpush1.msra.mxu0 0.0
        %2397 = vmatprep.subr.mxu0 0.0
        %2398 = vmatpush1.msra.mxu0 0.0
        %2399 = vmatprep.subr.mxu0 0.0
        %2400 = vmatpush1.msra.mxu0 0.0
        %2401 = vmatprep.mubr.f32.mxu0 0.0
        %2402 = vmatmul.mubr.f32.gmra.mrb[0].mxu0 %v2332
        %v2403 = vpop.f32.mrb[0].mxu0
        %v2404 = vadd.f32 %v2329, %v2403
        %v2405 = vpop.f32.mrb[0].mxu0
        %2406 = vmatprep.mubr.f32.mxu0 0.0
        %2407 = vmatmul.mubr.f32.gmra.mrb[0].mxu0 %v2335
        %v2408 = vpop.f32.mrb[0].mxu0
        %v2409 = vadd.f32 %v2330, %v2408
        %v2410 = vpop.f32.mrb[0].mxu0
        %2411 = vdwg.mxu0
        %s2412 = scalar_lea.vmem %s11, 2
        %v2413 = vld [vmem:[%s2412] sm:$0x1]
        %v2415 = vlaneseq
        %v2416 = vshrl.u32 %v2415, 7
        %v2417 = vsub.s32 0, %v2416
        %v2418 = vrot.slane %v2413, %v2417
        %v2420 = vadd.f32 %v2404, %v2418
        %v2421 = vadd.f32 %v2409, %v2418
        %v2422 = vmax.f32 %v2420, 0.0
        %v2423 = vmax.f32 %v2421, 0.0
        %s2424 = scalar_lea.vmem %s12, 256
        %v2425 = vld [vmem:[%s2424] sm:$0xff]
        %v2426 = vld [vmem:[%s2424 + $0x8] sm:$0xff]
        %v2427 = vld [vmem:[%s2424 + $0x10] sm:$0xff]
        %v2428 = vld [vmem:[%s2424 + $0x18] sm:$0xff]
        %v2429 = vld [vmem:[%s2424 + $0x20] sm:$0xff]
        %v2430 = vld [vmem:[%s2424 + $0x28] sm:$0xff]
        %v2431 = vld [vmem:[%s2424 + $0x30] sm:$0xff]
        %v2432 = vld [vmem:[%s2424 + $0x38] sm:$0xff]
        %v2433 = vld [vmem:[%s2424 + $0x40] sm:$0xff]
        %v2434 = vld [vmem:[%s2424 + $0x48] sm:$0xff]
        %v2435 = vld [vmem:[%s2424 + $0x50] sm:$0xff]
        %v2436 = vld [vmem:[%s2424 + $0x58] sm:$0xff]
        %v2437 = vld [vmem:[%s2424 + $0x60] sm:$0xff]
        %v2438 = vld [vmem:[%s2424 + $0x68] sm:$0xff]
        %v2439 = vld [vmem:[%s2424 + $0x70] sm:$0xff]
        %v2440 = vld [vmem:[%s2424 + $0x78] sm:$0xff]
        %s2441 = sld [smem:[#allocation2 + $0x2]]
        %v2442 = vstv %s2441
        %2443 = vmatprep.subr.mxu0 0.0
        %2444 = vmatpush1.msra.mxu0 %v2425
        %2445 = vmatprep.subr.mxu0 0.0
        %2446 = vmatpush1.msra.mxu0 %v2426
        %2447 = vmatprep.subr.mxu0 0.0
        %2448 = vmatpush1.msra.mxu0 %v2427
        %2449 = vmatprep.subr.mxu0 0.0
        %2450 = vmatpush1.msra.mxu0 %v2428
        %2451 = vmatprep.subr.mxu0 0.0
        %2452 = vmatpush1.msra.mxu0 %v2429
        %2453 = vmatprep.subr.mxu0 0.0
        %2454 = vmatpush1.msra.mxu0 %v2430
        %2455 = vmatprep.subr.mxu0 0.0
        %2456 = vmatpush1.msra.mxu0 %v2431
        %2457 = vmatprep.subr.mxu0 0.0
        %2458 = vmatpush1.msra.mxu0 %v2432
        %2459 = vmatprep.subr.mxu0 0.0
        %2460 = vmatpush1.msra.mxu0 %v2433
        %2461 = vmatprep.subr.mxu0 0.0
        %2462 = vmatpush1.msra.mxu0 %v2434
        %2463 = vmatprep.subr.mxu0 0.0
        %2464 = vmatpush1.msra.mxu0 %v2435
        %2465 = vmatprep.subr.mxu0 0.0
        %2466 = vmatpush1.msra.mxu0 %v2436
        %2467 = vmatprep.subr.mxu0 0.0
        %2468 = vmatpush1.msra.mxu0 %v2437
        %2469 = vmatprep.subr.mxu0 0.0
        %2470 = vmatpush1.msra.mxu0 %v2438
        %2471 = vmatprep.subr.mxu0 0.0
        %2472 = vmatpush1.msra.mxu0 %v2439
        %2473 = vmatprep.subr.mxu0 0.0
        %2474 = vmatpush1.msra.mxu0 %v2440
        %2475 = vmatprep.subr.mxu0 0.0
        %2476 = vmatpush1.msra.mxu0 0.0
        %2477 = vmatprep.subr.mxu0 0.0
        %2478 = vmatpush1.msra.mxu0 0.0
        %2479 = vmatprep.subr.mxu0 0.0
        %2480 = vmatpush1.msra.mxu0 0.0
        %2481 = vmatprep.subr.mxu0 0.0
        %2482 = vmatpush1.msra.mxu0 0.0
        %2483 = vmatprep.subr.mxu0 0.0
        %2484 = vmatpush1.msra.mxu0 0.0
        %2485 = vmatprep.subr.mxu0 0.0
        %2486 = vmatpush1.msra.mxu0 0.0
        %2487 = vmatprep.subr.mxu0 0.0
        %2488 = vmatpush1.msra.mxu0 0.0
        %2489 = vmatprep.subr.mxu0 0.0
        %2490 = vmatpush1.msra.mxu0 0.0
        %2491 = vmatprep.subr.mxu0 0.0
        %2492 = vmatpush1.msra.mxu0 0.0
        %2493 = vmatprep.subr.mxu0 0.0
        %2494 = vmatpush1.msra.mxu0 0.0
        %2495 = vmatprep.subr.mxu0 0.0
        %2496 = vmatpush1.msra.mxu0 0.0
        %2497 = vmatprep.subr.mxu0 0.0
        %2498 = vmatpush1.msra.mxu0 0.0
        %2499 = vmatprep.subr.mxu0 0.0
        %2500 = vmatpush1.msra.mxu0 0.0
        %2501 = vmatprep.subr.mxu0 0.0
        %2502 = vmatpush1.msra.mxu0 0.0
        %2503 = vmatprep.subr.mxu0 0.0
        %2504 = vmatpush1.msra.mxu0 0.0
        %2505 = vmatprep.subr.mxu0 0.0
        %2506 = vmatpush1.msra.mxu0 0.0
        %2507 = vmatprep.mubr.f32.mxu0 0.0
        %2508 = vmatmul.mubr.f32.gmra.mrb[0].mxu0 %v2422
        %v2509 = vpop.f32.mrb[0].mxu0
        %v2510 = vadd.f32 %v2442, %v2509
        %v2511 = vpop.f32.mrb[0].mxu0
        %2512 = vmatprep.mubr.f32.mxu0 0.0
        %2513 = vmatmul.mubr.f32.gmra.mrb[0].mxu0 %v2423
        %v2514 = vpop.f32.mrb[0].mxu0
        %v2515 = vadd.f32 %v2442, %v2514
        %v2516 = vpop.f32.mrb[0].mxu0
        %2517 = vdwg.mxu0
        %v2518 = vsel %vm1029, %v2510, -inf
        %2519 = vmax.xlane.f32.xlu0 %v2518
        %v2520 = vpop.xlane.xlu0 %2519
        %v2521 = vsel %vm1029, %v2515, -inf
        %2522 = vmax.xlane.f32.xlu0 %v2521
        %v2523 = vpop.xlane.xlu0 %2522
        %v2524 = vsub.f32 %v2510, %v2520
        %v2525 = vsub.f32 %v2515, %v2523
        %v2526 = vmul.f32 %v2524, 1.442695
        %v2527 = vpow.pop %v2526
        %v2528 = vmul.f32 %v2525, 1.442695
        %v2529 = vpow.pop %v2528
        %v2530 = vsel %vm1029, %v2527, 0.0
        %2531 = vadd.xlane.f32.xlu0 %v2530
        %v2532 = vpop.xlane.xlu0 %2531
        %v2533 = vsel %vm1029, %v2529, 0.0
        %2534 = vadd.xlane.f32.xlu0 %v2533
        %v2535 = vpop.xlane.xlu0 %2534
        %v2536 = vrcp.pop %v2532
        %v2537 = vmul.f32 %v2527, %v2536
        %v2538 = vrcp.pop %v2535
        %v2539 = vmul.f32 %v2529, %v2538
        %2540 = vrot.lane.b32.xlu0 %v1020, 112
        %v2541 = vpop.permute.xlu0 %2540
        %v2544 = vsel %vm1029, %v2537, 0
        %2546 = vmatprep.subr.mxu0 0.0
        %2547 = vmatpush1.msra.mxu0 %v2541
        %2548 = vmatprep.subr.mxu0 0.0
        %2549 = vmatpush1.msra.mxu0 0.0
        %2550 = vmatprep.subr.mxu0 0.0
        %2551 = vmatpush1.msra.mxu0 0.0
        %2552 = vmatprep.subr.mxu0 0.0
        %2553 = vmatpush1.msra.mxu0 0.0
        %2554 = vmatprep.subr.mxu0 0.0
        %2555 = vmatpush1.msra.mxu0 0.0
        %2556 = vmatprep.subr.mxu0 0.0
        %2557 = vmatpush1.msra.mxu0 0.0
        %2558 = vmatprep.subr.mxu0 0.0
        %2559 = vmatpush1.msra.mxu0 0.0
        %2560 = vmatprep.subr.mxu0 0.0
        %2561 = vmatpush1.msra.mxu0 0.0
        %2562 = vmatprep.subr.mxu0 0.0
        %2563 = vmatpush1.msra.mxu0 0.0
        %2564 = vmatprep.subr.mxu0 0.0
        %2565 = vmatpush1.msra.mxu0 0.0
        %2566 = vmatprep.subr.mxu0 0.0
        %2567 = vmatpush1.msra.mxu0 0.0
        %2568 = vmatprep.subr.mxu0 0.0
        %2569 = vmatpush1.msra.mxu0 0.0
        %2570 = vmatprep.subr.mxu0 0.0
        %2571 = vmatpush1.msra.mxu0 0.0
        %2572 = vmatprep.subr.mxu0 0.0
        %2573 = vmatpush1.msra.mxu0 0.0
        %2574 = vmatprep.subr.mxu0 0.0
        %2575 = vmatpush1.msra.mxu0 0.0
        %2576 = vmatprep.subr.mxu0 0.0
        %2577 = vmatpush1.msra.mxu0 0.0
        %2578 = vmatprep.subr.mxu0 0.0
        %2579 = vmatpush1.msra.mxu0 0.0
        %2580 = vmatprep.subr.mxu0 0.0
        %2581 = vmatpush1.msra.mxu0 0.0
        %2582 = vmatprep.subr.mxu0 0.0
        %2583 = vmatpush1.msra.mxu0 0.0
        %2584 = vmatprep.subr.mxu0 0.0
        %2585 = vmatpush1.msra.mxu0 0.0
        %2586 = vmatprep.subr.mxu0 0.0
        %2587 = vmatpush1.msra.mxu0 0.0
        %2588 = vmatprep.subr.mxu0 0.0
        %2589 = vmatpush1.msra.mxu0 0.0
        %2590 = vmatprep.subr.mxu0 0.0
        %2591 = vmatpush1.msra.mxu0 0.0
        %2592 = vmatprep.subr.mxu0 0.0
        %2593 = vmatpush1.msra.mxu0 0.0
        %2594 = vmatprep.subr.mxu0 0.0
        %2595 = vmatpush1.msra.mxu0 0.0
        %2596 = vmatprep.subr.mxu0 0.0
        %2597 = vmatpush1.msra.mxu0 0.0
        %2598 = vmatprep.subr.mxu0 0.0
        %2599 = vmatpush1.msra.mxu0 0.0
        %2600 = vmatprep.subr.mxu0 0.0
        %2601 = vmatpush1.msra.mxu0 0.0
        %2602 = vmatprep.subr.mxu0 0.0
        %2603 = vmatpush1.msra.mxu0 0.0
        %2604 = vmatprep.subr.mxu0 0.0
        %2605 = vmatpush1.msra.mxu0 0.0
        %2606 = vmatprep.subr.mxu0 0.0
        %2607 = vmatpush1.msra.mxu0 0.0
        %2608 = vmatprep.subr.mxu0 0.0
        %2609 = vmatpush1.msra.mxu0 0.0
        %2610 = vmatprep.mubr.f32.mxu0 0.0
        %2611 = vmatmul.mubr.f32.gmra.mrb[0].mxu0 %v2544
        %v2612 = vpop.f32.mrb[0].mxu0
        %v2613 = vadd.f32 0.0, %v2612
        %v2614 = vpop.f32.mrb[0].mxu0
        %2615 = vdwg.mxu0
        %2616 = vrot.lane.b32.xlu0 %v1025, 112
        %v2617 = vpop.permute.xlu0 %2616
        %v2620 = vsel %vm1029, %v2539, 0
        %2622 = vmatprep.subr.mxu0 0.0
        %2623 = vmatpush1.msra.mxu0 %v2617
        %2624 = vmatprep.subr.mxu0 0.0
        %2625 = vmatpush1.msra.mxu0 0.0
        %2626 = vmatprep.subr.mxu0 0.0
        %2627 = vmatpush1.msra.mxu0 0.0
        %2628 = vmatprep.subr.mxu0 0.0
        %2629 = vmatpush1.msra.mxu0 0.0
        %2630 = vmatprep.subr.mxu0 0.0
        %2631 = vmatpush1.msra.mxu0 0.0
        %2632 = vmatprep.subr.mxu0 0.0
        %2633 = vmatpush1.msra.mxu0 0.0
        %2634 = vmatprep.subr.mxu0 0.0
        %2635 = vmatpush1.msra.mxu0 0.0
        %2636 = vmatprep.subr.mxu0 0.0
        %2637 = vmatpush1.msra.mxu0 0.0
        %2638 = vmatprep.subr.mxu0 0.0
        %2639 = vmatpush1.msra.mxu0 0.0
        %2640 = vmatprep.subr.mxu0 0.0
        %2641 = vmatpush1.msra.mxu0 0.0
        %2642 = vmatprep.subr.mxu0 0.0
        %2643 = vmatpush1.msra.mxu0 0.0
        %2644 = vmatprep.subr.mxu0 0.0
        %2645 = vmatpush1.msra.mxu0 0.0
        %2646 = vmatprep.subr.mxu0 0.0
        %2647 = vmatpush1.msra.mxu0 0.0
        %2648 = vmatprep.subr.mxu0 0.0
        %2649 = vmatpush1.msra.mxu0 0.0
        %2650 = vmatprep.subr.mxu0 0.0
        %2651 = vmatpush1.msra.mxu0 0.0
        %2652 = vmatprep.subr.mxu0 0.0
        %2653 = vmatpush1.msra.mxu0 0.0
        %2654 = vmatprep.subr.mxu0 0.0
        %2655 = vmatpush1.msra.mxu0 0.0
        %2656 = vmatprep.subr.mxu0 0.0
        %2657 = vmatpush1.msra.mxu0 0.0
        %2658 = vmatprep.subr.mxu0 0.0
        %2659 = vmatpush1.msra.mxu0 0.0
        %2660 = vmatprep.subr.mxu0 0.0
        %2661 = vmatpush1.msra.mxu0 0.0
        %2662 = vmatprep.subr.mxu0 0.0
        %2663 = vmatpush1.msra.mxu0 0.0
        %2664 = vmatprep.subr.mxu0 0.0
        %2665 = vmatpush1.msra.mxu0 0.0
        %2666 = vmatprep.subr.mxu0 0.0
        %2667 = vmatpush1.msra.mxu0 0.0
        %2668 = vmatprep.subr.mxu0 0.0
        %2669 = vmatpush1.msra.mxu0 0.0
        %2670 = vmatprep.subr.mxu0 0.0
        %2671 = vmatpush1.msra.mxu0 0.0
        %2672 = vmatprep.subr.mxu0 0.0
        %2673 = vmatpush1.msra.mxu0 0.0
        %2674 = vmatprep.subr.mxu0 0.0
        %2675 = vmatpush1.msra.mxu0 0.0
        %2676 = vmatprep.subr.mxu0 0.0
        %2677 = vmatpush1.msra.mxu0 0.0
        %2678 = vmatprep.subr.mxu0 0.0
        %2679 = vmatpush1.msra.mxu0 0.0
        %2680 = vmatprep.subr.mxu0 0.0
        %2681 = vmatpush1.msra.mxu0 0.0
        %2682 = vmatprep.subr.mxu0 0.0
        %2683 = vmatpush1.msra.mxu0 0.0
        %2684 = vmatprep.subr.mxu0 0.0
        %2685 = vmatpush1.msra.mxu0 0.0
        %2686 = vmatprep.mubr.f32.mxu0 0.0
        %2687 = vmatmul.mubr.f32.gmra.mrb[0].mxu0 %v2620
        %v2688 = vpop.f32.mrb[0].mxu0
        %v2689 = vadd.f32 0.0, %v2688
        %v2690 = vpop.f32.mrb[0].mxu0
        %2691 = vdwg.mxu0
        %2692 = vrot.lane.b32.xlu0 %v832, 104
        %v2693 = vpop.permute.xlu0 %2692
        %2694 = vrot.lane.b32.xlu0 %v929, 104
        %v2695 = vpop.permute.xlu0 %2694
        %v2696 = vsel %vm1029, %v2693, 0
        %v2698 = vsel %vm1029, %v2695, 0
        %2700 = vmatprep.subr.mxu0 0.0
        %2701 = vmatpush1.xpose.msra.mxu0 %v2698
        %2702 = vmatprep.subr.mxu0 0.0
        %2703 = vmatpush1.xpose.msra.mxu0 0.0
        %2704 = vmatprep.subr.mxu0 0.0
        %2705 = vmatpush1.xpose.msra.mxu0 0.0
        %2706 = vmatprep.subr.mxu0 0.0
        %2707 = vmatpush1.xpose.msra.mxu0 0.0
        %2708 = vmatprep.subr.mxu0 0.0
        %2709 = vmatpush1.xpose.msra.mxu0 0.0
        %2710 = vmatprep.subr.mxu0 0.0
        %2711 = vmatpush1.xpose.msra.mxu0 0.0
        %2712 = vmatprep.subr.mxu0 0.0
        %2713 = vmatpush1.xpose.msra.mxu0 0.0
        %2714 = vmatprep.subr.mxu0 0.0
        %2715 = vmatpush1.xpose.msra.mxu0 0.0
        %2716 = vmatprep.subr.mxu0 0.0
        %2717 = vmatpush1.xpose.msra.mxu0 0.0
        %2718 = vmatprep.subr.mxu0 0.0
        %2719 = vmatpush1.xpose.msra.mxu0 0.0
        %2720 = vmatprep.subr.mxu0 0.0
        %2721 = vmatpush1.xpose.msra.mxu0 0.0
        %2722 = vmatprep.subr.mxu0 0.0
        %2723 = vmatpush1.xpose.msra.mxu0 0.0
        %2724 = vmatprep.subr.mxu0 0.0
        %2725 = vmatpush1.xpose.msra.mxu0 0.0
        %2726 = vmatprep.subr.mxu0 0.0
        %2727 = vmatpush1.xpose.msra.mxu0 0.0
        %2728 = vmatprep.subr.mxu0 0.0
        %2729 = vmatpush1.xpose.msra.mxu0 0.0
        %2730 = vmatprep.subr.mxu0 0.0
        %2731 = vmatpush1.xpose.msra.mxu0 0.0
        %2732 = vmatprep.subr.mxu0 0.0
        %2733 = vmatpush1.xpose.msra.mxu0 0.0
        %2734 = vmatprep.subr.mxu0 0.0
        %2735 = vmatpush1.xpose.msra.mxu0 0.0
        %2736 = vmatprep.subr.mxu0 0.0
        %2737 = vmatpush1.xpose.msra.mxu0 0.0
        %2738 = vmatprep.subr.mxu0 0.0
        %2739 = vmatpush1.xpose.msra.mxu0 0.0
        %2740 = vmatprep.subr.mxu0 0.0
        %2741 = vmatpush1.xpose.msra.mxu0 0.0
        %2742 = vmatprep.subr.mxu0 0.0
        %2743 = vmatpush1.xpose.msra.mxu0 0.0
        %2744 = vmatprep.subr.mxu0 0.0
        %2745 = vmatpush1.xpose.msra.mxu0 0.0
        %2746 = vmatprep.subr.mxu0 0.0
        %2747 = vmatpush1.xpose.msra.mxu0 0.0
        %2748 = vmatprep.subr.mxu0 0.0
        %2749 = vmatpush1.xpose.msra.mxu0 0.0
        %2750 = vmatprep.subr.mxu0 0.0
        %2751 = vmatpush1.xpose.msra.mxu0 0.0
        %2752 = vmatprep.subr.mxu0 0.0
        %2753 = vmatpush1.xpose.msra.mxu0 0.0
        %2754 = vmatprep.subr.mxu0 0.0
        %2755 = vmatpush1.xpose.msra.mxu0 0.0
        %2756 = vmatprep.subr.mxu0 0.0
        %2757 = vmatpush1.xpose.msra.mxu0 0.0
        %2758 = vmatprep.subr.mxu0 0.0
        %2759 = vmatpush1.xpose.msra.mxu0 0.0
        %2760 = vmatprep.subr.mxu0 0.0
        %2761 = vmatpush1.xpose.msra.mxu0 0.0
        %2762 = vmatprep.subr.mxu0 0.0
        %2763 = vmatpush1.xpose.msra.mxu0 0.0
        %2764 = vmatprep.mubr.f32.mxu0 0.0
        %2765 = vmatmul.mubr.f32.gmra.mrb[0].mxu0 %v2696
        %v2766 = vpop.f32.mrb[0].mxu0
        %v2767 = vadd.f32 0.0, %v2766
        %v2768 = vpop.f32.mrb[0].mxu0
        %2769 = vdwg.mxu0
        %2770 = vrot.lane.b32.xlu0 %v837, 104
        %v2771 = vpop.permute.xlu0 %2770
        %2772 = vrot.lane.b32.xlu0 %v934, 104
        %v2773 = vpop.permute.xlu0 %2772
        %v2774 = vsel %vm1029, %v2771, 0
        %v2776 = vsel %vm1029, %v2773, 0
        %2778 = vmatprep.subr.mxu0 0.0
        %2779 = vmatpush1.xpose.msra.mxu0 %v2776
        %2780 = vmatprep.subr.mxu0 0.0
        %2781 = vmatpush1.xpose.msra.mxu0 0.0
        %2782 = vmatprep.subr.mxu0 0.0
        %2783 = vmatpush1.xpose.msra.mxu0 0.0
        %2784 = vmatprep.subr.mxu0 0.0
        %2785 = vmatpush1.xpose.msra.mxu0 0.0
        %2786 = vmatprep.subr.mxu0 0.0
        %2787 = vmatpush1.xpose.msra.mxu0 0.0
        %2788 = vmatprep.subr.mxu0 0.0
        %2789 = vmatpush1.xpose.msra.mxu0 0.0
        %2790 = vmatprep.subr.mxu0 0.0
        %2791 = vmatpush1.xpose.msra.mxu0 0.0
        %2792 = vmatprep.subr.mxu0 0.0
        %2793 = vmatpush1.xpose.msra.mxu0 0.0
        %2794 = vmatprep.subr.mxu0 0.0
        %2795 = vmatpush1.xpose.msra.mxu0 0.0
        %2796 = vmatprep.subr.mxu0 0.0
        %2797 = vmatpush1.xpose.msra.mxu0 0.0
        %2798 = vmatprep.subr.mxu0 0.0
        %2799 = vmatpush1.xpose.msra.mxu0 0.0
        %2800 = vmatprep.subr.mxu0 0.0
        %2801 = vmatpush1.xpose.msra.mxu0 0.0
        %2802 = vmatprep.subr.mxu0 0.0
        %2803 = vmatpush1.xpose.msra.mxu0 0.0
        %2804 = vmatprep.subr.mxu0 0.0
        %2805 = vmatpush1.xpose.msra.mxu0 0.0
        %2806 = vmatprep.subr.mxu0 0.0
        %2807 = vmatpush1.xpose.msra.mxu0 0.0
        %2808 = vmatprep.subr.mxu0 0.0
        %2809 = vmatpush1.xpose.msra.mxu0 0.0
        %2810 = vmatprep.subr.mxu0 0.0
        %2811 = vmatpush1.xpose.msra.mxu0 0.0
        %2812 = vmatprep.subr.mxu0 0.0
        %2813 = vmatpush1.xpose.msra.mxu0 0.0
        %2814 = vmatprep.subr.mxu0 0.0
        %2815 = vmatpush1.xpose.msra.mxu0 0.0
        %2816 = vmatprep.subr.mxu0 0.0
        %2817 = vmatpush1.xpose.msra.mxu0 0.0
        %2818 = vmatprep.subr.mxu0 0.0
        %2819 = vmatpush1.xpose.msra.mxu0 0.0
        %2820 = vmatprep.subr.mxu0 0.0
        %2821 = vmatpush1.xpose.msra.mxu0 0.0
        %2822 = vmatprep.subr.mxu0 0.0
        %2823 = vmatpush1.xpose.msra.mxu0 0.0
        %2824 = vmatprep.subr.mxu0 0.0
        %2825 = vmatpush1.xpose.msra.mxu0 0.0
        %2826 = vmatprep.subr.mxu0 0.0
        %2827 = vmatpush1.xpose.msra.mxu0 0.0
        %2828 = vmatprep.subr.mxu0 0.0
        %2829 = vmatpush1.xpose.msra.mxu0 0.0
        %2830 = vmatprep.subr.mxu0 0.0
        %2831 = vmatpush1.xpose.msra.mxu0 0.0
        %2832 = vmatprep.subr.mxu0 0.0
        %2833 = vmatpush1.xpose.msra.mxu0 0.0
        %2834 = vmatprep.subr.mxu0 0.0
        %2835 = vmatpush1.xpose.msra.mxu0 0.0
        %2836 = vmatprep.subr.mxu0 0.0
        %2837 = vmatpush1.xpose.msra.mxu0 0.0
        %2838 = vmatprep.subr.mxu0 0.0
        %2839 = vmatpush1.xpose.msra.mxu0 0.0
        %2840 = vmatprep.subr.mxu0 0.0
        %2841 = vmatpush1.xpose.msra.mxu0 0.0
        %2842 = vmatprep.mubr.f32.mxu0 0.0
        %2843 = vmatmul.mubr.f32.gmra.mrb[0].mxu0 %v2774
        %v2844 = vpop.f32.mrb[0].mxu0
        %v2845 = vadd.f32 0.0, %v2844
        %v2846 = vpop.f32.mrb[0].mxu0
        %2847 = vdwg.mxu0
        %v2848 = vmul.f32 %v2767, 0.35355338
        %v2849 = vmul.f32 %v2845, 0.35355338
        %s2850 = scalar_lea.vmem %s8, 24
        %v2851 = vld [vmem:[%s2850] sm:$0xff]
        %s2852 = scalar_lea.vmem %s10, 3
        %v2853 = vld [vmem:[%s2852] sm:$0x1]
        %v2855 = vlaneseq
        %v2856 = vshrl.u32 %v2855, 7
        %v2857 = vsub.s32 0, %v2856
        %v2858 = vrot.slane %v2853, %v2857
        %v2860 = vmul.f32 %v1103, %v2858
        %v2861 = vmul.f32 %v1108, %v2858
        %v2863 = vsel %vm1029, %v2848, 0
        %v2866 = vsel %vm1029, %v2849, 0
        %2868 = vmatprep.subr.mxu0 0.0
        %2869 = vmatpush1.msra.mxu0 %v2851
        %2870 = vmatprep.subr.mxu0 0.0
        %2871 = vmatpush1.msra.mxu0 0.0
        %2872 = vmatprep.subr.mxu0 0.0
        %2873 = vmatpush1.msra.mxu0 0.0
        %2874 = vmatprep.subr.mxu0 0.0
        %2875 = vmatpush1.msra.mxu0 0.0
        %2876 = vmatprep.subr.mxu0 0.0
        %2877 = vmatpush1.msra.mxu0 0.0
        %2878 = vmatprep.subr.mxu0 0.0
        %2879 = vmatpush1.msra.mxu0 0.0
        %2880 = vmatprep.subr.mxu0 0.0
        %2881 = vmatpush1.msra.mxu0 0.0
        %2882 = vmatprep.subr.mxu0 0.0
        %2883 = vmatpush1.msra.mxu0 0.0
        %2884 = vmatprep.subr.mxu0 0.0
        %2885 = vmatpush1.msra.mxu0 0.0
        %2886 = vmatprep.subr.mxu0 0.0
        %2887 = vmatpush1.msra.mxu0 0.0
        %2888 = vmatprep.subr.mxu0 0.0
        %2889 = vmatpush1.msra.mxu0 0.0
        %2890 = vmatprep.subr.mxu0 0.0
        %2891 = vmatpush1.msra.mxu0 0.0
        %2892 = vmatprep.subr.mxu0 0.0
        %2893 = vmatpush1.msra.mxu0 0.0
        %2894 = vmatprep.subr.mxu0 0.0
        %2895 = vmatpush1.msra.mxu0 0.0
        %2896 = vmatprep.subr.mxu0 0.0
        %2897 = vmatpush1.msra.mxu0 0.0
        %2898 = vmatprep.subr.mxu0 0.0
        %2899 = vmatpush1.msra.mxu0 0.0
        %2900 = vmatprep.subr.mxu0 0.0
        %2901 = vmatpush1.msra.mxu0 0.0
        %2902 = vmatprep.subr.mxu0 0.0
        %2903 = vmatpush1.msra.mxu0 0.0
        %2904 = vmatprep.subr.mxu0 0.0
        %2905 = vmatpush1.msra.mxu0 0.0
        %2906 = vmatprep.subr.mxu0 0.0
        %2907 = vmatpush1.msra.mxu0 0.0
        %2908 = vmatprep.subr.mxu0 0.0
        %2909 = vmatpush1.msra.mxu0 0.0
        %2910 = vmatprep.subr.mxu0 0.0
        %2911 = vmatpush1.msra.mxu0 0.0
        %2912 = vmatprep.subr.mxu0 0.0
        %2913 = vmatpush1.msra.mxu0 0.0
        %2914 = vmatprep.subr.mxu0 0.0
        %2915 = vmatpush1.msra.mxu0 0.0
        %2916 = vmatprep.subr.mxu0 0.0
        %2917 = vmatpush1.msra.mxu0 0.0
        %2918 = vmatprep.subr.mxu0 0.0
        %2919 = vmatpush1.msra.mxu0 0.0
        %2920 = vmatprep.subr.mxu0 0.0
        %2921 = vmatpush1.msra.mxu0 0.0
        %2922 = vmatprep.subr.mxu0 0.0
        %2923 = vmatpush1.msra.mxu0 0.0
        %2924 = vmatprep.subr.mxu0 0.0
        %2925 = vmatpush1.msra.mxu0 0.0
        %2926 = vmatprep.subr.mxu0 0.0
        %2927 = vmatpush1.msra.mxu0 0.0
        %2928 = vmatprep.subr.mxu0 0.0
        %2929 = vmatpush1.msra.mxu0 0.0
        %2930 = vmatprep.subr.mxu0 0.0
        %2931 = vmatpush1.msra.mxu0 0.0
        %2932 = vmatprep.mubr.f32.mxu0 0.0
        %2933 = vmatmul.mubr.f32.gmra.mrb[0].mxu0 %v2863
        %v2934 = vpop.f32.mrb[0].mxu0
        %v2935 = vadd.f32 %v2860, %v2934
        %v2936 = vpop.f32.mrb[0].mxu0
        %2937 = vmatprep.mubr.f32.mxu0 0.0
        %2938 = vmatmul.mubr.f32.gmra.mrb[0].mxu0 %v2866
        %v2939 = vpop.f32.mrb[0].mxu0
        %v2940 = vadd.f32 %v2861, %v2939
        %v2941 = vpop.f32.mrb[0].mxu0
        %2942 = vdwg.mxu0
        %s2943 = scalar_lea.vmem %s11, 3
        %v2944 = vld [vmem:[%s2943] sm:$0x1]
        %v2946 = vlaneseq
        %v2947 = vshrl.u32 %v2946, 7
        %v2948 = vsub.s32 0, %v2947
        %v2949 = vrot.slane %v2944, %v2948
        %v2951 = vadd.f32 %v2935, %v2949
        %v2952 = vadd.f32 %v2940, %v2949
        %v2953 = vmax.f32 %v2951, 0.0
        %v2954 = vmax.f32 %v2952, 0.0
        %s2955 = scalar_lea.vmem %s12, 384
        %v2956 = vld [vmem:[%s2955] sm:$0xff]
        %v2957 = vld [vmem:[%s2955 + $0x8] sm:$0xff]
        %v2958 = vld [vmem:[%s2955 + $0x10] sm:$0xff]
        %v2959 = vld [vmem:[%s2955 + $0x18] sm:$0xff]
        %v2960 = vld [vmem:[%s2955 + $0x20] sm:$0xff]
        %v2961 = vld [vmem:[%s2955 + $0x28] sm:$0xff]
        %v2962 = vld [vmem:[%s2955 + $0x30] sm:$0xff]
        %v2963 = vld [vmem:[%s2955 + $0x38] sm:$0xff]
        %v2964 = vld [vmem:[%s2955 + $0x40] sm:$0xff]
        %v2965 = vld [vmem:[%s2955 + $0x48] sm:$0xff]
        %v2966 = vld [vmem:[%s2955 + $0x50] sm:$0xff]
        %v2967 = vld [vmem:[%s2955 + $0x58] sm:$0xff]
        %v2968 = vld [vmem:[%s2955 + $0x60] sm:$0xff]
        %v2969 = vld [vmem:[%s2955 + $0x68] sm:$0xff]
        %v2970 = vld [vmem:[%s2955 + $0x70] sm:$0xff]
        %v2971 = vld [vmem:[%s2955 + $0x78] sm:$0xff]
        %s2972 = sld [smem:[#allocation2 + $0x3]]
        %v2973 = vstv %s2972
        %2974 = vmatprep.subr.mxu0 0.0
        %2975 = vmatpush1.msra.mxu0 %v2956
        %2976 = vmatprep.subr.mxu0 0.0
        %2977 = vmatpush1.msra.mxu0 %v2957
        %2978 = vmatprep.subr.mxu0 0.0
        %2979 = vmatpush1.msra.mxu0 %v2958
        %2980 = vmatprep.subr.mxu0 0.0
        %2981 = vmatpush1.msra.mxu0 %v2959
        %2982 = vmatprep.subr.mxu0 0.0
        %2983 = vmatpush1.msra.mxu0 %v2960
        %2984 = vmatprep.subr.mxu0 0.0
        %2985 = vmatpush1.msra.mxu0 %v2961
        %2986 = vmatprep.subr.mxu0 0.0
        %2987 = vmatpush1.msra.mxu0 %v2962
        %2988 = vmatprep.subr.mxu0 0.0
        %2989 = vmatpush1.msra.mxu0 %v2963
        %2990 = vmatprep.subr.mxu0 0.0
        %2991 = vmatpush1.msra.mxu0 %v2964
        %2992 = vmatprep.subr.mxu0 0.0
        %2993 = vmatpush1.msra.mxu0 %v2965
        %2994 = vmatprep.subr.mxu0 0.0
        %2995 = vmatpush1.msra.mxu0 %v2966
        %2996 = vmatprep.subr.mxu0 0.0
        %2997 = vmatpush1.msra.mxu0 %v2967
        %2998 = vmatprep.subr.mxu0 0.0
        %2999 = vmatpush1.msra.mxu0 %v2968
        %3000 = vmatprep.subr.mxu0 0.0
        %3001 = vmatpush1.msra.mxu0 %v2969
        %3002 = vmatprep.subr.mxu0 0.0
        %3003 = vmatpush1.msra.mxu0 %v2970
        %3004 = vmatprep.subr.mxu0 0.0
        %3005 = vmatpush1.msra.mxu0 %v2971
        %3006 = vmatprep.subr.mxu0 0.0
        %3007 = vmatpush1.msra.mxu0 0.0
        %3008 = vmatprep.subr.mxu0 0.0
        %3009 = vmatpush1.msra.mxu0 0.0
        %3010 = vmatprep.subr.mxu0 0.0
        %3011 = vmatpush1.msra.mxu0 0.0
        %3012 = vmatprep.subr.mxu0 0.0
        %3013 = vmatpush1.msra.mxu0 0.0
        %3014 = vmatprep.subr.mxu0 0.0
        %3015 = vmatpush1.msra.mxu0 0.0
        %3016 = vmatprep.subr.mxu0 0.0
        %3017 = vmatpush1.msra.mxu0 0.0
        %3018 = vmatprep.subr.mxu0 0.0
        %3019 = vmatpush1.msra.mxu0 0.0
        %3020 = vmatprep.subr.mxu0 0.0
        %3021 = vmatpush1.msra.mxu0 0.0
        %3022 = vmatprep.subr.mxu0 0.0
        %3023 = vmatpush1.msra.mxu0 0.0
        %3024 = vmatprep.subr.mxu0 0.0
        %3025 = vmatpush1.msra.mxu0 0.0
        %3026 = vmatprep.subr.mxu0 0.0
        %3027 = vmatpush1.msra.mxu0 0.0
        %3028 = vmatprep.subr.mxu0 0.0
        %3029 = vmatpush1.msra.mxu0 0.0
        %3030 = vmatprep.subr.mxu0 0.0
        %3031 = vmatpush1.msra.mxu0 0.0
        %3032 = vmatprep.subr.mxu0 0.0
        %3033 = vmatpush1.msra.mxu0 0.0
        %3034 = vmatprep.subr.mxu0 0.0
        %3035 = vmatpush1.msra.mxu0 0.0
        %3036 = vmatprep.subr.mxu0 0.0
        %3037 = vmatpush1.msra.mxu0 0.0
        %3038 = vmatprep.mubr.f32.mxu0 0.0
        %3039 = vmatmul.mubr.f32.gmra.mrb[0].mxu0 %v2953
        %v3040 = vpop.f32.mrb[0].mxu0
        %v3041 = vadd.f32 %v2973, %v3040
        %v3042 = vpop.f32.mrb[0].mxu0
        %3043 = vmatprep.mubr.f32.mxu0 0.0
        %3044 = vmatmul.mubr.f32.gmra.mrb[0].mxu0 %v2954
        %v3045 = vpop.f32.mrb[0].mxu0
        %v3046 = vadd.f32 %v2973, %v3045
        %v3047 = vpop.f32.mrb[0].mxu0
        %3048 = vdwg.mxu0
        %v3049 = vsel %vm1029, %v3041, -inf
        %3050 = vmax.xlane.f32.xlu0 %v3049
        %v3051 = vpop.xlane.xlu0 %3050
        %v3052 = vsel %vm1029, %v3046, -inf
        %3053 = vmax.xlane.f32.xlu0 %v3052
        %v3054 = vpop.xlane.xlu0 %3053
        %v3055 = vsub.f32 %v3041, %v3051
        %v3056 = vsub.f32 %v3046, %v3054
        %v3057 = vmul.f32 %v3055, 1.442695
        %v3058 = vpow.pop %v3057
        %v3059 = vmul.f32 %v3056, 1.442695
        %v3060 = vpow.pop %v3059
        %v3061 = vsel %vm1029, %v3058, 0.0
        %3062 = vadd.xlane.f32.xlu0 %v3061
        %v3063 = vpop.xlane.xlu0 %3062
        %v3064 = vsel %vm1029, %v3060, 0.0
        %3065 = vadd.xlane.f32.xlu0 %v3064
        %v3066 = vpop.xlane.xlu0 %3065
        %v3067 = vrcp.pop %v3063
        %v3068 = vmul.f32 %v3058, %v3067
        %v3069 = vrcp.pop %v3066
        %v3070 = vmul.f32 %v3060, %v3069
        %3071 = vrot.lane.b32.xlu0 %v1020, 104
        %v3072 = vpop.permute.xlu0 %3071
        %v3075 = vsel %vm1029, %v3068, 0
        %3077 = vmatprep.subr.mxu0 0.0
        %3078 = vmatpush1.msra.mxu0 %v3072
        %3079 = vmatprep.subr.mxu0 0.0
        %3080 = vmatpush1.msra.mxu0 0.0
        %3081 = vmatprep.subr.mxu0 0.0
        %3082 = vmatpush1.msra.mxu0 0.0
        %3083 = vmatprep.subr.mxu0 0.0
        %3084 = vmatpush1.msra.mxu0 0.0
        %3085 = vmatprep.subr.mxu0 0.0
        %3086 = vmatpush1.msra.mxu0 0.0
        %3087 = vmatprep.subr.mxu0 0.0
        %3088 = vmatpush1.msra.mxu0 0.0
        %3089 = vmatprep.subr.mxu0 0.0
        %3090 = vmatpush1.msra.mxu0 0.0
        %3091 = vmatprep.subr.mxu0 0.0
        %3092 = vmatpush1.msra.mxu0 0.0
        %3093 = vmatprep.subr.mxu0 0.0
        %3094 = vmatpush1.msra.mxu0 0.0
        %3095 = vmatprep.subr.mxu0 0.0
        %3096 = vmatpush1.msra.mxu0 0.0
        %3097 = vmatprep.subr.mxu0 0.0
        %3098 = vmatpush1.msra.mxu0 0.0
        %3099 = vmatprep.subr.mxu0 0.0
        %3100 = vmatpush1.msra.mxu0 0.0
        %3101 = vmatprep.subr.mxu0 0.0
        %3102 = vmatpush1.msra.mxu0 0.0
        %3103 = vmatprep.subr.mxu0 0.0
        %3104 = vmatpush1.msra.mxu0 0.0
        %3105 = vmatprep.subr.mxu0 0.0
        %3106 = vmatpush1.msra.mxu0 0.0
        %3107 = vmatprep.subr.mxu0 0.0
        %3108 = vmatpush1.msra.mxu0 0.0
        %3109 = vmatprep.subr.mxu0 0.0
        %3110 = vmatpush1.msra.mxu0 0.0
        %3111 = vmatprep.subr.mxu0 0.0
        %3112 = vmatpush1.msra.mxu0 0.0
        %3113 = vmatprep.subr.mxu0 0.0
        %3114 = vmatpush1.msra.mxu0 0.0
        %3115 = vmatprep.subr.mxu0 0.0
        %3116 = vmatpush1.msra.mxu0 0.0
        %3117 = vmatprep.subr.mxu0 0.0
        %3118 = vmatpush1.msra.mxu0 0.0
        %3119 = vmatprep.subr.mxu0 0.0
        %3120 = vmatpush1.msra.mxu0 0.0
        %3121 = vmatprep.subr.mxu0 0.0
        %3122 = vmatpush1.msra.mxu0 0.0
        %3123 = vmatprep.subr.mxu0 0.0
        %3124 = vmatpush1.msra.mxu0 0.0
        %3125 = vmatprep.subr.mxu0 0.0
        %3126 = vmatpush1.msra.mxu0 0.0
        %3127 = vmatprep.subr.mxu0 0.0
        %3128 = vmatpush1.msra.mxu0 0.0
        %3129 = vmatprep.subr.mxu0 0.0
        %3130 = vmatpush1.msra.mxu0 0.0
        %3131 = vmatprep.subr.mxu0 0.0
        %3132 = vmatpush1.msra.mxu0 0.0
        %3133 = vmatprep.subr.mxu0 0.0
        %3134 = vmatpush1.msra.mxu0 0.0
        %3135 = vmatprep.subr.mxu0 0.0
        %3136 = vmatpush1.msra.mxu0 0.0
        %3137 = vmatprep.subr.mxu0 0.0
        %3138 = vmatpush1.msra.mxu0 0.0
        %3139 = vmatprep.subr.mxu0 0.0
        %3140 = vmatpush1.msra.mxu0 0.0
        %3141 = vmatprep.mubr.f32.mxu0 0.0
        %3142 = vmatmul.mubr.f32.gmra.mrb[0].mxu0 %v3075
        %v3143 = vpop.f32.mrb[0].mxu0
        %v3144 = vadd.f32 0.0, %v3143
        %v3145 = vpop.f32.mrb[0].mxu0
        %3146 = vdwg.mxu0
        %3147 = vrot.lane.b32.xlu0 %v1025, 104
        %v3148 = vpop.permute.xlu0 %3147
        %v3151 = vsel %vm1029, %v3070, 0
        %3153 = vmatprep.subr.mxu0 0.0
        %3154 = vmatpush1.msra.mxu0 %v3148
        %3155 = vmatprep.subr.mxu0 0.0
        %3156 = vmatpush1.msra.mxu0 0.0
        %3157 = vmatprep.subr.mxu0 0.0
        %3158 = vmatpush1.msra.mxu0 0.0
        %3159 = vmatprep.subr.mxu0 0.0
        %3160 = vmatpush1.msra.mxu0 0.0
        %3161 = vmatprep.subr.mxu0 0.0
        %3162 = vmatpush1.msra.mxu0 0.0
        %3163 = vmatprep.subr.mxu0 0.0
        %3164 = vmatpush1.msra.mxu0 0.0
        %3165 = vmatprep.subr.mxu0 0.0
        %3166 = vmatpush1.msra.mxu0 0.0
        %3167 = vmatprep.subr.mxu0 0.0
        %3168 = vmatpush1.msra.mxu0 0.0
        %3169 = vmatprep.subr.mxu0 0.0
        %3170 = vmatpush1.msra.mxu0 0.0
        %3171 = vmatprep.subr.mxu0 0.0
        %3172 = vmatpush1.msra.mxu0 0.0
        %3173 = vmatprep.subr.mxu0 0.0
        %3174 = vmatpush1.msra.mxu0 0.0
        %3175 = vmatprep.subr.mxu0 0.0
        %3176 = vmatpush1.msra.mxu0 0.0
        %3177 = vmatprep.subr.mxu0 0.0
        %3178 = vmatpush1.msra.mxu0 0.0
        %3179 = vmatprep.subr.mxu0 0.0
        %3180 = vmatpush1.msra.mxu0 0.0
        %3181 = vmatprep.subr.mxu0 0.0
        %3182 = vmatpush1.msra.mxu0 0.0
        %3183 = vmatprep.subr.mxu0 0.0
        %3184 = vmatpush1.msra.mxu0 0.0
        %3185 = vmatprep.subr.mxu0 0.0
        %3186 = vmatpush1.msra.mxu0 0.0
        %3187 = vmatprep.subr.mxu0 0.0
        %3188 = vmatpush1.msra.mxu0 0.0
        %3189 = vmatprep.subr.mxu0 0.0
        %3190 = vmatpush1.msra.mxu0 0.0
        %3191 = vmatprep.subr.mxu0 0.0
        %3192 = vmatpush1.msra.mxu0 0.0
        %3193 = vmatprep.subr.mxu0 0.0
        %3194 = vmatpush1.msra.mxu0 0.0
        %3195 = vmatprep.subr.mxu0 0.0
        %3196 = vmatpush1.msra.mxu0 0.0
        %3197 = vmatprep.subr.mxu0 0.0
        %3198 = vmatpush1.msra.mxu0 0.0
        %3199 = vmatprep.subr.mxu0 0.0
        %3200 = vmatpush1.msra.mxu0 0.0
        %3201 = vmatprep.subr.mxu0 0.0
        %3202 = vmatpush1.msra.mxu0 0.0
        %3203 = vmatprep.subr.mxu0 0.0
        %3204 = vmatpush1.msra.mxu0 0.0
        %3205 = vmatprep.subr.mxu0 0.0
        %3206 = vmatpush1.msra.mxu0 0.0
        %3207 = vmatprep.subr.mxu0 0.0
        %3208 = vmatpush1.msra.mxu0 0.0
        %3209 = vmatprep.subr.mxu0 0.0
        %3210 = vmatpush1.msra.mxu0 0.0
        %3211 = vmatprep.subr.mxu0 0.0
        %3212 = vmatpush1.msra.mxu0 0.0
        %3213 = vmatprep.subr.mxu0 0.0
        %3214 = vmatpush1.msra.mxu0 0.0
        %3215 = vmatprep.subr.mxu0 0.0
        %3216 = vmatpush1.msra.mxu0 0.0
        %3217 = vmatprep.mubr.f32.mxu0 0.0
        %3218 = vmatmul.mubr.f32.gmra.mrb[0].mxu0 %v3151
        %v3219 = vpop.f32.mrb[0].mxu0
        %v3220 = vadd.f32 0.0, %v3219
        %v3221 = vpop.f32.mrb[0].mxu0
        %3222 = vdwg.mxu0
        %3225 = vrot.lane.b32.xlu0 %v2081, 8
        %v3226 = vpop.permute.xlu0 %3225
        %3227 = vrot.lane.b32.xlu0 %v2158, 8
        %v3228 = vpop.permute.xlu0 %3227
        %3233 = vrot.lane.b32.xlu0 %v2613, 16
        %v3234 = vpop.permute.xlu0 %3233
        %3235 = vrot.lane.b32.xlu0 %v2689, 16
        %v3236 = vpop.permute.xlu0 %3235
        %3241 = vrot.lane.b32.xlu0 %v3144, 24
        %v3242 = vpop.permute.xlu0 %3241
        %3243 = vrot.lane.b32.xlu0 %v3220, 24
        %v3244 = vpop.permute.xlu0 %3243
        %v3247 = vsel %vm1029, %v1552, %v3226
        %v3248 = vsel %vm1029, %v1625, %v3228
        %vm3249 = vcmask 130048
        %v3250 = vsel %vm3249, %v3247, %v3234
        %v3251 = vsel %vm3249, %v3248, %v3236
        %vm3252 = vcmask 195584
        %v3253 = vsel %vm3252, %v3250, %v3242
        %v3254 = vsel %vm3252, %v3251, %v3244
        %v3255 = vld [vmem:[%s6] sm:$0xff]
        %v3256 = vld [vmem:[%s6 + $0x8] sm:$0xff]
        %v3257 = vld [vmem:[%s6 + $0x10] sm:$0xff]
        %v3258 = vld [vmem:[%s6 + $0x18] sm:$0xff]
        %v3259 = vld [vmem:[%s7] sm:$0x1]
        %v3261 = vlaneseq
        %v3262 = vshrl.u32 %v3261, 7
        %v3263 = vsub.s32 0, %v3262
        %v3264 = vrot.slane %v3259, %v3263
        %v3267 = vsel %vm746, %v3253, 0
        %v3270 = vsel %vm746, %v3254, 0
        %v3273 = vsel %vm746, %v3255, 0
        %v3276 = vsel %vm746, %v3256, 0
        %v3279 = vsel %vm746, %v3257, 0
        %v3282 = vsel %vm746, %v3258, 0
        %3284 = vmatprep.subr.mxu0 0.0
        %3285 = vmatpush1.xpose.msra.mxu0 %v3273
        %3286 = vmatprep.subr.mxu0 0.0
        %3287 = vmatpush1.xpose.msra.mxu0 %v3276
        %3288 = vmatprep.subr.mxu0 0.0
        %3289 = vmatpush1.xpose.msra.mxu0 %v3279
        %3290 = vmatprep.subr.mxu0 0.0
        %3291 = vmatpush1.xpose.msra.mxu0 %v3282
        %3292 = vmatprep.subr.mxu0 0.0
        %3293 = vmatpush1.xpose.msra.mxu0 0.0
        %3294 = vmatprep.subr.mxu0 0.0
        %3295 = vmatpush1.xpose.msra.mxu0 0.0
        %3296 = vmatprep.subr.mxu0 0.0
        %3297 = vmatpush1.xpose.msra.mxu0 0.0
        %3298 = vmatprep.subr.mxu0 0.0
        %3299 = vmatpush1.xpose.msra.mxu0 0.0
        %3300 = vmatprep.subr.mxu0 0.0
        %3301 = vmatpush1.xpose.msra.mxu0 0.0
        %3302 = vmatprep.subr.mxu0 0.0
        %3303 = vmatpush1.xpose.msra.mxu0 0.0
        %3304 = vmatprep.subr.mxu0 0.0
        %3305 = vmatpush1.xpose.msra.mxu0 0.0
        %3306 = vmatprep.subr.mxu0 0.0
        %3307 = vmatpush1.xpose.msra.mxu0 0.0
        %3308 = vmatprep.subr.mxu0 0.0
        %3309 = vmatpush1.xpose.msra.mxu0 0.0
        %3310 = vmatprep.subr.mxu0 0.0
        %3311 = vmatpush1.xpose.msra.mxu0 0.0
        %3312 = vmatprep.subr.mxu0 0.0
        %3313 = vmatpush1.xpose.msra.mxu0 0.0
        %3314 = vmatprep.subr.mxu0 0.0
        %3315 = vmatpush1.xpose.msra.mxu0 0.0
        %3316 = vmatprep.subr.mxu0 0.0
        %3317 = vmatpush1.xpose.msra.mxu0 0.0
        %3318 = vmatprep.subr.mxu0 0.0
        %3319 = vmatpush1.xpose.msra.mxu0 0.0
        %3320 = vmatprep.subr.mxu0 0.0
        %3321 = vmatpush1.xpose.msra.mxu0 0.0
        %3322 = vmatprep.subr.mxu0 0.0
        %3323 = vmatpush1.xpose.msra.mxu0 0.0
        %3324 = vmatprep.subr.mxu0 0.0
        %3325 = vmatpush1.xpose.msra.mxu0 0.0
        %3326 = vmatprep.subr.mxu0 0.0
        %3327 = vmatpush1.xpose.msra.mxu0 0.0
        %3328 = vmatprep.subr.mxu0 0.0
        %3329 = vmatpush1.xpose.msra.mxu0 0.0
        %3330 = vmatprep.subr.mxu0 0.0
        %3331 = vmatpush1.xpose.msra.mxu0 0.0
        %3332 = vmatprep.subr.mxu0 0.0
        %3333 = vmatpush1.xpose.msra.mxu0 0.0
        %3334 = vmatprep.subr.mxu0 0.0
        %3335 = vmatpush1.xpose.msra.mxu0 0.0
        %3336 = vmatprep.subr.mxu0 0.0
        %3337 = vmatpush1.xpose.msra.mxu0 0.0
        %3338 = vmatprep.subr.mxu0 0.0
        %3339 = vmatpush1.xpose.msra.mxu0 0.0
        %3340 = vmatprep.subr.mxu0 0.0
        %3341 = vmatpush1.xpose.msra.mxu0 0.0
        %3342 = vmatprep.subr.mxu0 0.0
        %3343 = vmatpush1.xpose.msra.mxu0 0.0
        %3344 = vmatprep.subr.mxu0 0.0
        %3345 = vmatpush1.xpose.msra.mxu0 0.0
        %3346 = vmatprep.subr.mxu0 0.0
        %3347 = vmatpush1.xpose.msra.mxu0 0.0
        %3348 = vmatprep.mubr.f32.mxu0 0.0
        %3349 = vmatmul.mubr.f32.gmra.mrb[0].mxu0 %v3267
        %v3350 = vpop.f32.mrb[0].mxu0
        %v3351 = vadd.f32 %v3264, %v3350
        %v3352 = vpop.f32.mrb[0].mxu0
        %3353 = vmatprep.mubr.f32.mxu0 0.0
        %3354 = vmatmul.mubr.f32.gmra.mrb[0].mxu0 %v3270
        %v3355 = vpop.f32.mrb[0].mxu0
        %v3356 = vadd.f32 %v3264, %v3355
        %v3357 = vpop.f32.mrb[0].mxu0
        %3358 = vdwg.mxu0
        %v3359 = vld [vmem:[%s14] sm:$0x1]
        %v3360 = vld [vmem:[%s15] sm:$0x1]
        %v3361 = vadd.f32 %v736, %v3351
        %v3362 = vadd.f32 %v737, %v3356
        %v3363 = vsel %vm746, %v3361, 0.0
        %v3364 = vrot.slane %v3363, 4
        %v3365 = vadd.f32 %v3363, %v3364
        %v3366 = vrot.slane %v3365, 2
        %v3367 = vadd.f32 %v3365, %v3366
        %v3368 = vrot.slane %v3367, 1
        %v3369 = vadd.f32 %v3367, %v3368
        %v3370 = vsel %vm746, %v3362, 0.0
        %v3371 = vrot.slane %v3370, 4
        %v3372 = vadd.f32 %v3370, %v3371
        %v3373 = vrot.slane %v3372, 2
        %v3374 = vadd.f32 %v3372, %v3373
        %v3375 = vrot.slane %v3374, 1
        %v3376 = vadd.f32 %v3374, %v3375
        %v3377 = vrcp.pop 8.0
        %v3378 = vmul.f32 %v3369, %v3377
        %v3379 = vmul.f32 %v3376, %v3377
        %v3380 = vsub.f32 %v3361, %v3378
        %v3381 = vsub.f32 %v3362, %v3379
        %v3382 = vmul.f32 %v3380, %v3380
        %v3383 = vmul.f32 %v3381, %v3381
        %v3384 = vsel %vm746, %v3382, 0.0
        %v3385 = vrot.slane %v3384, 4
        %v3386 = vadd.f32 %v3384, %v3385
        %v3387 = vrot.slane %v3386, 2
        %v3388 = vadd.f32 %v3386, %v3387
        %v3389 = vrot.slane %v3388, 1
        %v3390 = vadd.f32 %v3388, %v3389
        %v3391 = vsel %vm746, %v3383, 0.0
        %v3392 = vrot.slane %v3391, 4
        %v3393 = vadd.f32 %v3391, %v3392
        %v3394 = vrot.slane %v3393, 2
        %v3395 = vadd.f32 %v3393, %v3394
        %v3396 = vrot.slane %v3395, 1
        %v3397 = vadd.f32 %v3395, %v3396
        %v3398 = vmul.f32 %v3390, %v3377
        %v3399 = vmul.f32 %v3397, %v3377
        %v3400 = vadd.f32 %v3398, 1e-05
        %v3401 = vadd.f32 %v3399, 1e-05
        %v3402 = vrsqrt.pop %v3400
        %v3403 = vrsqrt.pop %v3401
        %v3404 = vmul.f32 %v3380, %v3402
        %v3405 = vmul.f32 %v3381, %v3403
        %v3407 = vlaneseq
        %v3408 = vshrl.u32 %v3407, 7
        %v3409 = vsub.s32 0, %v3408
        %v3410 = vrot.slane %v3359, %v3409
        %v3412 = vmul.f32 %v3404, %v3410
        %v3413 = vmul.f32 %v3405, %v3410
        %v3415 = vlaneseq
        %v3416 = vshrl.u32 %v3415, 7
        %v3417 = vsub.s32 0, %v3416
        %v3418 = vrot.slane %v3360, %v3417
        %v3420 = vadd.f32 %v3412, %v3418
        %v3421 = vadd.f32 %v3413, %v3418
        %v3422 = vld [vmem:[%s16] sm:$0xff]
        %v3423 = vld [vmem:[%s16 + $0x8] sm:$0xff]
        %v3424 = vld [vmem:[%s16 + $0x10] sm:$0xff]
        %v3425 = vld [vmem:[%s16 + $0x18] sm:$0xff]
        %v3426 = vld [vmem:[%s16 + $0x20] sm:$0xff]
        %v3427 = vld [vmem:[%s16 + $0x28] sm:$0xff]
        %v3428 = vld [vmem:[%s16 + $0x30] sm:$0xff]
        %v3429 = vld [vmem:[%s16 + $0x38] sm:$0xff]
        %v3430 = vld [vmem:[%s17] sm:$0x1]
        %v3432 = vlaneseq
        %v3433 = vshrl.u32 %v3432, 7
        %v3434 = vsub.s32 0, %v3433
        %v3435 = vrot.slane %v3430, %v3434
        %v3438 = vsel %vm746, %v3420, 0
        %v3441 = vsel %vm746, %v3421, 0
        %v3444 = vsel %vm746, %v3422, 0
        %v3447 = vsel %vm746, %v3423, 0
        %v3450 = vsel %vm746, %v3424, 0
        %v3453 = vsel %vm746, %v3425, 0
        %v3456 = vsel %vm746, %v3426, 0
        %v3459 = vsel %vm746, %v3427, 0
        %v3462 = vsel %vm746, %v3428, 0
        %v3465 = vsel %vm746, %v3429, 0
        %3467 = vmatprep.subr.mxu0 0.0
        %3468 = vmatpush1.xpose.msra.mxu0 %v3444
        %3469 = vmatprep.subr.mxu0 0.0
        %3470 = vmatpush1.xpose.msra.mxu0 %v3447
        %3471 = vmatprep.subr.mxu0 0.0
        %3472 = vmatpush1.xpose.msra.mxu0 %v3450
        %3473 = vmatprep.subr.mxu0 0.0
        %3474 = vmatpush1.xpose.msra.mxu0 %v3453
        %3475 = vmatprep.subr.mxu0 0.0
        %3476 = vmatpush1.xpose.msra.mxu0 %v3456
        %3477 = vmatprep.subr.mxu0 0.0
        %3478 = vmatpush1.xpose.msra.mxu0 %v3459
        %3479 = vmatprep.subr.mxu0 0.0
        %3480 = vmatpush1.xpose.msra.mxu0 %v3462
        %3481 = vmatprep.subr.mxu0 0.0
        %3482 = vmatpush1.xpose.msra.mxu0 %v3465
        %3483 = vmatprep.subr.mxu0 0.0
        %3484 = vmatpush1.xpose.msra.mxu0 0.0
        %3485 = vmatprep.subr.mxu0 0.0
        %3486 = vmatpush1.xpose.msra.mxu0 0.0
        %3487 = vmatprep.subr.mxu0 0.0
        %3488 = vmatpush1.xpose.msra.mxu0 0.0
        %3489 = vmatprep.subr.mxu0 0.0
        %3490 = vmatpush1.xpose.msra.mxu0 0.0
        %3491 = vmatprep.subr.mxu0 0.0
        %3492 = vmatpush1.xpose.msra.mxu0 0.0
        %3493 = vmatprep.subr.mxu0 0.0
        %3494 = vmatpush1.xpose.msra.mxu0 0.0
        %3495 = vmatprep.subr.mxu0 0.0
        %3496 = vmatpush1.xpose.msra.mxu0 0.0
        %3497 = vmatprep.subr.mxu0 0.0
        %3498 = vmatpush1.xpose.msra.mxu0 0.0
        %3499 = vmatprep.subr.mxu0 0.0
        %3500 = vmatpush1.xpose.msra.mxu0 0.0
        %3501 = vmatprep.subr.mxu0 0.0
        %3502 = vmatpush1.xpose.msra.mxu0 0.0
        %3503 = vmatprep.subr.mxu0 0.0
        %3504 = vmatpush1.xpose.msra.mxu0 0.0
        %3505 = vmatprep.subr.mxu0 0.0
        %3506 = vmatpush1.xpose.msra.mxu0 0.0
        %3507 = vmatprep.subr.mxu0 0.0
        %3508 = vmatpush1.xpose.msra.mxu0 0.0
        %3509 = vmatprep.subr.mxu0 0.0
        %3510 = vmatpush1.xpose.msra.mxu0 0.0
        %3511 = vmatprep.subr.mxu0 0.0
        %3512 = vmatpush1.xpose.msra.mxu0 0.0
        %3513 = vmatprep.subr.mxu0 0.0
        %3514 = vmatpush1.xpose.msra.mxu0 0.0
        %3515 = vmatprep.subr.mxu0 0.0
        %3516 = vmatpush1.xpose.msra.mxu0 0.0
        %3517 = vmatprep.subr.mxu0 0.0
        %3518 = vmatpush1.xpose.msra.mxu0 0.0
        %3519 = vmatprep.subr.mxu0 0.0
        %3520 = vmatpush1.xpose.msra.mxu0 0.0
        %3521 = vmatprep.subr.mxu0 0.0
        %3522 = vmatpush1.xpose.msra.mxu0 0.0
        %3523 = vmatprep.subr.mxu0 0.0
        %3524 = vmatpush1.xpose.msra.mxu0 0.0
        %3525 = vmatprep.subr.mxu0 0.0
        %3526 = vmatpush1.xpose.msra.mxu0 0.0
        %3527 = vmatprep.subr.mxu0 0.0
        %3528 = vmatpush1.xpose.msra.mxu0 0.0
        %3529 = vmatprep.subr.mxu0 0.0
        %3530 = vmatpush1.xpose.msra.mxu0 0.0
        %3531 = vmatprep.mubr.f32.mxu0 0.0
        %3532 = vmatmul.mubr.f32.gmra.mrb[0].mxu0 %v3438
        %v3533 = vpop.f32.mrb[0].mxu0
        %v3534 = vadd.f32 %v3435, %v3533
        %v3535 = vpop.f32.mrb[0].mxu0
        %3536 = vmatprep.mubr.f32.mxu0 0.0
        %3537 = vmatmul.mubr.f32.gmra.mrb[0].mxu0 %v3441
        %v3538 = vpop.f32.mrb[0].mxu0
        %v3539 = vadd.f32 %v3435, %v3538
        %v3540 = vpop.f32.mrb[0].mxu0
        %3541 = vdwg.mxu0
        %v3542 = vmax.f32 %v3534, 0.0
        %v3543 = vmax.f32 %v3539, 0.0
        %v3544 = vld [vmem:[%s18] sm:$0xff]
        %v3545 = vld [vmem:[%s18 + $0x8] sm:$0xff]
        %v3546 = vld [vmem:[%s18 + $0x10] sm:$0xff]
        %v3547 = vld [vmem:[%s18 + $0x18] sm:$0xff]
        %v3548 = vld [vmem:[%s19] sm:$0x1]
        %v3550 = vlaneseq
        %v3551 = vshrl.u32 %v3550, 7
        %v3552 = vsub.s32 0, %v3551
        %v3553 = vrot.slane %v3548, %v3552
        %vm3555 = vcmask 523264
        %v3557 = vsel %vm3555, %v3542, 0
        %v3560 = vsel %vm3555, %v3543, 0
        %v3563 = vsel %vm3555, %v3544, 0
        %v3566 = vsel %vm3555, %v3545, 0
        %v3569 = vsel %vm3555, %v3546, 0
        %v3572 = vsel %vm3555, %v3547, 0
        %3574 = vmatprep.subr.mxu0 0.0
        %3575 = vmatpush1.xpose.msra.mxu0 %v3563
        %3576 = vmatprep.subr.mxu0 0.0
        %3577 = vmatpush1.xpose.msra.mxu0 %v3566
        %3578 = vmatprep.subr.mxu0 0.0
        %3579 = vmatpush1.xpose.msra.mxu0 %v3569
        %3580 = vmatprep.subr.mxu0 0.0
        %3581 = vmatpush1.xpose.msra.mxu0 %v3572
        %3582 = vmatprep.subr.mxu0 0.0
        %3583 = vmatpush1.xpose.msra.mxu0 0.0
        %3584 = vmatprep.subr.mxu0 0.0
        %3585 = vmatpush1.xpose.msra.mxu0 0.0
        %3586 = vmatprep.subr.mxu0 0.0
        %3587 = vmatpush1.xpose.msra.mxu0 0.0
        %3588 = vmatprep.subr.mxu0 0.0
        %3589 = vmatpush1.xpose.msra.mxu0 0.0
        %3590 = vmatprep.subr.mxu0 0.0
        %3591 = vmatpush1.xpose.msra.mxu0 0.0
        %3592 = vmatprep.subr.mxu0 0.0
        %3593 = vmatpush1.xpose.msra.mxu0 0.0
        %3594 = vmatprep.subr.mxu0 0.0
        %3595 = vmatpush1.xpose.msra.mxu0 0.0
        %3596 = vmatprep.subr.mxu0 0.0
        %3597 = vmatpush1.xpose.msra.mxu0 0.0
        %3598 = vmatprep.subr.mxu0 0.0
        %3599 = vmatpush1.xpose.msra.mxu0 0.0
        %3600 = vmatprep.subr.mxu0 0.0
        %3601 = vmatpush1.xpose.msra.mxu0 0.0
        %3602 = vmatprep.subr.mxu0 0.0
        %3603 = vmatpush1.xpose.msra.mxu0 0.0
        %3604 = vmatprep.subr.mxu0 0.0
        %3605 = vmatpush1.xpose.msra.mxu0 0.0
        %3606 = vmatprep.subr.mxu0 0.0
        %3607 = vmatpush1.xpose.msra.mxu0 0.0
        %3608 = vmatprep.subr.mxu0 0.0
        %3609 = vmatpush1.xpose.msra.mxu0 0.0
        %3610 = vmatprep.subr.mxu0 0.0
        %3611 = vmatpush1.xpose.msra.mxu0 0.0
        %3612 = vmatprep.subr.mxu0 0.0
        %3613 = vmatpush1.xpose.msra.mxu0 0.0
        %3614 = vmatprep.subr.mxu0 0.0
        %3615 = vmatpush1.xpose.msra.mxu0 0.0
        %3616 = vmatprep.subr.mxu0 0.0
        %3617 = vmatpush1.xpose.msra.mxu0 0.0
        %3618 = vmatprep.subr.mxu0 0.0
        %3619 = vmatpush1.xpose.msra.mxu0 0.0
        %3620 = vmatprep.subr.mxu0 0.0
        %3621 = vmatpush1.xpose.msra.mxu0 0.0
        %3622 = vmatprep.subr.mxu0 0.0
        %3623 = vmatpush1.xpose.msra.mxu0 0.0
        %3624 = vmatprep.subr.mxu0 0.0
        %3625 = vmatpush1.xpose.msra.mxu0 0.0
        %3626 = vmatprep.subr.mxu0 0.0
        %3627 = vmatpush1.xpose.msra.mxu0 0.0
        %3628 = vmatprep.subr.mxu0 0.0
        %3629 = vmatpush1.xpose.msra.mxu0 0.0
        %3630 = vmatprep.subr.mxu0 0.0
        %3631 = vmatpush1.xpose.msra.mxu0 0.0
        %3632 = vmatprep.subr.mxu0 0.0
        %3633 = vmatpush1.xpose.msra.mxu0 0.0
        %3634 = vmatprep.subr.mxu0 0.0
        %3635 = vmatpush1.xpose.msra.mxu0 0.0
        %3636 = vmatprep.subr.mxu0 0.0
        %3637 = vmatpush1.xpose.msra.mxu0 0.0
        %3638 = vmatprep.mubr.f32.mxu0 0.0
        %3639 = vmatmul.mubr.f32.gmra.mrb[0].mxu0 %v3557
        %v3640 = vpop.f32.mrb[0].mxu0
        %v3641 = vadd.f32 %v3553, %v3640
        %v3642 = vpop.f32.mrb[0].mxu0
        %3643 = vmatprep.mubr.f32.mxu0 0.0
        %3644 = vmatmul.mubr.f32.gmra.mrb[0].mxu0 %v3560
        %v3645 = vpop.f32.mrb[0].mxu0
        %v3646 = vadd.f32 %v3553, %v3645
        %v3647 = vpop.f32.mrb[0].mxu0
        %3648 = vdwg.mxu0
        %v3649 = vld [vmem:[%s20] sm:$0x1]
        %v3650 = vld [vmem:[%s21] sm:$0x1]
        %v3651 = vadd.f32 %v3420, %v3641
        %v3652 = vadd.f32 %v3421, %v3646
        %v3653 = vsel %vm746, %v3651, 0.0
        %v3654 = vrot.slane %v3653, 4
        %v3655 = vadd.f32 %v3653, %v3654
        %v3656 = vrot.slane %v3655, 2
        %v3657 = vadd.f32 %v3655, %v3656
        %v3658 = vrot.slane %v3657, 1
        %v3659 = vadd.f32 %v3657, %v3658
        %v3660 = vsel %vm746, %v3652, 0.0
        %v3661 = vrot.slane %v3660, 4
        %v3662 = vadd.f32 %v3660, %v3661
        %v3663 = vrot.slane %v3662, 2
        %v3664 = vadd.f32 %v3662, %v3663
        %v3665 = vrot.slane %v3664, 1
        %v3666 = vadd.f32 %v3664, %v3665
        %v3667 = vmul.f32 %v3659, %v3377
        %v3668 = vmul.f32 %v3666, %v3377
        %v3669 = vsub.f32 %v3651, %v3667
        %v3670 = vsub.f32 %v3652, %v3668
        %v3671 = vmul.f32 %v3669, %v3669
        %v3672 = vmul.f32 %v3670, %v3670
        %v3673 = vsel %vm746, %v3671, 0.0
        %v3674 = vrot.slane %v3673, 4
        %v3675 = vadd.f32 %v3673, %v3674
        %v3676 = vrot.slane %v3675, 2
        %v3677 = vadd.f32 %v3675, %v3676
        %v3678 = vrot.slane %v3677, 1
        %v3679 = vadd.f32 %v3677, %v3678
        %v3680 = vsel %vm746, %v3672, 0.0
        %v3681 = vrot.slane %v3680, 4
        %v3682 = vadd.f32 %v3680, %v3681
        %v3683 = vrot.slane %v3682, 2
        %v3684 = vadd.f32 %v3682, %v3683
        %v3685 = vrot.slane %v3684, 1
        %v3686 = vadd.f32 %v3684, %v3685
        %v3687 = vmul.f32 %v3679, %v3377
        %v3688 = vmul.f32 %v3686, %v3377
        %v3689 = vadd.f32 %v3687, 1e-05
        %v3690 = vadd.f32 %v3688, 1e-05
        %v3691 = vrsqrt.pop %v3689
        %v3692 = vrsqrt.pop %v3690
        %v3693 = vmul.f32 %v3669, %v3691
        %v3694 = vmul.f32 %v3670, %v3692
        %v3696 = vlaneseq
        %v3697 = vshrl.u32 %v3696, 7
        %v3698 = vsub.s32 0, %v3697
        %v3699 = vrot.slane %v3649, %v3698
        %v3701 = vmul.f32 %v3693, %v3699
        %v3702 = vmul.f32 %v3694, %v3699
        %v3704 = vlaneseq
        %v3705 = vshrl.u32 %v3704, 7
        %v3706 = vsub.s32 0, %v3705
        %v3707 = vrot.slane %v3650, %v3706
        %v3709 = vadd.f32 %v3701, %v3707
        %v3710 = vadd.f32 %v3702, %v3707
        %3711 = vst.msk [vmem:[%s720] sm:$0xff] %vm746, %v3709
        %3712 = vst.msk [vmem:[%s720 + $0x8] sm:$0xff] %vm746, %v3710
        %s3713 = sand.u32 %s522, 1
        %s3714 = scalar_lea.sflag [#allocation3], %s3713
        %s3715 = sand.u32 %s522, 1
        %s3716 = smul.addr %s3715, 16
        %s3717 = scalar_lea.vmem [#allocation5], %s3716
        // Predicated region
        $region113: #{tpu_custom_call.1} parent=107 // pred_check
          %p3718 = pneg %p532
        $region114: #{tpu_custom_call.1} parent=107 // pred_check_branch
          %3720 = sbr.rel (%p3718) target = $region116
        $region115: #{tpu_custom_call.1} parent=107 // pred_region
          %s3722 = ssub.s32 256, 256
          %3723 = vsyncadd %s3714, %s3722
          %s3724 = smul.addr %s37, 2
          %s3725 = smul.addr %s3724, 128
          %s3726 = scalar_lea.hbm %s22, %s3725
          %s3727 = sshll.u32 %s3717, 4
          %s3728 = int_to_ptr.vmem [resolvable:$true] %s3727
          %3733 = dma.vmem_to_hbm [thread:$0]  %s3728, 256, %s3726, %s3714, 128, 128, 8
        $region116: #{tpu_custom_call.1} parent=107 // pred_fallthru
          _
      $region108: #{tpu_custom_call.1} parent=5 // pred_fallthru
        _
      %p3734 = scmp.le.s32.totalorder 2, %s32
      // Predicated region
      $region117: #{tpu_custom_call.1} parent=5 // pred_check
        %p3735 = pneg %p3734
      $region118: #{tpu_custom_call.1} parent=5 // pred_check_branch
        %3737 = sbr.rel (%p3735) target = $region120
      $region119: #{tpu_custom_call.1} parent=5 // pred_region
        %s3738 = ssub.s32 %s32, 2
        // Predicated region
        $region121: #{tpu_custom_call.1} parent=119 // pred_check
          %p3739 = pneg %p538
        $region122: #{tpu_custom_call.1} parent=119 // pred_check_branch
          %3741 = sbr.rel (%p3739) target = $region124
        $region123: #{tpu_custom_call.1} parent=119 // pred_region
          %s3742 = sand.u32 %s523, 1
          %s3743 = scalar_lea.sflag [#allocation3], %s3742
          %s3744 = sand.u32 %s523, 1
          %s3745 = smul.addr %s3744, 16
          %s3746 = scalar_lea.vmem [#allocation5], %s3745
          %3747 = dma.done %s3743, 256
        $region124: #{tpu_custom_call.1} parent=119 // pred_fallthru
          _
      $region120: #{tpu_custom_call.1} parent=5 // pred_fallthru
        _
    $region6: #{tpu_custom_call.1} parent=1 // loop_footer
      %s36 = sadd.s32 1, %s32
    $region7: #{tpu_custom_call.1} parent=1 // loop_footer_branch
      %31 = sbr.rel target = $region3
    $region8: #{tpu_custom_call.1} parent=1 // loop_exit
      _
    %3748 = vsyncpa [#allocation3], 1
    %s3749 = scalar_lea.sflag [#allocation3], 1
    %3750 = vsyncpa %s3749, 1
    %3751 = vsyncpa [#allocation4], 1
    %s3752 = scalar_lea.sflag [#allocation4], 1
    %3753 = vsyncpa %s3752, 1

</llo_original>
